<compile_context>
chip_gen: v6e
topology: v6e:2x2x1
jax: 0.10.0
libtpu: 0.0.40
codegen_flags: <defaults>
</compile_context>

<pallas_src>
import functools

import jax
import jax.numpy as jnp
from jax.experimental import pallas as pl
from jax.experimental.pallas import tpu as pltpu


def _round_up(x, m):
    return (x + m - 1) // m * m


def convblock_kernel(x_ref, w_ref, shift_ref, o_ref, xpad_ref, *, ksize, pad, height,
                     width, w_pad, out_len_pad, activation):
    # x_ref    : (1, Cin, H, W)     raw image block (f32)
    # w_ref    : (Cout, K*K*Cin)    conv taps * BatchNorm scale, tap-major (bf16)
    # shift_ref: (Cout, 1)          folded conv bias + BatchNorm shift (f32)
    # o_ref    : (1, Cout, H*W)     cropped, row-major output (f32 or bf16)
    # xpad_ref : (Cin, in_len)      VMEM scratch: zero-padded, flattened bf16 image
    cin = x_ref.shape[1]
    cout = o_ref.shape[1]

    # Build the zero-padded, spatially-flattened bf16 image in VMEM (no HBM round trip).
    # x_pad[i, j] lives at flat index pad + i*w_pad + j, so every conv tap below is a
    # contiguous lane slice at the static offset ky*w_pad + kx.
    xpad_ref[...] = jnp.zeros_like(xpad_ref)
    for r in range(height):
        dst = (r + pad) * w_pad + 2 * pad                  # flat offset of x[:, r, 0]
        xpad_ref[:, pl.ds(dst, width)] = x_ref[0, :, r, :].astype(jnp.bfloat16)

    # K*K unrolled taps: (Cout, Cin) @ (Cin, out_len_pad) on the MXU, f32 accumulation.
    # The accumulator is updated in place across taps (chains into MRB accumulate on v7x).
    acc = jnp.zeros((cout, out_len_pad), jnp.float32)
    for ky in range(ksize):
        for kx in range(ksize):
            tap = ky * ksize + kx
            w_tap = w_ref[:, tap * cin:(tap + 1) * cin]               # (Cout, Cin)
            patch = xpad_ref[:, pl.ds(ky * w_pad + kx, out_len_pad)]  # (Cin, out_len_pad)
            acc = acc + jnp.dot(w_tap, patch, preferred_element_type=jnp.float32)

    y = acc + shift_ref[...]       # conv bias + inference BatchNorm (scale is in w_ref)
    if activation == "relu":
        y = jnp.maximum(y, 0.0)
    elif activation == "leakyrelu":
        y = jnp.where(y > 0, y, 0.2 * y)   # module uses nn.LeakyReLU(0.2)
    elif activation == "tanh":
        y = jnp.tanh(y)
    elif activation == "sigmoid":
        y = jax.nn.sigmoid(y)
    elif activation == "none":
        pass
    else:
        # TODO(synk): 'prelu' needs its learnable slope passed as an extra operand.
        raise ValueError(f"unsupported activation: {activation}")

    # Store the cropped (Cout, H*W) layout directly: drop the 2*pad garbage columns of
    # the width-padded flat grid here instead of a wrapper-side strided-slice copy.
    for r in range(height):
        src = r * w_pad + pad
        o_ref[0, :, pl.ds(r * width, width)] = y[:, src:src + width].astype(o_ref.dtype)


def convblock_forward(x, weight, bias, bn_gamma, bn_beta, bn_mean, bn_var, *,
                      stride=1, activation="relu", batch_norm=True, eps=1e-5,
                      out_dtype=jnp.float32):
    """ConvBlock forward.  x: (N, Cin, H, W) f32, weight: (Cout, Cin, K, K),
    bias / bn_*: (Cout,).  Returns (N, Cout, H, W) in out_dtype (stride == 1)."""
    if stride != 1:
        # TODO(synk): stride > 1 not implemented (module default is stride=1).
        raise NotImplementedError("stride > 1 not implemented")
    n, cin, h, w = x.shape
    cout, cin_w, k, _ = weight.shape
    assert cin_w == cin
    p = k // 2
    wp = w + 2 * p

    # Lane-dense internal sizes: round the flat output length up to a multiple of 128 so
    # accumulator / output tiles are full lane tiles; guard zeros keep tap reads in bounds.
    out_len_pad = _round_up(h * wp, 128)
    in_len = _round_up((k - 1) * (wp + 1) + out_len_pad, 128)

    # Fold conv bias + inference-mode BatchNorm into the weights (scale) and a
    # per-channel shift.  (Conv bias exists because the module passes bias=~batch_norm,
    # which is truthy for both True and False.)
    # TODO(synk): training-mode BatchNorm (batch statistics) would need a cross-batch
    # reduction pass; inference-mode running statistics are used here.
    bias = bias.astype(jnp.float32)
    if batch_norm:
        scale = bn_gamma.astype(jnp.float32) / jnp.sqrt(bn_var.astype(jnp.float32) + eps)
        shift = (bias - bn_mean.astype(jnp.float32)) * scale + bn_beta.astype(jnp.float32)
    else:
        scale = jnp.ones((cout,), jnp.float32)
        shift = bias

    # (Cout, Cin, K, K) * scale -> (Cout, K*K*Cin), tap-major (ky, kx, cin): one
    # lane-padded weight tile instead of K*K tiny (Cout, Cin) tiles.  bf16 feeds the MXU.
    w_fold = weight.astype(jnp.float32) * scale[:, None, None, None]
    w_taps = jnp.transpose(w_fold, (0, 2, 3, 1)).reshape(cout, k * k * cin)
    w_taps = w_taps.astype(jnp.bfloat16)
    shift = shift.reshape(cout, 1).astype(jnp.float32)

    kernel = functools.partial(convblock_kernel, ksize=k, pad=p, height=h, width=w,
                               w_pad=wp, out_len_pad=out_len_pad,
                               activation=activation.lower())

    out_flat = pl.pallas_call(
        kernel,
        out_shape=jax.ShapeDtypeStruct((n, cout, h * w), out_dtype),
        grid=(n,),
        in_specs=[
            pl.BlockSpec((1, cin, h, w), lambda i: (i, 0, 0, 0)),
            pl.BlockSpec((cout, k * k * cin), lambda i: (0, 0)),
            pl.BlockSpec((cout, 1), lambda i: (0, 0)),
        ],
        out_specs=pl.BlockSpec((1, cout, h * w), lambda i: (i, 0, 0)),
        scratch_shapes=[pltpu.VMEM((cin, in_len), jnp.bfloat16)],
        compiler_params=pltpu.CompilerParams(dimension_semantics=("parallel",)),
    )(x.astype(jnp.float32), w_taps, shift)

    # Row-major (Cout, H*W) -> (Cout, H, W) is a free reshape (no crop copy needed).
    return out_flat.reshape(n, cout, h, w)


def _ref_forward(x, weight, bias, bn_gamma, bn_beta, bn_mean, bn_var, eps=1e-5):
    """Pure-JAX reference (same bf16 operand rounding / BN folding as the kernel)."""
    scale = bn_gamma / jnp.sqrt(bn_var + eps)
    shift = (bias - bn_mean) * scale + bn_beta
    wq = (weight * scale[:, None, None, None]).astype(jnp.bfloat16).astype(jnp.float32)
    xq = x.astype(jnp.bfloat16).astype(jnp.float32)
    p = weight.shape[-1] // 2
    y = jax.lax.conv_general_dilated(
        xq, wq, window_strides=(1, 1), padding=((p, p), (p, p)),
        dimension_numbers=("NCHW", "OIHW", "NCHW"),
        precision=jax.lax.Precision.HIGHEST)
    y = y + shift[None, :, None, None]
    return jnp.maximum(y, 0.0)


if __name__ == "__main__":
    key = jax.random.PRNGKey(0)
    kx, kw, kb, kg, kbt, km, kv = jax.random.split(key, 7)

    N, C_IN, C_OUT, H, W, K = 2, 4, 8, 16, 16, 3
    x = jax.random.normal(kx, (N, C_IN, H, W), dtype=jnp.float32)
    weight = 0.1 * jax.random.normal(kw, (C_OUT, C_IN, K, K), dtype=jnp.float32)
    bias = 0.1 * jax.random.normal(kb, (C_OUT,), dtype=jnp.float32)
    bn_gamma = 1.0 + 0.1 * jax.random.normal(kg, (C_OUT,), dtype=jnp.float32)
    bn_beta = 0.1 * jax.random.normal(kbt, (C_OUT,), dtype=jnp.float32)
    bn_mean = 0.1 * jax.random.normal(km, (C_OUT,), dtype=jnp.float32)
    bn_var = 1.0 + 0.5 * jax.random.uniform(kv, (C_OUT,), dtype=jnp.float32)

    out = convblock_forward(x, weight, bias, bn_gamma, bn_beta, bn_mean, bn_var,
                            activation="relu", batch_norm=True)
    jax.block_until_ready(out)
    assert out.shape == (N, C_OUT, H, W)

    ref = _ref_forward(x, weight, bias, bn_gamma, bn_beta, bn_mean, bn_var)
    err = float(jnp.max(jnp.abs(out - ref)))
    assert err < 2e-2, f"kernel/reference mismatch: max abs err = {err}"

    print("KERNEL_OK")
</pallas_src>

<mosaic_0001>
module attributes {stable_mosaic.version = 11 : i64} {
  func.func @convblock_kernel(%arg0: i32, %arg1: memref<1x4x16x16xf32, #tpu.memory_space<vmem>>, %arg2: memref<8x36xbf16, #tpu.memory_space<vmem>>, %arg3: memref<8x1xf32, #tpu.memory_space<vmem>>, %arg4: memref<1x8x256xf32, #tpu.memory_space<vmem>>, %arg5: memref<4x512xbf16, #tpu.memory_space<vmem>>) attributes {dimension_semantics = [#tpu.dimension_semantics<parallel>], iteration_bounds = array<i64: 2>, scalar_prefetch = 0 : i64, scratch_operands = 1 : i64, tpu.core_type = #tpu.core_type<tc>, window_params = [{transform_indices = @transform_0, window_bounds = array<i64: 1, 4, 16, 16>}, {pipeline_mode = #tpu.pipeline_mode<synchronous>, transform_indices = @transform_1, window_bounds = array<i64: 8, 36>}, {pipeline_mode = #tpu.pipeline_mode<synchronous>, transform_indices = @transform_2, window_bounds = array<i64: 8, 1>}, {transform_indices = @transform_3, window_bounds = array<i64: 1, 8, 256>}]} {
    %cst = arith.constant 0.000000e+00 : bf16
    %0 = vector.broadcast %cst : bf16 to vector<4x512xbf16>
    %c0 = arith.constant 0 : index
    %c0_0 = arith.constant 0 : index
    %1 = vector.load %arg5[%c0, %c0_0] : memref<4x512xbf16, #tpu.memory_space<vmem>>, vector<4x512xbf16>
    tpu.vector_store %arg5[%c0, %c0_0], %0 {strides = array<i32>} : memref<4x512xbf16, #tpu.memory_space<vmem>>, vector<4x512xbf16>,
    %c0_1 = arith.constant 0 : index
    %c0_2 = arith.constant 0 : index
    %c0_3 = arith.constant 0 : index
    %c0_4 = arith.constant 0 : index
    %2 = vector.load %arg1[%c0_1, %c0_2, %c0_3, %c0_4] : memref<1x4x16x16xf32, #tpu.memory_space<vmem>>, vector<1x4x1x16xf32>
    %3 = vector.shape_cast %2 : vector<1x4x1x16xf32> to vector<4x16xf32>
    %4 = arith.truncf %3 : vector<4x16xf32> to vector<4x16xbf16>
    %c0_5 = arith.constant 0 : index
    %c20 = arith.constant 20 : index
    %5 = vector.load %arg5[%c0_5, %c20] : memref<4x512xbf16, #tpu.memory_space<vmem>>, vector<4x16xbf16>
    tpu.vector_store %arg5[%c0_5, %c20], %4 {strides = array<i32>} : memref<4x512xbf16, #tpu.memory_space<vmem>>, vector<4x16xbf16>,
    %c0_6 = arith.constant 0 : index
    %c0_7 = arith.constant 0 : index
    %c1 = arith.constant 1 : index
    %c0_8 = arith.constant 0 : index
    %6 = vector.load %arg1[%c0_6, %c0_7, %c1, %c0_8] : memref<1x4x16x16xf32, #tpu.memory_space<vmem>>, vector<1x4x1x16xf32>
    %7 = vector.shape_cast %6 : vector<1x4x1x16xf32> to vector<4x16xf32>
    %8 = arith.truncf %7 : vector<4x16xf32> to vector<4x16xbf16>
    %c0_9 = arith.constant 0 : index
    %c38 = arith.constant 38 : index
    %9 = vector.load %arg5[%c0_9, %c38] : memref<4x512xbf16, #tpu.memory_space<vmem>>, vector<4x16xbf16>
    tpu.vector_store %arg5[%c0_9, %c38], %8 {strides = array<i32>} : memref<4x512xbf16, #tpu.memory_space<vmem>>, vector<4x16xbf16>,
    %c0_10 = arith.constant 0 : index
    %c0_11 = arith.constant 0 : index
    %c2 = arith.constant 2 : index
    %c0_12 = arith.constant 0 : index
    %10 = vector.load %arg1[%c0_10, %c0_11, %c2, %c0_12] : memref<1x4x16x16xf32, #tpu.memory_space<vmem>>, vector<1x4x1x16xf32>
    %11 = vector.shape_cast %10 : vector<1x4x1x16xf32> to vector<4x16xf32>
    %12 = arith.truncf %11 : vector<4x16xf32> to vector<4x16xbf16>
    %c0_13 = arith.constant 0 : index
    %c56 = arith.constant 56 : index
    %13 = vector.load %arg5[%c0_13, %c56] : memref<4x512xbf16, #tpu.memory_space<vmem>>, vector<4x16xbf16>
    tpu.vector_store %arg5[%c0_13, %c56], %12 {strides = array<i32>} : memref<4x512xbf16, #tpu.memory_space<vmem>>, vector<4x16xbf16>,
    %c0_14 = arith.constant 0 : index
    %c0_15 = arith.constant 0 : index
    %c3 = arith.constant 3 : index
    %c0_16 = arith.constant 0 : index
    %14 = vector.load %arg1[%c0_14, %c0_15, %c3, %c0_16] : memref<1x4x16x16xf32, #tpu.memory_space<vmem>>, vector<1x4x1x16xf32>
    %15 = vector.shape_cast %14 : vector<1x4x1x16xf32> to vector<4x16xf32>
    %16 = arith.truncf %15 : vector<4x16xf32> to vector<4x16xbf16>
    %c0_17 = arith.constant 0 : index
    %c74 = arith.constant 74 : index
    %17 = vector.load %arg5[%c0_17, %c74] : memref<4x512xbf16, #tpu.memory_space<vmem>>, vector<4x16xbf16>
    tpu.vector_store %arg5[%c0_17, %c74], %16 {strides = array<i32>} : memref<4x512xbf16, #tpu.memory_space<vmem>>, vector<4x16xbf16>,
    %c0_18 = arith.constant 0 : index
    %c0_19 = arith.constant 0 : index
    %c4 = arith.constant 4 : index
    %c0_20 = arith.constant 0 : index
    %18 = vector.load %arg1[%c0_18, %c0_19, %c4, %c0_20] : memref<1x4x16x16xf32, #tpu.memory_space<vmem>>, vector<1x4x1x16xf32>
    %19 = vector.shape_cast %18 : vector<1x4x1x16xf32> to vector<4x16xf32>
    %20 = arith.truncf %19 : vector<4x16xf32> to vector<4x16xbf16>
    %c0_21 = arith.constant 0 : index
    %c92 = arith.constant 92 : index
    %21 = vector.load %arg5[%c0_21, %c92] : memref<4x512xbf16, #tpu.memory_space<vmem>>, vector<4x16xbf16>
    tpu.vector_store %arg5[%c0_21, %c92], %20 {strides = array<i32>} : memref<4x512xbf16, #tpu.memory_space<vmem>>, vector<4x16xbf16>,
    %c0_22 = arith.constant 0 : index
    %c0_23 = arith.constant 0 : index
    %c5 = arith.constant 5 : index
    %c0_24 = arith.constant 0 : index
    %22 = vector.load %arg1[%c0_22, %c0_23, %c5, %c0_24] : memref<1x4x16x16xf32, #tpu.memory_space<vmem>>, vector<1x4x1x16xf32>
    %23 = vector.shape_cast %22 : vector<1x4x1x16xf32> to vector<4x16xf32>
    %24 = arith.truncf %23 : vector<4x16xf32> to vector<4x16xbf16>
    %c0_25 = arith.constant 0 : index
    %c110 = arith.constant 110 : index
    %25 = vector.load %arg5[%c0_25, %c110] : memref<4x512xbf16, #tpu.memory_space<vmem>>, vector<4x16xbf16>
    tpu.vector_store %arg5[%c0_25, %c110], %24 {strides = array<i32>} : memref<4x512xbf16, #tpu.memory_space<vmem>>, vector<4x16xbf16>,
    %c0_26 = arith.constant 0 : index
    %c0_27 = arith.constant 0 : index
    %c6 = arith.constant 6 : index
    %c0_28 = arith.constant 0 : index
    %26 = vector.load %arg1[%c0_26, %c0_27, %c6, %c0_28] : memref<1x4x16x16xf32, #tpu.memory_space<vmem>>, vector<1x4x1x16xf32>
    %27 = vector.shape_cast %26 : vector<1x4x1x16xf32> to vector<4x16xf32>
    %28 = arith.truncf %27 : vector<4x16xf32> to vector<4x16xbf16>
    %c0_29 = arith.constant 0 : index
    %c128 = arith.constant 128 : index
    %29 = vector.load %arg5[%c0_29, %c128] : memref<4x512xbf16, #tpu.memory_space<vmem>>, vector<4x16xbf16>
    tpu.vector_store %arg5[%c0_29, %c128], %28 {strides = array<i32>} : memref<4x512xbf16, #tpu.memory_space<vmem>>, vector<4x16xbf16>,
    %c0_30 = arith.constant 0 : index
    %c0_31 = arith.constant 0 : index
    %c7 = arith.constant 7 : index
    %c0_32 = arith.constant 0 : index
    %30 = vector.load %arg1[%c0_30, %c0_31, %c7, %c0_32] : memref<1x4x16x16xf32, #tpu.memory_space<vmem>>, vector<1x4x1x16xf32>
    %31 = vector.shape_cast %30 : vector<1x4x1x16xf32> to vector<4x16xf32>
    %32 = arith.truncf %31 : vector<4x16xf32> to vector<4x16xbf16>
    %c0_33 = arith.constant 0 : index
    %c146 = arith.constant 146 : index
    %33 = vector.load %arg5[%c0_33, %c146] : memref<4x512xbf16, #tpu.memory_space<vmem>>, vector<4x16xbf16>
    tpu.vector_store %arg5[%c0_33, %c146], %32 {strides = array<i32>} : memref<4x512xbf16, #tpu.memory_space<vmem>>, vector<4x16xbf16>,
    %c0_34 = arith.constant 0 : index
    %c0_35 = arith.constant 0 : index
    %c8 = arith.constant 8 : index
    %c0_36 = arith.constant 0 : index
    %34 = vector.load %arg1[%c0_34, %c0_35, %c8, %c0_36] : memref<1x4x16x16xf32, #tpu.memory_space<vmem>>, vector<1x4x1x16xf32>
    %35 = vector.shape_cast %34 : vector<1x4x1x16xf32> to vector<4x16xf32>
    %36 = arith.truncf %35 : vector<4x16xf32> to vector<4x16xbf16>
    %c0_37 = arith.constant 0 : index
    %c164 = arith.constant 164 : index
    %37 = vector.load %arg5[%c0_37, %c164] : memref<4x512xbf16, #tpu.memory_space<vmem>>, vector<4x16xbf16>
    tpu.vector_store %arg5[%c0_37, %c164], %36 {strides = array<i32>} : memref<4x512xbf16, #tpu.memory_space<vmem>>, vector<4x16xbf16>,
    %c0_38 = arith.constant 0 : index
    %c0_39 = arith.constant 0 : index
    %c9 = arith.constant 9 : index
    %c0_40 = arith.constant 0 : index
    %38 = vector.load %arg1[%c0_38, %c0_39, %c9, %c0_40] : memref<1x4x16x16xf32, #tpu.memory_space<vmem>>, vector<1x4x1x16xf32>
    %39 = vector.shape_cast %38 : vector<1x4x1x16xf32> to vector<4x16xf32>
    %40 = arith.truncf %39 : vector<4x16xf32> to vector<4x16xbf16>
    %c0_41 = arith.constant 0 : index
    %c182 = arith.constant 182 : index
    %41 = vector.load %arg5[%c0_41, %c182] : memref<4x512xbf16, #tpu.memory_space<vmem>>, vector<4x16xbf16>
    tpu.vector_store %arg5[%c0_41, %c182], %40 {strides = array<i32>} : memref<4x512xbf16, #tpu.memory_space<vmem>>, vector<4x16xbf16>,
    %c0_42 = arith.constant 0 : index
    %c0_43 = arith.constant 0 : index
    %c10 = arith.constant 10 : index
    %c0_44 = arith.constant 0 : index
    %42 = vector.load %arg1[%c0_42, %c0_43, %c10, %c0_44] : memref<1x4x16x16xf32, #tpu.memory_space<vmem>>, vector<1x4x1x16xf32>
    %43 = vector.shape_cast %42 : vector<1x4x1x16xf32> to vector<4x16xf32>
    %44 = arith.truncf %43 : vector<4x16xf32> to vector<4x16xbf16>
    %c0_45 = arith.constant 0 : index
    %c200 = arith.constant 200 : index
    %45 = vector.load %arg5[%c0_45, %c200] : memref<4x512xbf16, #tpu.memory_space<vmem>>, vector<4x16xbf16>
    tpu.vector_store %arg5[%c0_45, %c200], %44 {strides = array<i32>} : memref<4x512xbf16, #tpu.memory_space<vmem>>, vector<4x16xbf16>,
    %c0_46 = arith.constant 0 : index
    %c0_47 = arith.constant 0 : index
    %c11 = arith.constant 11 : index
    %c0_48 = arith.constant 0 : index
    %46 = vector.load %arg1[%c0_46, %c0_47, %c11, %c0_48] : memref<1x4x16x16xf32, #tpu.memory_space<vmem>>, vector<1x4x1x16xf32>
    %47 = vector.shape_cast %46 : vector<1x4x1x16xf32> to vector<4x16xf32>
    %48 = arith.truncf %47 : vector<4x16xf32> to vector<4x16xbf16>
    %c0_49 = arith.constant 0 : index
    %c218 = arith.constant 218 : index
    %49 = vector.load %arg5[%c0_49, %c218] : memref<4x512xbf16, #tpu.memory_space<vmem>>, vector<4x16xbf16>
    tpu.vector_store %arg5[%c0_49, %c218], %48 {strides = array<i32>} : memref<4x512xbf16, #tpu.memory_space<vmem>>, vector<4x16xbf16>,
    %c0_50 = arith.constant 0 : index
    %c0_51 = arith.constant 0 : index
    %c12 = arith.constant 12 : index
    %c0_52 = arith.constant 0 : index
    %50 = vector.load %arg1[%c0_50, %c0_51, %c12, %c0_52] : memref<1x4x16x16xf32, #tpu.memory_space<vmem>>, vector<1x4x1x16xf32>
    %51 = vector.shape_cast %50 : vector<1x4x1x16xf32> to vector<4x16xf32>
    %52 = arith.truncf %51 : vector<4x16xf32> to vector<4x16xbf16>
    %c0_53 = arith.constant 0 : index
    %c236 = arith.constant 236 : index
    %53 = vector.load %arg5[%c0_53, %c236] : memref<4x512xbf16, #tpu.memory_space<vmem>>, vector<4x16xbf16>
    tpu.vector_store %arg5[%c0_53, %c236], %52 {strides = array<i32>} : memref<4x512xbf16, #tpu.memory_space<vmem>>, vector<4x16xbf16>,
    %c0_54 = arith.constant 0 : index
    %c0_55 = arith.constant 0 : index
    %c13 = arith.constant 13 : index
    %c0_56 = arith.constant 0 : index
    %54 = vector.load %arg1[%c0_54, %c0_55, %c13, %c0_56] : memref<1x4x16x16xf32, #tpu.memory_space<vmem>>, vector<1x4x1x16xf32>
    %55 = vector.shape_cast %54 : vector<1x4x1x16xf32> to vector<4x16xf32>
    %56 = arith.truncf %55 : vector<4x16xf32> to vector<4x16xbf16>
    %c0_57 = arith.constant 0 : index
    %c254 = arith.constant 254 : index
    %57 = vector.load %arg5[%c0_57, %c254] : memref<4x512xbf16, #tpu.memory_space<vmem>>, vector<4x16xbf16>
    tpu.vector_store %arg5[%c0_57, %c254], %56 {strides = array<i32>} : memref<4x512xbf16, #tpu.memory_space<vmem>>, vector<4x16xbf16>,
    %c0_58 = arith.constant 0 : index
    %c0_59 = arith.constant 0 : index
    %c14 = arith.constant 14 : index
    %c0_60 = arith.constant 0 : index
    %58 = vector.load %arg1[%c0_58, %c0_59, %c14, %c0_60] : memref<1x4x16x16xf32, #tpu.memory_space<vmem>>, vector<1x4x1x16xf32>
    %59 = vector.shape_cast %58 : vector<1x4x1x16xf32> to vector<4x16xf32>
    %60 = arith.truncf %59 : vector<4x16xf32> to vector<4x16xbf16>
    %c0_61 = arith.constant 0 : index
    %c272 = arith.constant 272 : index
    %61 = vector.load %arg5[%c0_61, %c272] : memref<4x512xbf16, #tpu.memory_space<vmem>>, vector<4x16xbf16>
    tpu.vector_store %arg5[%c0_61, %c272], %60 {strides = array<i32>} : memref<4x512xbf16, #tpu.memory_space<vmem>>, vector<4x16xbf16>,
    %c0_62 = arith.constant 0 : index
    %c0_63 = arith.constant 0 : index
    %c15 = arith.constant 15 : index
    %c0_64 = arith.constant 0 : index
    %62 = vector.load %arg1[%c0_62, %c0_63, %c15, %c0_64] : memref<1x4x16x16xf32, #tpu.memory_space<vmem>>, vector<1x4x1x16xf32>
    %63 = vector.shape_cast %62 : vector<1x4x1x16xf32> to vector<4x16xf32>
    %64 = arith.truncf %63 : vector<4x16xf32> to vector<4x16xbf16>
    %c0_65 = arith.constant 0 : index
    %c290 = arith.constant 290 : index
    %65 = vector.load %arg5[%c0_65, %c290] : memref<4x512xbf16, #tpu.memory_space<vmem>>, vector<4x16xbf16>
    tpu.vector_store %arg5[%c0_65, %c290], %64 {strides = array<i32>} : memref<4x512xbf16, #tpu.memory_space<vmem>>, vector<4x16xbf16>,
    %cst_66 = arith.constant 0.000000e+00 : f32
    %66 = vector.broadcast %cst_66 : f32 to vector<8x384xf32>
    %c0_67 = arith.constant 0 : index
    %c0_68 = arith.constant 0 : index
    %67 = vector.load %arg2[%c0_67, %c0_68] : memref<8x36xbf16, #tpu.memory_space<vmem>>, vector<8x4xbf16>
    %c0_69 = arith.constant 0 : index
    %c0_70 = arith.constant 0 : index
    %68 = vector.load %arg5[%c0_69, %c0_70] : memref<4x512xbf16, #tpu.memory_space<vmem>>, vector<4x384xbf16>
    %cst_71 = arith.constant dense<0.000000e+00> : vector<8x384xf32>
    %69 = tpu.matmul %67, %68, %cst_71 {dimension_numbers = #tpu.dot_dimension_numbers<[1], [0], [0], [1], [0, 0, 1, 1], [], []>} : vector<8x4xbf16>, vector<4x384xbf16>, vector<8x384xf32> -> vector<8x384xf32>
    %70 = arith.addf %66, %69 : vector<8x384xf32>
    %c0_72 = arith.constant 0 : index
    %c4_73 = arith.constant 4 : index
    %71 = vector.load %arg2[%c0_72, %c4_73] : memref<8x36xbf16, #tpu.memory_space<vmem>>, vector<8x4xbf16>
    %c0_74 = arith.constant 0 : index
    %c1_75 = arith.constant 1 : index
    %72 = vector.load %arg5[%c0_74, %c1_75] : memref<4x512xbf16, #tpu.memory_space<vmem>>, vector<4x384xbf16>
    %cst_76 = arith.constant dense<0.000000e+00> : vector<8x384xf32>
    %73 = tpu.matmul %71, %72, %cst_76 {dimension_numbers = #tpu.dot_dimension_numbers<[1], [0], [0], [1], [0, 0, 1, 1], [], []>} : vector<8x4xbf16>, vector<4x384xbf16>, vector<8x384xf32> -> vector<8x384xf32>
    %74 = arith.addf %70, %73 : vector<8x384xf32>
    %c0_77 = arith.constant 0 : index
    %c8_78 = arith.constant 8 : index
    %75 = vector.load %arg2[%c0_77, %c8_78] : memref<8x36xbf16, #tpu.memory_space<vmem>>, vector<8x4xbf16>
    %c0_79 = arith.constant 0 : index
    %c2_80 = arith.constant 2 : index
    %76 = vector.load %arg5[%c0_79, %c2_80] : memref<4x512xbf16, #tpu.memory_space<vmem>>, vector<4x384xbf16>
    %cst_81 = arith.constant dense<0.000000e+00> : vector<8x384xf32>
    %77 = tpu.matmul %75, %76, %cst_81 {dimension_numbers = #tpu.dot_dimension_numbers<[1], [0], [0], [1], [0, 0, 1, 1], [], []>} : vector<8x4xbf16>, vector<4x384xbf16>, vector<8x384xf32> -> vector<8x384xf32>
    %78 = arith.addf %74, %77 : vector<8x384xf32>
    %c0_82 = arith.constant 0 : index
    %c12_83 = arith.constant 12 : index
    %79 = vector.load %arg2[%c0_82, %c12_83] : memref<8x36xbf16, #tpu.memory_space<vmem>>, vector<8x4xbf16>
    %c0_84 = arith.constant 0 : index
    %c18 = arith.constant 18 : index
    %80 = vector.load %arg5[%c0_84, %c18] : memref<4x512xbf16, #tpu.memory_space<vmem>>, vector<4x384xbf16>
    %cst_85 = arith.constant dense<0.000000e+00> : vector<8x384xf32>
    %81 = tpu.matmul %79, %80, %cst_85 {dimension_numbers = #tpu.dot_dimension_numbers<[1], [0], [0], [1], [0, 0, 1, 1], [], []>} : vector<8x4xbf16>, vector<4x384xbf16>, vector<8x384xf32> -> vector<8x384xf32>
    %82 = arith.addf %78, %81 : vector<8x384xf32>
    %c0_86 = arith.constant 0 : index
    %c16 = arith.constant 16 : index
    %83 = vector.load %arg2[%c0_86, %c16] : memref<8x36xbf16, #tpu.memory_space<vmem>>, vector<8x4xbf16>
    %c0_87 = arith.constant 0 : index
    %c19 = arith.constant 19 : index
    %84 = vector.load %arg5[%c0_87, %c19] : memref<4x512xbf16, #tpu.memory_space<vmem>>, vector<4x384xbf16>
    %cst_88 = arith.constant dense<0.000000e+00> : vector<8x384xf32>
    %85 = tpu.matmul %83, %84, %cst_88 {dimension_numbers = #tpu.dot_dimension_numbers<[1], [0], [0], [1], [0, 0, 1, 1], [], []>} : vector<8x4xbf16>, vector<4x384xbf16>, vector<8x384xf32> -> vector<8x384xf32>
    %86 = arith.addf %82, %85 : vector<8x384xf32>
    %c0_89 = arith.constant 0 : index
    %c20_90 = arith.constant 20 : index
    %87 = vector.load %arg2[%c0_89, %c20_90] : memref<8x36xbf16, #tpu.memory_space<vmem>>, vector<8x4xbf16>
    %c0_91 = arith.constant 0 : index
    %c20_92 = arith.constant 20 : index
    %88 = vector.load %arg5[%c0_91, %c20_92] : memref<4x512xbf16, #tpu.memory_space<vmem>>, vector<4x384xbf16>
    %cst_93 = arith.constant dense<0.000000e+00> : vector<8x384xf32>
    %89 = tpu.matmul %87, %88, %cst_93 {dimension_numbers = #tpu.dot_dimension_numbers<[1], [0], [0], [1], [0, 0, 1, 1], [], []>} : vector<8x4xbf16>, vector<4x384xbf16>, vector<8x384xf32> -> vector<8x384xf32>
    %90 = arith.addf %86, %89 : vector<8x384xf32>
    %c0_94 = arith.constant 0 : index
    %c24 = arith.constant 24 : index
    %91 = vector.load %arg2[%c0_94, %c24] : memref<8x36xbf16, #tpu.memory_space<vmem>>, vector<8x4xbf16>
    %c0_95 = arith.constant 0 : index
    %c36 = arith.constant 36 : index
    %92 = vector.load %arg5[%c0_95, %c36] : memref<4x512xbf16, #tpu.memory_space<vmem>>, vector<4x384xbf16>
    %cst_96 = arith.constant dense<0.000000e+00> : vector<8x384xf32>
    %93 = tpu.matmul %91, %92, %cst_96 {dimension_numbers = #tpu.dot_dimension_numbers<[1], [0], [0], [1], [0, 0, 1, 1], [], []>} : vector<8x4xbf16>, vector<4x384xbf16>, vector<8x384xf32> -> vector<8x384xf32>
    %94 = arith.addf %90, %93 : vector<8x384xf32>
    %c0_97 = arith.constant 0 : index
    %c28 = arith.constant 28 : index
    %95 = vector.load %arg2[%c0_97, %c28] : memref<8x36xbf16, #tpu.memory_space<vmem>>, vector<8x4xbf16>
    %c0_98 = arith.constant 0 : index
    %c37 = arith.constant 37 : index
    %96 = vector.load %arg5[%c0_98, %c37] : memref<4x512xbf16, #tpu.memory_space<vmem>>, vector<4x384xbf16>
    %cst_99 = arith.constant dense<0.000000e+00> : vector<8x384xf32>
    %97 = tpu.matmul %95, %96, %cst_99 {dimension_numbers = #tpu.dot_dimension_numbers<[1], [0], [0], [1], [0, 0, 1, 1], [], []>} : vector<8x4xbf16>, vector<4x384xbf16>, vector<8x384xf32> -> vector<8x384xf32>
    %98 = arith.addf %94, %97 : vector<8x384xf32>
    %c0_100 = arith.constant 0 : index
    %c32 = arith.constant 32 : index
    %99 = vector.load %arg2[%c0_100, %c32] : memref<8x36xbf16, #tpu.memory_space<vmem>>, vector<8x4xbf16>
    %c0_101 = arith.constant 0 : index
    %c38_102 = arith.constant 38 : index
    %100 = vector.load %arg5[%c0_101, %c38_102] : memref<4x512xbf16, #tpu.memory_space<vmem>>, vector<4x384xbf16>
    %cst_103 = arith.constant dense<0.000000e+00> : vector<8x384xf32>
    %101 = tpu.matmul %99, %100, %cst_103 {dimension_numbers = #tpu.dot_dimension_numbers<[1], [0], [0], [1], [0, 0, 1, 1], [], []>} : vector<8x4xbf16>, vector<4x384xbf16>, vector<8x384xf32> -> vector<8x384xf32>
    %102 = arith.addf %98, %101 : vector<8x384xf32>
    %c0_104 = arith.constant 0 : index
    %c0_105 = arith.constant 0 : index
    %103 = vector.load %arg3[%c0_104, %c0_105] : memref<8x1xf32, #tpu.memory_space<vmem>>, vector<8x1xf32>
    %104 = vector.broadcast %103 : vector<8x1xf32> to vector<8x384xf32>
    %105 = arith.addf %102, %104 : vector<8x384xf32>
    %cst_106 = arith.constant 0.000000e+00 : f32
    %106 = vector.broadcast %cst_106 : f32 to vector<8x384xf32>
    %107 = arith.maximumf %105, %106 : vector<8x384xf32>
    %108 = vector.extract_strided_slice %107 {offsets = [0, 1], sizes = [8, 16], strides = [1, 1]} : vector<8x384xf32> to vector<8x16xf32>
    %c0_107 = arith.constant 0 : index
    %c0_108 = arith.constant 0 : index
    %c0_109 = arith.constant 0 : index
    %109 = vector.load %arg4[%c0_107, %c0_108, %c0_109] : memref<1x8x256xf32, #tpu.memory_space<vmem>>, vector<1x8x16xf32>
    %110 = vector.shape_cast %109 : vector<1x8x16xf32> to vector<8x16xf32>
    %111 = vector.shape_cast %108 : vector<8x16xf32> to vector<1x8x16xf32>
    tpu.vector_store %arg4[%c0_107, %c0_108, %c0_109], %111 {strides = array<i32>} : memref<1x8x256xf32, #tpu.memory_space<vmem>>, vector<1x8x16xf32>,
    %112 = vector.extract_strided_slice %107 {offsets = [0, 19], sizes = [8, 16], strides = [1, 1]} : vector<8x384xf32> to vector<8x16xf32>
    %c0_110 = arith.constant 0 : index
    %c0_111 = arith.constant 0 : index
    %c16_112 = arith.constant 16 : index
    %113 = vector.load %arg4[%c0_110, %c0_111, %c16_112] : memref<1x8x256xf32, #tpu.memory_space<vmem>>, vector<1x8x16xf32>
    %114 = vector.shape_cast %113 : vector<1x8x16xf32> to vector<8x16xf32>
    %115 = vector.shape_cast %112 : vector<8x16xf32> to vector<1x8x16xf32>
    tpu.vector_store %arg4[%c0_110, %c0_111, %c16_112], %115 {strides = array<i32>} : memref<1x8x256xf32, #tpu.memory_space<vmem>>, vector<1x8x16xf32>,
    %116 = vector.extract_strided_slice %107 {offsets = [0, 37], sizes = [8, 16], strides = [1, 1]} : vector<8x384xf32> to vector<8x16xf32>
    %c0_113 = arith.constant 0 : index
    %c0_114 = arith.constant 0 : index
    %c32_115 = arith.constant 32 : index
    %117 = vector.load %arg4[%c0_113, %c0_114, %c32_115] : memref<1x8x256xf32, #tpu.memory_space<vmem>>, vector<1x8x16xf32>
    %118 = vector.shape_cast %117 : vector<1x8x16xf32> to vector<8x16xf32>
    %119 = vector.shape_cast %116 : vector<8x16xf32> to vector<1x8x16xf32>
    tpu.vector_store %arg4[%c0_113, %c0_114, %c32_115], %119 {strides = array<i32>} : memref<1x8x256xf32, #tpu.memory_space<vmem>>, vector<1x8x16xf32>,
    %120 = vector.extract_strided_slice %107 {offsets = [0, 55], sizes = [8, 16], strides = [1, 1]} : vector<8x384xf32> to vector<8x16xf32>
    %c0_116 = arith.constant 0 : index
    %c0_117 = arith.constant 0 : index
    %c48 = arith.constant 48 : index
    %121 = vector.load %arg4[%c0_116, %c0_117, %c48] : memref<1x8x256xf32, #tpu.memory_space<vmem>>, vector<1x8x16xf32>
    %122 = vector.shape_cast %121 : vector<1x8x16xf32> to vector<8x16xf32>
    %123 = vector.shape_cast %120 : vector<8x16xf32> to vector<1x8x16xf32>
    tpu.vector_store %arg4[%c0_116, %c0_117, %c48], %123 {strides = array<i32>} : memref<1x8x256xf32, #tpu.memory_space<vmem>>, vector<1x8x16xf32>,
    %124 = vector.extract_strided_slice %107 {offsets = [0, 73], sizes = [8, 16], strides = [1, 1]} : vector<8x384xf32> to vector<8x16xf32>
    %c0_118 = arith.constant 0 : index
    %c0_119 = arith.constant 0 : index
    %c64 = arith.constant 64 : index
    %125 = vector.load %arg4[%c0_118, %c0_119, %c64] : memref<1x8x256xf32, #tpu.memory_space<vmem>>, vector<1x8x16xf32>
    %126 = vector.shape_cast %125 : vector<1x8x16xf32> to vector<8x16xf32>
    %127 = vector.shape_cast %124 : vector<8x16xf32> to vector<1x8x16xf32>
    tpu.vector_store %arg4[%c0_118, %c0_119, %c64], %127 {strides = array<i32>} : memref<1x8x256xf32, #tpu.memory_space<vmem>>, vector<1x8x16xf32>,
    %128 = vector.extract_strided_slice %107 {offsets = [0, 91], sizes = [8, 16], strides = [1, 1]} : vector<8x384xf32> to vector<8x16xf32>
    %c0_120 = arith.constant 0 : index
    %c0_121 = arith.constant 0 : index
    %c80 = arith.constant 80 : index
    %129 = vector.load %arg4[%c0_120, %c0_121, %c80] : memref<1x8x256xf32, #tpu.memory_space<vmem>>, vector<1x8x16xf32>
    %130 = vector.shape_cast %129 : vector<1x8x16xf32> to vector<8x16xf32>
    %131 = vector.shape_cast %128 : vector<8x16xf32> to vector<1x8x16xf32>
    tpu.vector_store %arg4[%c0_120, %c0_121, %c80], %131 {strides = array<i32>} : memref<1x8x256xf32, #tpu.memory_space<vmem>>, vector<1x8x16xf32>,
    %132 = vector.extract_strided_slice %107 {offsets = [0, 109], sizes = [8, 16], strides = [1, 1]} : vector<8x384xf32> to vector<8x16xf32>
    %c0_122 = arith.constant 0 : index
    %c0_123 = arith.constant 0 : index
    %c96 = arith.constant 96 : index
    %133 = vector.load %arg4[%c0_122, %c0_123, %c96] : memref<1x8x256xf32, #tpu.memory_space<vmem>>, vector<1x8x16xf32>
    %134 = vector.shape_cast %133 : vector<1x8x16xf32> to vector<8x16xf32>
    %135 = vector.shape_cast %132 : vector<8x16xf32> to vector<1x8x16xf32>
    tpu.vector_store %arg4[%c0_122, %c0_123, %c96], %135 {strides = array<i32>} : memref<1x8x256xf32, #tpu.memory_space<vmem>>, vector<1x8x16xf32>,
    %136 = vector.extract_strided_slice %107 {offsets = [0, 127], sizes = [8, 16], strides = [1, 1]} : vector<8x384xf32> to vector<8x16xf32>
    %c0_124 = arith.constant 0 : index
    %c0_125 = arith.constant 0 : index
    %c112 = arith.constant 112 : index
    %137 = vector.load %arg4[%c0_124, %c0_125, %c112] : memref<1x8x256xf32, #tpu.memory_space<vmem>>, vector<1x8x16xf32>
    %138 = vector.shape_cast %137 : vector<1x8x16xf32> to vector<8x16xf32>
    %139 = vector.shape_cast %136 : vector<8x16xf32> to vector<1x8x16xf32>
    tpu.vector_store %arg4[%c0_124, %c0_125, %c112], %139 {strides = array<i32>} : memref<1x8x256xf32, #tpu.memory_space<vmem>>, vector<1x8x16xf32>,
    %140 = vector.extract_strided_slice %107 {offsets = [0, 145], sizes = [8, 16], strides = [1, 1]} : vector<8x384xf32> to vector<8x16xf32>
    %c0_126 = arith.constant 0 : index
    %c0_127 = arith.constant 0 : index
    %c128_128 = arith.constant 128 : index
    %141 = vector.load %arg4[%c0_126, %c0_127, %c128_128] : memref<1x8x256xf32, #tpu.memory_space<vmem>>, vector<1x8x16xf32>
    %142 = vector.shape_cast %141 : vector<1x8x16xf32> to vector<8x16xf32>
    %143 = vector.shape_cast %140 : vector<8x16xf32> to vector<1x8x16xf32>
    tpu.vector_store %arg4[%c0_126, %c0_127, %c128_128], %143 {strides = array<i32>} : memref<1x8x256xf32, #tpu.memory_space<vmem>>, vector<1x8x16xf32>,
    %144 = vector.extract_strided_slice %107 {offsets = [0, 163], sizes = [8, 16], strides = [1, 1]} : vector<8x384xf32> to vector<8x16xf32>
    %c0_129 = arith.constant 0 : index
    %c0_130 = arith.constant 0 : index
    %c144 = arith.constant 144 : index
    %145 = vector.load %arg4[%c0_129, %c0_130, %c144] : memref<1x8x256xf32, #tpu.memory_space<vmem>>, vector<1x8x16xf32>
    %146 = vector.shape_cast %145 : vector<1x8x16xf32> to vector<8x16xf32>
    %147 = vector.shape_cast %144 : vector<8x16xf32> to vector<1x8x16xf32>
    tpu.vector_store %arg4[%c0_129, %c0_130, %c144], %147 {strides = array<i32>} : memref<1x8x256xf32, #tpu.memory_space<vmem>>, vector<1x8x16xf32>,
    %148 = vector.extract_strided_slice %107 {offsets = [0, 181], sizes = [8, 16], strides = [1, 1]} : vector<8x384xf32> to vector<8x16xf32>
    %c0_131 = arith.constant 0 : index
    %c0_132 = arith.constant 0 : index
    %c160 = arith.constant 160 : index
    %149 = vector.load %arg4[%c0_131, %c0_132, %c160] : memref<1x8x256xf32, #tpu.memory_space<vmem>>, vector<1x8x16xf32>
    %150 = vector.shape_cast %149 : vector<1x8x16xf32> to vector<8x16xf32>
    %151 = vector.shape_cast %148 : vector<8x16xf32> to vector<1x8x16xf32>
    tpu.vector_store %arg4[%c0_131, %c0_132, %c160], %151 {strides = array<i32>} : memref<1x8x256xf32, #tpu.memory_space<vmem>>, vector<1x8x16xf32>,
    %152 = vector.extract_strided_slice %107 {offsets = [0, 199], sizes = [8, 16], strides = [1, 1]} : vector<8x384xf32> to vector<8x16xf32>
    %c0_133 = arith.constant 0 : index
    %c0_134 = arith.constant 0 : index
    %c176 = arith.constant 176 : index
    %153 = vector.load %arg4[%c0_133, %c0_134, %c176] : memref<1x8x256xf32, #tpu.memory_space<vmem>>, vector<1x8x16xf32>
    %154 = vector.shape_cast %153 : vector<1x8x16xf32> to vector<8x16xf32>
    %155 = vector.shape_cast %152 : vector<8x16xf32> to vector<1x8x16xf32>
    tpu.vector_store %arg4[%c0_133, %c0_134, %c176], %155 {strides = array<i32>} : memref<1x8x256xf32, #tpu.memory_space<vmem>>, vector<1x8x16xf32>,
    %156 = vector.extract_strided_slice %107 {offsets = [0, 217], sizes = [8, 16], strides = [1, 1]} : vector<8x384xf32> to vector<8x16xf32>
    %c0_135 = arith.constant 0 : index
    %c0_136 = arith.constant 0 : index
    %c192 = arith.constant 192 : index
    %157 = vector.load %arg4[%c0_135, %c0_136, %c192] : memref<1x8x256xf32, #tpu.memory_space<vmem>>, vector<1x8x16xf32>
    %158 = vector.shape_cast %157 : vector<1x8x16xf32> to vector<8x16xf32>
    %159 = vector.shape_cast %156 : vector<8x16xf32> to vector<1x8x16xf32>
    tpu.vector_store %arg4[%c0_135, %c0_136, %c192], %159 {strides = array<i32>} : memref<1x8x256xf32, #tpu.memory_space<vmem>>, vector<1x8x16xf32>,
    %160 = vector.extract_strided_slice %107 {offsets = [0, 235], sizes = [8, 16], strides = [1, 1]} : vector<8x384xf32> to vector<8x16xf32>
    %c0_137 = arith.constant 0 : index
    %c0_138 = arith.constant 0 : index
    %c208 = arith.constant 208 : index
    %161 = vector.load %arg4[%c0_137, %c0_138, %c208] : memref<1x8x256xf32, #tpu.memory_space<vmem>>, vector<1x8x16xf32>
    %162 = vector.shape_cast %161 : vector<1x8x16xf32> to vector<8x16xf32>
    %163 = vector.shape_cast %160 : vector<8x16xf32> to vector<1x8x16xf32>
    tpu.vector_store %arg4[%c0_137, %c0_138, %c208], %163 {strides = array<i32>} : memref<1x8x256xf32, #tpu.memory_space<vmem>>, vector<1x8x16xf32>,
    %164 = vector.extract_strided_slice %107 {offsets = [0, 253], sizes = [8, 16], strides = [1, 1]} : vector<8x384xf32> to vector<8x16xf32>
    %c0_139 = arith.constant 0 : index
    %c0_140 = arith.constant 0 : index
    %c224 = arith.constant 224 : index
    %165 = vector.load %arg4[%c0_139, %c0_140, %c224] : memref<1x8x256xf32, #tpu.memory_space<vmem>>, vector<1x8x16xf32>
    %166 = vector.shape_cast %165 : vector<1x8x16xf32> to vector<8x16xf32>
    %167 = vector.shape_cast %164 : vector<8x16xf32> to vector<1x8x16xf32>
    tpu.vector_store %arg4[%c0_139, %c0_140, %c224], %167 {strides = array<i32>} : memref<1x8x256xf32, #tpu.memory_space<vmem>>, vector<1x8x16xf32>,
    %168 = vector.extract_strided_slice %107 {offsets = [0, 271], sizes = [8, 16], strides = [1, 1]} : vector<8x384xf32> to vector<8x16xf32>
    %c0_141 = arith.constant 0 : index
    %c0_142 = arith.constant 0 : index
    %c240 = arith.constant 240 : index
    %169 = vector.load %arg4[%c0_141, %c0_142, %c240] : memref<1x8x256xf32, #tpu.memory_space<vmem>>, vector<1x8x16xf32>
    %170 = vector.shape_cast %169 : vector<1x8x16xf32> to vector<8x16xf32>
    %171 = vector.shape_cast %168 : vector<8x16xf32> to vector<1x8x16xf32>
    tpu.vector_store %arg4[%c0_141, %c0_142, %c240], %171 {strides = array<i32>} : memref<1x8x256xf32, #tpu.memory_space<vmem>>, vector<1x8x16xf32>,
    return
  }
  func.func @transform_0(%arg0: i32) -> (i32, i32, i32, i32) {
    %c0_i32 = arith.constant 0 : i32
    %c0_i32_0 = arith.constant 0 : i32
    %c0_i32_1 = arith.constant 0 : i32
    %c0_i32_2 = arith.constant 0 : i32
    return %arg0, %c0_i32, %c0_i32_0, %c0_i32_1 : i32, i32, i32, i32
  }
  func.func @transform_1(%arg0: i32) -> (i32, i32) {
    %c0_i32 = arith.constant 0 : i32
    %c0_i32_0 = arith.constant 0 : i32
    %c0_i32_1 = arith.constant 0 : i32
    return %c0_i32, %c0_i32_0 : i32, i32
  }
  func.func @transform_2(%arg0: i32) -> (i32, i32) {
    %c0_i32 = arith.constant 0 : i32
    %c0_i32_0 = arith.constant 0 : i32
    %c0_i32_1 = arith.constant 0 : i32
    return %c0_i32, %c0_i32_0 : i32, i32
  }
  func.func @transform_3(%arg0: i32) -> (i32, i32, i32) {
    %c0_i32 = arith.constant 0 : i32
    %c0_i32_0 = arith.constant 0 : i32
    %c0_i32_1 = arith.constant 0 : i32
    return %arg0, %c0_i32, %c0_i32_0 : i32, i32, i32
  }
}

</mosaic_0001>

<llo_original>
// kernel: tpu_custom_call.1
$region0: #{tpu_custom_call.1}
  #allocation0 [shape = 'u32[]', space=smem, size = 0x4, offset = 0x4, fixed_abs, tag = 'smem constant byte address 0x4 - core index']
  #allocation1 [shape = 'u32[144,128]{1,0:T(1,128)}', space=vmem, size = 0x12000, scoped, tag = 'internal scratch']
  #allocation2 [shape = 'bf16[4,512]{1,0:T(4,128)(2,1)}', space=vmem, size = 0x1000, scoped, tag = 'scratch operand']
  %s0 = inlined_call_operand.hbm [shape: f32[2,4,16,16], index: 0, kind: input, shape index: {}]
  %s1 = inlined_call_operand.vmem [shape: bf16[8,36], index: 1, kind: input, shape index: {}]
  %s2 = inlined_call_operand.vmem [shape: f32[8,1], index: 2, kind: input, shape index: {}]
  %s3 = inlined_call_operand.hbm [shape: f32[2,8,256], index: 3, kind: output, shape index: {}]
  %s4 = sld [smem:[#allocation0]]
  $region49: #{tpu_custom_call.1} parent=0
    _
  %s6 = ssub.s32 1, %s4
  %s7 = scalar_select 0, %s6, %s4
  $region1: #{tpu_custom_call.1} parent=0
    #allocation3 [shape = 'u8[65536]{0}', space=vmem, size = 0x10000, scoped, tag = 'input window, operand 0']
    #allocation4 [shape = 's32[2]{0}', space=sflag, size = 0x8, scoped, tag = 'scoped memory for tpu_custom_call.1']
    #allocation5 [shape = 's32[2]{0}', space=sflag, size = 0x8, scoped, tag = 'scoped memory for tpu_custom_call.1']
    #allocation6 [shape = 'u8[16384]{0}', space=vmem, size = 0x4000, scoped, tag = 'output window, operand 0']
    %8 = vsyncpa [#allocation4], 0
    %s9 = scalar_lea.sflag [#allocation4], 1
    %10 = vsyncpa %s9, 0
    %11 = vsyncpa [#allocation5], 0
    %s12 = scalar_lea.sflag [#allocation5], 1
    %13 = vsyncpa %s12, 0
    loop: start=0, step=1, limit=4
    $region2: #{tpu_custom_call.1} parent=1 // loop_pre_header
      _
    $region3: #{tpu_custom_call.1} parent=1 // loop_header
      %s15 = sphi 0, %s19
      %p16 = scmp.ge.s32.totalorder %s15, 4
      %s25 = sphi 0, %s27
      %s28 = sphi 0, %s25
      %s29 = sphi 0, %s28
      %s45 = sphi 0, %s29
      %s49 = sphi 0, %s49
      %s51 = sphi 0, %s49
      %s52 = sphi 0, %s51
      %s66 = sphi 0, %s52
      %s70 = sphi 0, %s70
      %s72 = sphi 0, %s70
      %s73 = sphi 0, %s72
      %s87 = sphi 0, %s73
      %s93 = sphi 0, %s95
      %s96 = sphi 0, %s93
      %s97 = sphi 0, %s96
      %s113 = sphi 0, %s97
    $region4: #{tpu_custom_call.1} parent=1 // loop_header_branch
      %18 = sbr.rel (%p16) target = $region8
    $region5: #{tpu_custom_call.1} parent=1 // loop_body
      %s20 = ssub.s32 %s15, 1
      %s21 = ssub.s32 %s15, 2
      %s22 = sadd.s32 %s15, 1
      %s23 = ssub.s32 %s15, %s22
      %p24 = scmp.eq.s32.totalorder %s23, 0
      %s26 = sadd.s32 %s25, 1
      %s27 = scalar_select %p24, %s25, %s26
      %p30 = pneg %p24
      %p31 = scmp.eq.s32.totalorder %s15, 1
      %p32 = por %p30, %p31
      %p33 = scmp.ne.s32.totalorder %s25, %s28
      %p34 = scmp.eq.s32.totalorder %s15, 0
      %p35 = por %p33, %p34
      %p36 = scmp.ne.s32.totalorder %s25, %s28
      %p37 = scmp.eq.s32.totalorder %s20, 1
      %p38 = por %p36, %p37
      %p39 = scmp.ne.s32.totalorder %s28, %s29
      %p40 = scmp.eq.s32.totalorder %s20, 0
      %p41 = por %p39, %p40
      %p42 = scmp.ne.s32.totalorder %s28, %s29
      %p43 = scmp.eq.s32.totalorder %s21, 1
      %p44 = por %p42, %p43
      %p46 = scmp.ne.s32.totalorder %s29, %s45
      %p47 = scmp.eq.s32.totalorder %s21, 0
      %p48 = por %p46, %p47
      %s50 = sadd.s32 %s49, 1
      %p53 = scmp.eq.s32.totalorder %s15, 1
      %p54 = scmp.ne.s32.totalorder %s49, %s51
      %p55 = scmp.eq.s32.totalorder %s15, 0
      %p56 = por %p54, %p55
      %p57 = scmp.ne.s32.totalorder %s49, %s51
      %p58 = scmp.eq.s32.totalorder %s20, 1
      %p59 = por %p57, %p58
      %p60 = scmp.ne.s32.totalorder %s51, %s52
      %p61 = scmp.eq.s32.totalorder %s20, 0
      %p62 = por %p60, %p61
      %p63 = scmp.ne.s32.totalorder %s51, %s52
      %p64 = scmp.eq.s32.totalorder %s21, 1
      %p65 = por %p63, %p64
      %p67 = scmp.ne.s32.totalorder %s52, %s66
      %p68 = scmp.eq.s32.totalorder %s21, 0
      %p69 = por %p67, %p68
      %s71 = sadd.s32 %s70, 1
      %p74 = scmp.eq.s32.totalorder %s15, 1
      %p75 = scmp.ne.s32.totalorder %s70, %s72
      %p76 = scmp.eq.s32.totalorder %s15, 0
      %p77 = por %p75, %p76
      %p78 = scmp.ne.s32.totalorder %s70, %s72
      %p79 = scmp.eq.s32.totalorder %s20, 1
      %p80 = por %p78, %p79
      %p81 = scmp.ne.s32.totalorder %s72, %s73
      %p82 = scmp.eq.s32.totalorder %s20, 0
      %p83 = por %p81, %p82
      %p84 = scmp.ne.s32.totalorder %s72, %s73
      %p85 = scmp.eq.s32.totalorder %s21, 1
      %p86 = por %p84, %p85
      %p88 = scmp.ne.s32.totalorder %s73, %s87
      %p89 = scmp.eq.s32.totalorder %s21, 0
      %p90 = por %p88, %p89
      %s91 = ssub.s32 %s15, %s22
      %p92 = scmp.eq.s32.totalorder %s91, 0
      %s94 = sadd.s32 %s93, 1
      %s95 = scalar_select %p92, %s93, %s94
      %p98 = pneg %p92
      %p99 = scmp.eq.s32.totalorder %s15, 1
      %p100 = por %p98, %p99
      %p101 = scmp.ne.s32.totalorder %s93, %s96
      %p102 = scmp.eq.s32.totalorder %s15, 0
      %p103 = por %p101, %p102
      %p104 = scmp.ne.s32.totalorder %s93, %s96
      %p105 = scmp.eq.s32.totalorder %s20, 1
      %p106 = por %p104, %p105
      %p107 = scmp.ne.s32.totalorder %s96, %s97
      %p108 = scmp.eq.s32.totalorder %s20, 0
      %p109 = por %p107, %p108
      %p110 = scmp.ne.s32.totalorder %s96, %s97
      %p111 = scmp.eq.s32.totalorder %s21, 1
      %p112 = por %p110, %p111
      %p114 = scmp.ne.s32.totalorder %s97, %s113
      %p115 = scmp.eq.s32.totalorder %s21, 0
      %p116 = por %p114, %p115
      %p117 = scmp.le.s32.totalorder 1, %s15
      %p118 = scmp.lt.s32.totalorder %s15, 3
      %p119 = pnand %p117, %p118
      %p120 = pneg %p119
      // Predicated region
      $region9: #{tpu_custom_call.1} parent=5 // pred_check
        _
      $region10: #{tpu_custom_call.1} parent=5 // pred_check_branch
        %122 = sbr.rel (%p119) target = $region12
      $region11: #{tpu_custom_call.1} parent=5 // pred_region
        %s123 = ssub.s32 %s15, 1
        // Predicated region
        $region13: #{tpu_custom_call.1} parent=11 // pred_check
          %p124 = pneg %p62
        $region14: #{tpu_custom_call.1} parent=11 // pred_check_branch
          %126 = sbr.rel (%p124) target = $region16
        $region15: #{tpu_custom_call.1} parent=11 // pred_region
          _
        $region16: #{tpu_custom_call.1} parent=11 // pred_fallthru
          _
        // Predicated region
        $region17: #{tpu_custom_call.1} parent=11 // pred_check
          %p127 = pneg %p83
        $region18: #{tpu_custom_call.1} parent=11 // pred_check_branch
          %129 = sbr.rel (%p127) target = $region20
        $region19: #{tpu_custom_call.1} parent=11 // pred_region
          _
        $region20: #{tpu_custom_call.1} parent=11 // pred_fallthru
          _
      $region12: #{tpu_custom_call.1} parent=5 // pred_fallthru
        _
      %p130 = scmp.lt.s32.totalorder %s15, 2
      // Predicated region
      $region21: #{tpu_custom_call.1} parent=5 // pred_check
        %p131 = pneg %p130
      $region22: #{tpu_custom_call.1} parent=5 // pred_check_branch
        %133 = sbr.rel (%p131) target = $region24
      $region23: #{tpu_custom_call.1} parent=5 // pred_region
        // Predicated region
        $region25: #{tpu_custom_call.1} parent=23 // pred_check
          %p134 = pneg %p35
        $region26: #{tpu_custom_call.1} parent=23 // pred_check_branch
          %136 = sbr.rel (%p134) target = $region28
        $region27: #{tpu_custom_call.1} parent=23 // pred_region
          %s137 = sand.u32 %s25, 1
          %s138 = scalar_lea.sflag [#allocation4], %s137
          %s139 = sand.u32 %s25, 1
          %s140 = smul.addr %s139, 64
          %s141 = scalar_lea.vmem [#allocation3], %s140
          %s143 = ssub.s32 1024, 1024
          %144 = vsyncadd %s138, %s143
          %s145 = smul.addr %s15, 8
          %s146 = smul.addr %s145, 128
          %s147 = scalar_lea.hbm %s0, %s146
          %s148 = sshll.u32 %s141, 4
          %s149 = int_to_ptr.vmem [resolvable:$true] %s148
          %154 = dma.hbm_to_vmem [thread:$0]  %s147, 1024, %s149, %s138, 128, 128, 8
        $region28: #{tpu_custom_call.1} parent=23 // pred_fallthru
          _
      $region24: #{tpu_custom_call.1} parent=5 // pred_fallthru
        _
      %p155 = scmp.le.s32.totalorder 1, %s15
      %p156 = scmp.lt.s32.totalorder %s15, 3
      %p157 = pnand %p155, %p156
      %p158 = pneg %p157
      // Predicated region
      $region29: #{tpu_custom_call.1} parent=5 // pred_check
        _
      $region30: #{tpu_custom_call.1} parent=5 // pred_check_branch
        %160 = sbr.rel (%p157) target = $region32
      $region31: #{tpu_custom_call.1} parent=5 // pred_region
        %s161 = ssub.s32 %s15, 1
        %s162 = sand.u32 %s28, 1
        %s163 = scalar_lea.sflag [#allocation4], %s162
        %s164 = sand.u32 %s28, 1
        %s165 = smul.addr %s164, 64
        %s166 = scalar_lea.vmem [#allocation3], %s165
        // Predicated region
        $region33: #{tpu_custom_call.1} parent=31 // pred_check
          %p167 = pneg %p41
        $region34: #{tpu_custom_call.1} parent=31 // pred_check_branch
          %169 = sbr.rel (%p167) target = $region36
        $region35: #{tpu_custom_call.1} parent=31 // pred_region
          %170 = dma.done %s163, 1024
        $region36: #{tpu_custom_call.1} parent=31 // pred_fallthru
          _
        %s171 = sand.u32 %s28, 1
        %s172 = scalar_lea.sflag [#allocation4], %s171
        %s173 = sand.u32 %s28, 1
        %s174 = smul.addr %s173, 64
        %s175 = scalar_lea.vmem [#allocation3], %s174
        %p176 = pneg %p41
        %p177 = pneg %p38
        %p178 = pneg %p62
        %p179 = pneg %p59
        %p180 = pneg %p83
        %p181 = pneg %p80
        %p182 = pneg %p109
        %p183 = pneg %p106
        %s184 = sand.u32 %s96, 1
        %s185 = scalar_lea.sflag [#allocation5], %s184
        %s186 = sand.u32 %s96, 1
        %s187 = smul.addr %s186, 16
        %s188 = scalar_lea.vmem [#allocation6], %s187
        %190 = vst [vmem:[#allocation2] sm:$0xff] 0
        %v191 = vld [vmem:[%s166] sm:$0x1]
        %v192 = vld [vmem:[%s166 + $0x10] sm:$0x1]
        %v193 = vld [vmem:[%s166 + $0x20] sm:$0x1]
        %v194 = vld [vmem:[%s166 + $0x30] sm:$0x1]
        %v195 = vpack.c.bf16 %v191, %v191
        %v196 = vpack.c.bf16 %v192, %v192
        %v197 = vpack.c.bf16 %v193, %v193
        %v198 = vpack.c.bf16 %v194, %v194
        %v204 = vunpack.c.l.s4 1983009808
        %v205 = vunpack.c.0.s8 %v204
        %v206 = vlaneseq
        %v207 = vshrl.u32 %v206, 7
        %v208 = vsub.s32 %v205, %v207
        %v209 = vrot.slane %v195, %v208
        %v211 = vunpack.c.l.s4 1983009808
        %v212 = vunpack.c.0.s8 %v211
        %v213 = vlaneseq
        %v214 = vshrl.u32 %v213, 7
        %v215 = vsub.s32 %v212, %v214
        %v216 = vrot.slane %v196, %v215
        %v218 = vunpack.c.l.s4 1983009808
        %v219 = vunpack.c.0.s8 %v218
        %v220 = vlaneseq
        %v221 = vshrl.u32 %v220, 7
        %v222 = vsub.s32 %v219, %v221
        %v223 = vrot.slane %v197, %v222
        %v225 = vunpack.c.l.s4 1983009808
        %v226 = vunpack.c.0.s8 %v225
        %v227 = vlaneseq
        %v228 = vshrl.u32 %v227, 7
        %v229 = vsub.s32 %v226, %v228
        %v230 = vrot.slane %v198, %v229
        %v232 = vunpack.c.l.s4 1983009808
        %v233 = vunpack.c.0.s8 %v232
        %v234 = vlaneseq
        %v235 = vshrl.u32 %v234, 7
        %v236 = vsub.s32 %v233, %v235
        %v237 = vrot.slane %v209, %v236
        %v239 = vunpack.c.l.s4 1983009808
        %v240 = vunpack.c.0.s8 %v239
        %v241 = vlaneseq
        %v242 = vshrl.u32 %v241, 7
        %v243 = vsub.s32 %v240, %v242
        %v244 = vrot.slane %v216, %v243
        %v246 = vunpack.c.l.s4 1983009808
        %v247 = vunpack.c.0.s8 %v246
        %v248 = vlaneseq
        %v249 = vshrl.u32 %v248, 7
        %v250 = vsub.s32 %v247, %v249
        %v251 = vrot.slane %v223, %v250
        %v253 = vunpack.c.l.s4 1983009808
        %v254 = vunpack.c.0.s8 %v253
        %v255 = vlaneseq
        %v256 = vshrl.u32 %v255, 7
        %v257 = vsub.s32 %v254, %v256
        %v258 = vrot.slane %v230, %v257
        %v259 = vunpack.c.l.b16 %v237
        %v260 = vunpack.c.l.b16 %v244
        %v261 = vunpack.c.l.b16 %v251
        %v262 = vunpack.c.l.b16 %v258
        %v263 = vrot.slane %v260, 7
        %vm264 = vcmask 1041409
        %v265 = vsel %vm264, %v263, %v259
        %v266 = vrot.slane %v261, 6
        %vm267 = vcmask 1042434
        %v268 = vsel %vm267, %v266, %v265
        %v269 = vrot.slane %v262, 5
        %vm270 = vcmask 1043459
        %v271 = vsel %vm270, %v269, %v268
        %v272 = vpack.c.b16 %v271, %v271
        %v274 = vunpack.c.l.s4 1983009808
        %v275 = vunpack.c.0.s8 %v274
        %v276 = vlaneseq
        %v277 = vshrl.u32 %v276, 7
        %v278 = vsub.s32 %v275, %v277
        %v279 = vrot.slane %v272, %v278
        %280 = vrot.lane.b32.xlu0 %v279, 20
        %v281 = vpop.permute.xlu0 %280
        %vm283 = vcmask 287904
        %284 = vst.msk [vmem:[#allocation2] sm:$0x3] %vm283, %v281
        %v285 = vld [vmem:[%s166 + $0x1] sm:$0x1]
        %v286 = vld [vmem:[%s166 + $0x11] sm:$0x1]
        %v287 = vld [vmem:[%s166 + $0x21] sm:$0x1]
        %v288 = vld [vmem:[%s166 + $0x31] sm:$0x1]
        %v289 = vpack.c.bf16 %v285, %v285
        %v290 = vpack.c.bf16 %v286, %v286
        %v291 = vpack.c.bf16 %v287, %v287
        %v292 = vpack.c.bf16 %v288, %v288
        %v298 = vunpack.c.l.s4 1983009808
        %v299 = vunpack.c.0.s8 %v298
        %v300 = vlaneseq
        %v301 = vshrl.u32 %v300, 7
        %v302 = vsub.s32 %v299, %v301
        %v303 = vrot.slane %v289, %v302
        %v305 = vunpack.c.l.s4 1983009808
        %v306 = vunpack.c.0.s8 %v305
        %v307 = vlaneseq
        %v308 = vshrl.u32 %v307, 7
        %v309 = vsub.s32 %v306, %v308
        %v310 = vrot.slane %v290, %v309
        %v312 = vunpack.c.l.s4 1983009808
        %v313 = vunpack.c.0.s8 %v312
        %v314 = vlaneseq
        %v315 = vshrl.u32 %v314, 7
        %v316 = vsub.s32 %v313, %v315
        %v317 = vrot.slane %v291, %v316
        %v319 = vunpack.c.l.s4 1983009808
        %v320 = vunpack.c.0.s8 %v319
        %v321 = vlaneseq
        %v322 = vshrl.u32 %v321, 7
        %v323 = vsub.s32 %v320, %v322
        %v324 = vrot.slane %v292, %v323
        %v326 = vunpack.c.l.s4 1983009808
        %v327 = vunpack.c.0.s8 %v326
        %v328 = vlaneseq
        %v329 = vshrl.u32 %v328, 7
        %v330 = vsub.s32 %v327, %v329
        %v331 = vrot.slane %v303, %v330
        %v333 = vunpack.c.l.s4 1983009808
        %v334 = vunpack.c.0.s8 %v333
        %v335 = vlaneseq
        %v336 = vshrl.u32 %v335, 7
        %v337 = vsub.s32 %v334, %v336
        %v338 = vrot.slane %v310, %v337
        %v340 = vunpack.c.l.s4 1983009808
        %v341 = vunpack.c.0.s8 %v340
        %v342 = vlaneseq
        %v343 = vshrl.u32 %v342, 7
        %v344 = vsub.s32 %v341, %v343
        %v345 = vrot.slane %v317, %v344
        %v347 = vunpack.c.l.s4 1983009808
        %v348 = vunpack.c.0.s8 %v347
        %v349 = vlaneseq
        %v350 = vshrl.u32 %v349, 7
        %v351 = vsub.s32 %v348, %v350
        %v352 = vrot.slane %v324, %v351
        %v353 = vunpack.c.l.b16 %v331
        %v354 = vunpack.c.l.b16 %v338
        %v355 = vunpack.c.l.b16 %v345
        %v356 = vunpack.c.l.b16 %v352
        %v357 = vrot.slane %v354, 7
        %v358 = vsel %vm264, %v357, %v353
        %v359 = vrot.slane %v355, 6
        %v360 = vsel %vm267, %v359, %v358
        %v361 = vrot.slane %v356, 5
        %v362 = vsel %vm270, %v361, %v360
        %v363 = vpack.c.b16 %v362, %v362
        %v365 = vunpack.c.l.s4 1983009808
        %v366 = vunpack.c.0.s8 %v365
        %v367 = vlaneseq
        %v368 = vshrl.u32 %v367, 7
        %v369 = vsub.s32 %v366, %v368
        %v370 = vrot.slane %v363, %v369
        %371 = vrot.lane.b32.xlu0 %v370, 38
        %v372 = vpop.permute.xlu0 %371
        %vm374 = vcmask 435504
        %375 = vst.msk [vmem:[#allocation2] sm:$0x3] %vm374, %v372
        %v376 = vld [vmem:[%s166 + $0x2] sm:$0x1]
        %v377 = vld [vmem:[%s166 + $0x12] sm:$0x1]
        %v378 = vld [vmem:[%s166 + $0x22] sm:$0x1]
        %v379 = vld [vmem:[%s166 + $0x32] sm:$0x1]
        %v380 = vpack.c.bf16 %v376, %v376
        %v381 = vpack.c.bf16 %v377, %v377
        %v382 = vpack.c.bf16 %v378, %v378
        %v383 = vpack.c.bf16 %v379, %v379
        %v389 = vunpack.c.l.s4 1983009808
        %v390 = vunpack.c.0.s8 %v389
        %v391 = vlaneseq
        %v392 = vshrl.u32 %v391, 7
        %v393 = vsub.s32 %v390, %v392
        %v394 = vrot.slane %v380, %v393
        %v396 = vunpack.c.l.s4 1983009808
        %v397 = vunpack.c.0.s8 %v396
        %v398 = vlaneseq
        %v399 = vshrl.u32 %v398, 7
        %v400 = vsub.s32 %v397, %v399
        %v401 = vrot.slane %v381, %v400
        %v403 = vunpack.c.l.s4 1983009808
        %v404 = vunpack.c.0.s8 %v403
        %v405 = vlaneseq
        %v406 = vshrl.u32 %v405, 7
        %v407 = vsub.s32 %v404, %v406
        %v408 = vrot.slane %v382, %v407
        %v410 = vunpack.c.l.s4 1983009808
        %v411 = vunpack.c.0.s8 %v410
        %v412 = vlaneseq
        %v413 = vshrl.u32 %v412, 7
        %v414 = vsub.s32 %v411, %v413
        %v415 = vrot.slane %v383, %v414
        %v417 = vunpack.c.l.s4 1983009808
        %v418 = vunpack.c.0.s8 %v417
        %v419 = vlaneseq
        %v420 = vshrl.u32 %v419, 7
        %v421 = vsub.s32 %v418, %v420
        %v422 = vrot.slane %v394, %v421
        %v424 = vunpack.c.l.s4 1983009808
        %v425 = vunpack.c.0.s8 %v424
        %v426 = vlaneseq
        %v427 = vshrl.u32 %v426, 7
        %v428 = vsub.s32 %v425, %v427
        %v429 = vrot.slane %v401, %v428
        %v431 = vunpack.c.l.s4 1983009808
        %v432 = vunpack.c.0.s8 %v431
        %v433 = vlaneseq
        %v434 = vshrl.u32 %v433, 7
        %v435 = vsub.s32 %v432, %v434
        %v436 = vrot.slane %v408, %v435
        %v438 = vunpack.c.l.s4 1983009808
        %v439 = vunpack.c.0.s8 %v438
        %v440 = vlaneseq
        %v441 = vshrl.u32 %v440, 7
        %v442 = vsub.s32 %v439, %v441
        %v443 = vrot.slane %v415, %v442
        %v444 = vunpack.c.l.b16 %v422
        %v445 = vunpack.c.l.b16 %v429
        %v446 = vunpack.c.l.b16 %v436
        %v447 = vunpack.c.l.b16 %v443
        %v448 = vrot.slane %v445, 7
        %v449 = vsel %vm264, %v448, %v444
        %v450 = vrot.slane %v446, 6
        %v451 = vsel %vm267, %v450, %v449
        %v452 = vrot.slane %v447, 5
        %v453 = vsel %vm270, %v452, %v451
        %v454 = vpack.c.b16 %v453, %v453
        %v456 = vunpack.c.l.s4 1983009808
        %v457 = vunpack.c.0.s8 %v456
        %v458 = vlaneseq
        %v459 = vshrl.u32 %v458, 7
        %v460 = vsub.s32 %v457, %v459
        %v461 = vrot.slane %v454, %v460
        %462 = vrot.lane.b32.xlu0 %v461, 56
        %v463 = vpop.permute.xlu0 %462
        %vm465 = vcmask 583104
        %466 = vst.msk [vmem:[#allocation2] sm:$0x3] %vm465, %v463
        %v467 = vld [vmem:[%s166 + $0x3] sm:$0x1]
        %v468 = vld [vmem:[%s166 + $0x13] sm:$0x1]
        %v469 = vld [vmem:[%s166 + $0x23] sm:$0x1]
        %v470 = vld [vmem:[%s166 + $0x33] sm:$0x1]
        %v471 = vpack.c.bf16 %v467, %v467
        %v472 = vpack.c.bf16 %v468, %v468
        %v473 = vpack.c.bf16 %v469, %v469
        %v474 = vpack.c.bf16 %v470, %v470
        %v480 = vunpack.c.l.s4 1983009808
        %v481 = vunpack.c.0.s8 %v480
        %v482 = vlaneseq
        %v483 = vshrl.u32 %v482, 7
        %v484 = vsub.s32 %v481, %v483
        %v485 = vrot.slane %v471, %v484
        %v487 = vunpack.c.l.s4 1983009808
        %v488 = vunpack.c.0.s8 %v487
        %v489 = vlaneseq
        %v490 = vshrl.u32 %v489, 7
        %v491 = vsub.s32 %v488, %v490
        %v492 = vrot.slane %v472, %v491
        %v494 = vunpack.c.l.s4 1983009808
        %v495 = vunpack.c.0.s8 %v494
        %v496 = vlaneseq
        %v497 = vshrl.u32 %v496, 7
        %v498 = vsub.s32 %v495, %v497
        %v499 = vrot.slane %v473, %v498
        %v501 = vunpack.c.l.s4 1983009808
        %v502 = vunpack.c.0.s8 %v501
        %v503 = vlaneseq
        %v504 = vshrl.u32 %v503, 7
        %v505 = vsub.s32 %v502, %v504
        %v506 = vrot.slane %v474, %v505
        %v508 = vunpack.c.l.s4 1983009808
        %v509 = vunpack.c.0.s8 %v508
        %v510 = vlaneseq
        %v511 = vshrl.u32 %v510, 7
        %v512 = vsub.s32 %v509, %v511
        %v513 = vrot.slane %v485, %v512
        %v515 = vunpack.c.l.s4 1983009808
        %v516 = vunpack.c.0.s8 %v515
        %v517 = vlaneseq
        %v518 = vshrl.u32 %v517, 7
        %v519 = vsub.s32 %v516, %v518
        %v520 = vrot.slane %v492, %v519
        %v522 = vunpack.c.l.s4 1983009808
        %v523 = vunpack.c.0.s8 %v522
        %v524 = vlaneseq
        %v525 = vshrl.u32 %v524, 7
        %v526 = vsub.s32 %v523, %v525
        %v527 = vrot.slane %v499, %v526
        %v529 = vunpack.c.l.s4 1983009808
        %v530 = vunpack.c.0.s8 %v529
        %v531 = vlaneseq
        %v532 = vshrl.u32 %v531, 7
        %v533 = vsub.s32 %v530, %v532
        %v534 = vrot.slane %v506, %v533
        %v535 = vunpack.c.l.b16 %v513
        %v536 = vunpack.c.l.b16 %v520
        %v537 = vunpack.c.l.b16 %v527
        %v538 = vunpack.c.l.b16 %v534
        %v539 = vrot.slane %v536, 7
        %v540 = vsel %vm264, %v539, %v535
        %v541 = vrot.slane %v537, 6
        %v542 = vsel %vm267, %v541, %v540
        %v543 = vrot.slane %v538, 5
        %v544 = vsel %vm270, %v543, %v542
        %v545 = vpack.c.b16 %v544, %v544
        %v547 = vunpack.c.l.s4 1983009808
        %v548 = vunpack.c.0.s8 %v547
        %v549 = vlaneseq
        %v550 = vshrl.u32 %v549, 7
        %v551 = vsub.s32 %v548, %v550
        %v552 = vrot.slane %v545, %v551
        %553 = vrot.lane.b32.xlu0 %v552, 74
        %v554 = vpop.permute.xlu0 %553
        %vm556 = vcmask 730704
        %557 = vst.msk [vmem:[#allocation2] sm:$0x3] %vm556, %v554
        %v558 = vld [vmem:[%s166 + $0x4] sm:$0x1]
        %v559 = vld [vmem:[%s166 + $0x14] sm:$0x1]
        %v560 = vld [vmem:[%s166 + $0x24] sm:$0x1]
        %v561 = vld [vmem:[%s166 + $0x34] sm:$0x1]
        %v562 = vpack.c.bf16 %v558, %v558
        %v563 = vpack.c.bf16 %v559, %v559
        %v564 = vpack.c.bf16 %v560, %v560
        %v565 = vpack.c.bf16 %v561, %v561
        %v571 = vunpack.c.l.s4 1983009808
        %v572 = vunpack.c.0.s8 %v571
        %v573 = vlaneseq
        %v574 = vshrl.u32 %v573, 7
        %v575 = vsub.s32 %v572, %v574
        %v576 = vrot.slane %v562, %v575
        %v578 = vunpack.c.l.s4 1983009808
        %v579 = vunpack.c.0.s8 %v578
        %v580 = vlaneseq
        %v581 = vshrl.u32 %v580, 7
        %v582 = vsub.s32 %v579, %v581
        %v583 = vrot.slane %v563, %v582
        %v585 = vunpack.c.l.s4 1983009808
        %v586 = vunpack.c.0.s8 %v585
        %v587 = vlaneseq
        %v588 = vshrl.u32 %v587, 7
        %v589 = vsub.s32 %v586, %v588
        %v590 = vrot.slane %v564, %v589
        %v592 = vunpack.c.l.s4 1983009808
        %v593 = vunpack.c.0.s8 %v592
        %v594 = vlaneseq
        %v595 = vshrl.u32 %v594, 7
        %v596 = vsub.s32 %v593, %v595
        %v597 = vrot.slane %v565, %v596
        %v599 = vunpack.c.l.s4 1983009808
        %v600 = vunpack.c.0.s8 %v599
        %v601 = vlaneseq
        %v602 = vshrl.u32 %v601, 7
        %v603 = vsub.s32 %v600, %v602
        %v604 = vrot.slane %v576, %v603
        %v606 = vunpack.c.l.s4 1983009808
        %v607 = vunpack.c.0.s8 %v606
        %v608 = vlaneseq
        %v609 = vshrl.u32 %v608, 7
        %v610 = vsub.s32 %v607, %v609
        %v611 = vrot.slane %v583, %v610
        %v613 = vunpack.c.l.s4 1983009808
        %v614 = vunpack.c.0.s8 %v613
        %v615 = vlaneseq
        %v616 = vshrl.u32 %v615, 7
        %v617 = vsub.s32 %v614, %v616
        %v618 = vrot.slane %v590, %v617
        %v620 = vunpack.c.l.s4 1983009808
        %v621 = vunpack.c.0.s8 %v620
        %v622 = vlaneseq
        %v623 = vshrl.u32 %v622, 7
        %v624 = vsub.s32 %v621, %v623
        %v625 = vrot.slane %v597, %v624
        %v626 = vunpack.c.l.b16 %v604
        %v627 = vunpack.c.l.b16 %v611
        %v628 = vunpack.c.l.b16 %v618
        %v629 = vunpack.c.l.b16 %v625
        %v630 = vrot.slane %v627, 7
        %v631 = vsel %vm264, %v630, %v626
        %v632 = vrot.slane %v628, 6
        %v633 = vsel %vm267, %v632, %v631
        %v634 = vrot.slane %v629, 5
        %v635 = vsel %vm270, %v634, %v633
        %v636 = vpack.c.b16 %v635, %v635
        %v638 = vunpack.c.l.s4 1983009808
        %v639 = vunpack.c.0.s8 %v638
        %v640 = vlaneseq
        %v641 = vshrl.u32 %v640, 7
        %v642 = vsub.s32 %v639, %v641
        %v643 = vrot.slane %v636, %v642
        %644 = vrot.lane.b32.xlu0 %v643, 92
        %v645 = vpop.permute.xlu0 %644
        %vm647 = vcmask 878304
        %648 = vst.msk [vmem:[#allocation2] sm:$0x3] %vm647, %v645
        %v649 = vld [vmem:[%s166 + $0x5] sm:$0x1]
        %v650 = vld [vmem:[%s166 + $0x15] sm:$0x1]
        %v651 = vld [vmem:[%s166 + $0x25] sm:$0x1]
        %v652 = vld [vmem:[%s166 + $0x35] sm:$0x1]
        %v653 = vpack.c.bf16 %v649, %v649
        %v654 = vpack.c.bf16 %v650, %v650
        %v655 = vpack.c.bf16 %v651, %v651
        %v656 = vpack.c.bf16 %v652, %v652
        %v662 = vunpack.c.l.s4 1983009808
        %v663 = vunpack.c.0.s8 %v662
        %v664 = vlaneseq
        %v665 = vshrl.u32 %v664, 7
        %v666 = vsub.s32 %v663, %v665
        %v667 = vrot.slane %v653, %v666
        %v669 = vunpack.c.l.s4 1983009808
        %v670 = vunpack.c.0.s8 %v669
        %v671 = vlaneseq
        %v672 = vshrl.u32 %v671, 7
        %v673 = vsub.s32 %v670, %v672
        %v674 = vrot.slane %v654, %v673
        %v676 = vunpack.c.l.s4 1983009808
        %v677 = vunpack.c.0.s8 %v676
        %v678 = vlaneseq
        %v679 = vshrl.u32 %v678, 7
        %v680 = vsub.s32 %v677, %v679
        %v681 = vrot.slane %v655, %v680
        %v683 = vunpack.c.l.s4 1983009808
        %v684 = vunpack.c.0.s8 %v683
        %v685 = vlaneseq
        %v686 = vshrl.u32 %v685, 7
        %v687 = vsub.s32 %v684, %v686
        %v688 = vrot.slane %v656, %v687
        %v690 = vunpack.c.l.s4 1983009808
        %v691 = vunpack.c.0.s8 %v690
        %v692 = vlaneseq
        %v693 = vshrl.u32 %v692, 7
        %v694 = vsub.s32 %v691, %v693
        %v695 = vrot.slane %v667, %v694
        %v697 = vunpack.c.l.s4 1983009808
        %v698 = vunpack.c.0.s8 %v697
        %v699 = vlaneseq
        %v700 = vshrl.u32 %v699, 7
        %v701 = vsub.s32 %v698, %v700
        %v702 = vrot.slane %v674, %v701
        %v704 = vunpack.c.l.s4 1983009808
        %v705 = vunpack.c.0.s8 %v704
        %v706 = vlaneseq
        %v707 = vshrl.u32 %v706, 7
        %v708 = vsub.s32 %v705, %v707
        %v709 = vrot.slane %v681, %v708
        %v711 = vunpack.c.l.s4 1983009808
        %v712 = vunpack.c.0.s8 %v711
        %v713 = vlaneseq
        %v714 = vshrl.u32 %v713, 7
        %v715 = vsub.s32 %v712, %v714
        %v716 = vrot.slane %v688, %v715
        %v717 = vunpack.c.l.b16 %v695
        %v718 = vunpack.c.l.b16 %v702
        %v719 = vunpack.c.l.b16 %v709
        %v720 = vunpack.c.l.b16 %v716
        %v721 = vrot.slane %v718, 7
        %v722 = vsel %vm264, %v721, %v717
        %v723 = vrot.slane %v719, 6
        %v724 = vsel %vm267, %v723, %v722
        %v725 = vrot.slane %v720, 5
        %v726 = vsel %vm270, %v725, %v724
        %v727 = vpack.c.b16 %v726, %v726
        %v729 = vunpack.c.l.s4 1983009808
        %v730 = vunpack.c.0.s8 %v729
        %v731 = vlaneseq
        %v732 = vshrl.u32 %v731, 7
        %v733 = vsub.s32 %v730, %v732
        %v734 = vrot.slane %v727, %v733
        %735 = vrot.lane.b32.xlu0 %v734, 110
        %v736 = vpop.permute.xlu0 %735
        %vm738 = vcmask 1025904
        %739 = vst.msk [vmem:[#allocation2] sm:$0x3] %vm738, %v736
        %v740 = vld [vmem:[%s166 + $0x6] sm:$0x1]
        %v741 = vld [vmem:[%s166 + $0x16] sm:$0x1]
        %v742 = vld [vmem:[%s166 + $0x26] sm:$0x1]
        %v743 = vld [vmem:[%s166 + $0x36] sm:$0x1]
        %v744 = vpack.c.bf16 %v740, %v740
        %v745 = vpack.c.bf16 %v741, %v741
        %v746 = vpack.c.bf16 %v742, %v742
        %v747 = vpack.c.bf16 %v743, %v743
        %v753 = vunpack.c.l.s4 1983009808
        %v754 = vunpack.c.0.s8 %v753
        %v755 = vlaneseq
        %v756 = vshrl.u32 %v755, 7
        %v757 = vsub.s32 %v754, %v756
        %v758 = vrot.slane %v744, %v757
        %v760 = vunpack.c.l.s4 1983009808
        %v761 = vunpack.c.0.s8 %v760
        %v762 = vlaneseq
        %v763 = vshrl.u32 %v762, 7
        %v764 = vsub.s32 %v761, %v763
        %v765 = vrot.slane %v745, %v764
        %v767 = vunpack.c.l.s4 1983009808
        %v768 = vunpack.c.0.s8 %v767
        %v769 = vlaneseq
        %v770 = vshrl.u32 %v769, 7
        %v771 = vsub.s32 %v768, %v770
        %v772 = vrot.slane %v746, %v771
        %v774 = vunpack.c.l.s4 1983009808
        %v775 = vunpack.c.0.s8 %v774
        %v776 = vlaneseq
        %v777 = vshrl.u32 %v776, 7
        %v778 = vsub.s32 %v775, %v777
        %v779 = vrot.slane %v747, %v778
        %v781 = vunpack.c.l.s4 1983009808
        %v782 = vunpack.c.0.s8 %v781
        %v783 = vlaneseq
        %v784 = vshrl.u32 %v783, 7
        %v785 = vsub.s32 %v782, %v784
        %v786 = vrot.slane %v758, %v785
        %v788 = vunpack.c.l.s4 1983009808
        %v789 = vunpack.c.0.s8 %v788
        %v790 = vlaneseq
        %v791 = vshrl.u32 %v790, 7
        %v792 = vsub.s32 %v789, %v791
        %v793 = vrot.slane %v765, %v792
        %v795 = vunpack.c.l.s4 1983009808
        %v796 = vunpack.c.0.s8 %v795
        %v797 = vlaneseq
        %v798 = vshrl.u32 %v797, 7
        %v799 = vsub.s32 %v796, %v798
        %v800 = vrot.slane %v772, %v799
        %v802 = vunpack.c.l.s4 1983009808
        %v803 = vunpack.c.0.s8 %v802
        %v804 = vlaneseq
        %v805 = vshrl.u32 %v804, 7
        %v806 = vsub.s32 %v803, %v805
        %v807 = vrot.slane %v779, %v806
        %v808 = vunpack.c.l.b16 %v786
        %v809 = vunpack.c.l.b16 %v793
        %v810 = vunpack.c.l.b16 %v800
        %v811 = vunpack.c.l.b16 %v807
        %v812 = vrot.slane %v809, 7
        %v813 = vsel %vm264, %v812, %v808
        %v814 = vrot.slane %v810, 6
        %v815 = vsel %vm267, %v814, %v813
        %v816 = vrot.slane %v811, 5
        %v817 = vsel %vm270, %v816, %v815
        %v818 = vpack.c.b16 %v817, %v817
        %v820 = vunpack.c.l.s4 1983009808
        %v821 = vunpack.c.0.s8 %v820
        %v822 = vlaneseq
        %v823 = vshrl.u32 %v822, 7
        %v824 = vsub.s32 %v821, %v823
        %v825 = vrot.slane %v818, %v824
        %vm827 = vcmask 123904
        %828 = vst.msk [vmem:[#allocation2 + $0x2] sm:$0x3] %vm827, %v825
        %v829 = vld [vmem:[%s166 + $0x7] sm:$0x1]
        %v830 = vld [vmem:[%s166 + $0x17] sm:$0x1]
        %v831 = vld [vmem:[%s166 + $0x27] sm:$0x1]
        %v832 = vld [vmem:[%s166 + $0x37] sm:$0x1]
        %v833 = vpack.c.bf16 %v829, %v829
        %v834 = vpack.c.bf16 %v830, %v830
        %v835 = vpack.c.bf16 %v831, %v831
        %v836 = vpack.c.bf16 %v832, %v832
        %v842 = vunpack.c.l.s4 1983009808
        %v843 = vunpack.c.0.s8 %v842
        %v844 = vlaneseq
        %v845 = vshrl.u32 %v844, 7
        %v846 = vsub.s32 %v843, %v845
        %v847 = vrot.slane %v833, %v846
        %v849 = vunpack.c.l.s4 1983009808
        %v850 = vunpack.c.0.s8 %v849
        %v851 = vlaneseq
        %v852 = vshrl.u32 %v851, 7
        %v853 = vsub.s32 %v850, %v852
        %v854 = vrot.slane %v834, %v853
        %v856 = vunpack.c.l.s4 1983009808
        %v857 = vunpack.c.0.s8 %v856
        %v858 = vlaneseq
        %v859 = vshrl.u32 %v858, 7
        %v860 = vsub.s32 %v857, %v859
        %v861 = vrot.slane %v835, %v860
        %v863 = vunpack.c.l.s4 1983009808
        %v864 = vunpack.c.0.s8 %v863
        %v865 = vlaneseq
        %v866 = vshrl.u32 %v865, 7
        %v867 = vsub.s32 %v864, %v866
        %v868 = vrot.slane %v836, %v867
        %v870 = vunpack.c.l.s4 1983009808
        %v871 = vunpack.c.0.s8 %v870
        %v872 = vlaneseq
        %v873 = vshrl.u32 %v872, 7
        %v874 = vsub.s32 %v871, %v873
        %v875 = vrot.slane %v847, %v874
        %v877 = vunpack.c.l.s4 1983009808
        %v878 = vunpack.c.0.s8 %v877
        %v879 = vlaneseq
        %v880 = vshrl.u32 %v879, 7
        %v881 = vsub.s32 %v878, %v880
        %v882 = vrot.slane %v854, %v881
        %v884 = vunpack.c.l.s4 1983009808
        %v885 = vunpack.c.0.s8 %v884
        %v886 = vlaneseq
        %v887 = vshrl.u32 %v886, 7
        %v888 = vsub.s32 %v885, %v887
        %v889 = vrot.slane %v861, %v888
        %v891 = vunpack.c.l.s4 1983009808
        %v892 = vunpack.c.0.s8 %v891
        %v893 = vlaneseq
        %v894 = vshrl.u32 %v893, 7
        %v895 = vsub.s32 %v892, %v894
        %v896 = vrot.slane %v868, %v895
        %v897 = vunpack.c.l.b16 %v875
        %v898 = vunpack.c.l.b16 %v882
        %v899 = vunpack.c.l.b16 %v889
        %v900 = vunpack.c.l.b16 %v896
        %v901 = vrot.slane %v898, 7
        %v902 = vsel %vm264, %v901, %v897
        %v903 = vrot.slane %v899, 6
        %v904 = vsel %vm267, %v903, %v902
        %v905 = vrot.slane %v900, 5
        %v906 = vsel %vm270, %v905, %v904
        %v907 = vpack.c.b16 %v906, %v906
        %v909 = vunpack.c.l.s4 1983009808
        %v910 = vunpack.c.0.s8 %v909
        %v911 = vlaneseq
        %v912 = vshrl.u32 %v911, 7
        %v913 = vsub.s32 %v910, %v912
        %v914 = vrot.slane %v907, %v913
        %915 = vrot.lane.b32.xlu0 %v914, 18
        %v916 = vpop.permute.xlu0 %915
        %vm918 = vcmask 271504
        %919 = vst.msk [vmem:[#allocation2 + $0x2] sm:$0x3] %vm918, %v916
        %v920 = vld [vmem:[%s166 + $0x8] sm:$0x1]
        %v921 = vld [vmem:[%s166 + $0x18] sm:$0x1]
        %v922 = vld [vmem:[%s166 + $0x28] sm:$0x1]
        %v923 = vld [vmem:[%s166 + $0x38] sm:$0x1]
        %v924 = vpack.c.bf16 %v920, %v920
        %v925 = vpack.c.bf16 %v921, %v921
        %v926 = vpack.c.bf16 %v922, %v922
        %v927 = vpack.c.bf16 %v923, %v923
        %v933 = vunpack.c.l.s4 1983009808
        %v934 = vunpack.c.0.s8 %v933
        %v935 = vlaneseq
        %v936 = vshrl.u32 %v935, 7
        %v937 = vsub.s32 %v934, %v936
        %v938 = vrot.slane %v924, %v937
        %v940 = vunpack.c.l.s4 1983009808
        %v941 = vunpack.c.0.s8 %v940
        %v942 = vlaneseq
        %v943 = vshrl.u32 %v942, 7
        %v944 = vsub.s32 %v941, %v943
        %v945 = vrot.slane %v925, %v944
        %v947 = vunpack.c.l.s4 1983009808
        %v948 = vunpack.c.0.s8 %v947
        %v949 = vlaneseq
        %v950 = vshrl.u32 %v949, 7
        %v951 = vsub.s32 %v948, %v950
        %v952 = vrot.slane %v926, %v951
        %v954 = vunpack.c.l.s4 1983009808
        %v955 = vunpack.c.0.s8 %v954
        %v956 = vlaneseq
        %v957 = vshrl.u32 %v956, 7
        %v958 = vsub.s32 %v955, %v957
        %v959 = vrot.slane %v927, %v958
        %v961 = vunpack.c.l.s4 1983009808
        %v962 = vunpack.c.0.s8 %v961
        %v963 = vlaneseq
        %v964 = vshrl.u32 %v963, 7
        %v965 = vsub.s32 %v962, %v964
        %v966 = vrot.slane %v938, %v965
        %v968 = vunpack.c.l.s4 1983009808
        %v969 = vunpack.c.0.s8 %v968
        %v970 = vlaneseq
        %v971 = vshrl.u32 %v970, 7
        %v972 = vsub.s32 %v969, %v971
        %v973 = vrot.slane %v945, %v972
        %v975 = vunpack.c.l.s4 1983009808
        %v976 = vunpack.c.0.s8 %v975
        %v977 = vlaneseq
        %v978 = vshrl.u32 %v977, 7
        %v979 = vsub.s32 %v976, %v978
        %v980 = vrot.slane %v952, %v979
        %v982 = vunpack.c.l.s4 1983009808
        %v983 = vunpack.c.0.s8 %v982
        %v984 = vlaneseq
        %v985 = vshrl.u32 %v984, 7
        %v986 = vsub.s32 %v983, %v985
        %v987 = vrot.slane %v959, %v986
        %v988 = vunpack.c.l.b16 %v966
        %v989 = vunpack.c.l.b16 %v973
        %v990 = vunpack.c.l.b16 %v980
        %v991 = vunpack.c.l.b16 %v987
        %v992 = vrot.slane %v989, 7
        %v993 = vsel %vm264, %v992, %v988
        %v994 = vrot.slane %v990, 6
        %v995 = vsel %vm267, %v994, %v993
        %v996 = vrot.slane %v991, 5
        %v997 = vsel %vm270, %v996, %v995
        %v998 = vpack.c.b16 %v997, %v997
        %v1000 = vunpack.c.l.s4 1983009808
        %v1001 = vunpack.c.0.s8 %v1000
        %v1002 = vlaneseq
        %v1003 = vshrl.u32 %v1002, 7
        %v1004 = vsub.s32 %v1001, %v1003
        %v1005 = vrot.slane %v998, %v1004
        %1006 = vrot.lane.b32.xlu0 %v1005, 36
        %v1007 = vpop.permute.xlu0 %1006
        %vm1009 = vcmask 419104
        %1010 = vst.msk [vmem:[#allocation2 + $0x2] sm:$0x3] %vm1009, %v1007
        %v1011 = vld [vmem:[%s166 + $0x9] sm:$0x1]
        %v1012 = vld [vmem:[%s166 + $0x19] sm:$0x1]
        %v1013 = vld [vmem:[%s166 + $0x29] sm:$0x1]
        %v1014 = vld [vmem:[%s166 + $0x39] sm:$0x1]
        %v1015 = vpack.c.bf16 %v1011, %v1011
        %v1016 = vpack.c.bf16 %v1012, %v1012
        %v1017 = vpack.c.bf16 %v1013, %v1013
        %v1018 = vpack.c.bf16 %v1014, %v1014
        %v1024 = vunpack.c.l.s4 1983009808
        %v1025 = vunpack.c.0.s8 %v1024
        %v1026 = vlaneseq
        %v1027 = vshrl.u32 %v1026, 7
        %v1028 = vsub.s32 %v1025, %v1027
        %v1029 = vrot.slane %v1015, %v1028
        %v1031 = vunpack.c.l.s4 1983009808
        %v1032 = vunpack.c.0.s8 %v1031
        %v1033 = vlaneseq
        %v1034 = vshrl.u32 %v1033, 7
        %v1035 = vsub.s32 %v1032, %v1034
        %v1036 = vrot.slane %v1016, %v1035
        %v1038 = vunpack.c.l.s4 1983009808
        %v1039 = vunpack.c.0.s8 %v1038
        %v1040 = vlaneseq
        %v1041 = vshrl.u32 %v1040, 7
        %v1042 = vsub.s32 %v1039, %v1041
        %v1043 = vrot.slane %v1017, %v1042
        %v1045 = vunpack.c.l.s4 1983009808
        %v1046 = vunpack.c.0.s8 %v1045
        %v1047 = vlaneseq
        %v1048 = vshrl.u32 %v1047, 7
        %v1049 = vsub.s32 %v1046, %v1048
        %v1050 = vrot.slane %v1018, %v1049
        %v1052 = vunpack.c.l.s4 1983009808
        %v1053 = vunpack.c.0.s8 %v1052
        %v1054 = vlaneseq
        %v1055 = vshrl.u32 %v1054, 7
        %v1056 = vsub.s32 %v1053, %v1055
        %v1057 = vrot.slane %v1029, %v1056
        %v1059 = vunpack.c.l.s4 1983009808
        %v1060 = vunpack.c.0.s8 %v1059
        %v1061 = vlaneseq
        %v1062 = vshrl.u32 %v1061, 7
        %v1063 = vsub.s32 %v1060, %v1062
        %v1064 = vrot.slane %v1036, %v1063
        %v1066 = vunpack.c.l.s4 1983009808
        %v1067 = vunpack.c.0.s8 %v1066
        %v1068 = vlaneseq
        %v1069 = vshrl.u32 %v1068, 7
        %v1070 = vsub.s32 %v1067, %v1069
        %v1071 = vrot.slane %v1043, %v1070
        %v1073 = vunpack.c.l.s4 1983009808
        %v1074 = vunpack.c.0.s8 %v1073
        %v1075 = vlaneseq
        %v1076 = vshrl.u32 %v1075, 7
        %v1077 = vsub.s32 %v1074, %v1076
        %v1078 = vrot.slane %v1050, %v1077
        %v1079 = vunpack.c.l.b16 %v1057
        %v1080 = vunpack.c.l.b16 %v1064
        %v1081 = vunpack.c.l.b16 %v1071
        %v1082 = vunpack.c.l.b16 %v1078
        %v1083 = vrot.slane %v1080, 7
        %v1084 = vsel %vm264, %v1083, %v1079
        %v1085 = vrot.slane %v1081, 6
        %v1086 = vsel %vm267, %v1085, %v1084
        %v1087 = vrot.slane %v1082, 5
        %v1088 = vsel %vm270, %v1087, %v1086
        %v1089 = vpack.c.b16 %v1088, %v1088
        %v1091 = vunpack.c.l.s4 1983009808
        %v1092 = vunpack.c.0.s8 %v1091
        %v1093 = vlaneseq
        %v1094 = vshrl.u32 %v1093, 7
        %v1095 = vsub.s32 %v1092, %v1094
        %v1096 = vrot.slane %v1089, %v1095
        %1097 = vrot.lane.b32.xlu0 %v1096, 54
        %v1098 = vpop.permute.xlu0 %1097
        %vm1100 = vcmask 566704
        %1101 = vst.msk [vmem:[#allocation2 + $0x2] sm:$0x3] %vm1100, %v1098
        %v1102 = vld [vmem:[%s166 + $0xa] sm:$0x1]
        %v1103 = vld [vmem:[%s166 + $0x1a] sm:$0x1]
        %v1104 = vld [vmem:[%s166 + $0x2a] sm:$0x1]
        %v1105 = vld [vmem:[%s166 + $0x3a] sm:$0x1]
        %v1106 = vpack.c.bf16 %v1102, %v1102
        %v1107 = vpack.c.bf16 %v1103, %v1103
        %v1108 = vpack.c.bf16 %v1104, %v1104
        %v1109 = vpack.c.bf16 %v1105, %v1105
        %v1115 = vunpack.c.l.s4 1983009808
        %v1116 = vunpack.c.0.s8 %v1115
        %v1117 = vlaneseq
        %v1118 = vshrl.u32 %v1117, 7
        %v1119 = vsub.s32 %v1116, %v1118
        %v1120 = vrot.slane %v1106, %v1119
        %v1122 = vunpack.c.l.s4 1983009808
        %v1123 = vunpack.c.0.s8 %v1122
        %v1124 = vlaneseq
        %v1125 = vshrl.u32 %v1124, 7
        %v1126 = vsub.s32 %v1123, %v1125
        %v1127 = vrot.slane %v1107, %v1126
        %v1129 = vunpack.c.l.s4 1983009808
        %v1130 = vunpack.c.0.s8 %v1129
        %v1131 = vlaneseq
        %v1132 = vshrl.u32 %v1131, 7
        %v1133 = vsub.s32 %v1130, %v1132
        %v1134 = vrot.slane %v1108, %v1133
        %v1136 = vunpack.c.l.s4 1983009808
        %v1137 = vunpack.c.0.s8 %v1136
        %v1138 = vlaneseq
        %v1139 = vshrl.u32 %v1138, 7
        %v1140 = vsub.s32 %v1137, %v1139
        %v1141 = vrot.slane %v1109, %v1140
        %v1143 = vunpack.c.l.s4 1983009808
        %v1144 = vunpack.c.0.s8 %v1143
        %v1145 = vlaneseq
        %v1146 = vshrl.u32 %v1145, 7
        %v1147 = vsub.s32 %v1144, %v1146
        %v1148 = vrot.slane %v1120, %v1147
        %v1150 = vunpack.c.l.s4 1983009808
        %v1151 = vunpack.c.0.s8 %v1150
        %v1152 = vlaneseq
        %v1153 = vshrl.u32 %v1152, 7
        %v1154 = vsub.s32 %v1151, %v1153
        %v1155 = vrot.slane %v1127, %v1154
        %v1157 = vunpack.c.l.s4 1983009808
        %v1158 = vunpack.c.0.s8 %v1157
        %v1159 = vlaneseq
        %v1160 = vshrl.u32 %v1159, 7
        %v1161 = vsub.s32 %v1158, %v1160
        %v1162 = vrot.slane %v1134, %v1161
        %v1164 = vunpack.c.l.s4 1983009808
        %v1165 = vunpack.c.0.s8 %v1164
        %v1166 = vlaneseq
        %v1167 = vshrl.u32 %v1166, 7
        %v1168 = vsub.s32 %v1165, %v1167
        %v1169 = vrot.slane %v1141, %v1168
        %v1170 = vunpack.c.l.b16 %v1148
        %v1171 = vunpack.c.l.b16 %v1155
        %v1172 = vunpack.c.l.b16 %v1162
        %v1173 = vunpack.c.l.b16 %v1169
        %v1174 = vrot.slane %v1171, 7
        %v1175 = vsel %vm264, %v1174, %v1170
        %v1176 = vrot.slane %v1172, 6
        %v1177 = vsel %vm267, %v1176, %v1175
        %v1178 = vrot.slane %v1173, 5
        %v1179 = vsel %vm270, %v1178, %v1177
        %v1180 = vpack.c.b16 %v1179, %v1179
        %v1182 = vunpack.c.l.s4 1983009808
        %v1183 = vunpack.c.0.s8 %v1182
        %v1184 = vlaneseq
        %v1185 = vshrl.u32 %v1184, 7
        %v1186 = vsub.s32 %v1183, %v1185
        %v1187 = vrot.slane %v1180, %v1186
        %1188 = vrot.lane.b32.xlu0 %v1187, 72
        %v1189 = vpop.permute.xlu0 %1188
        %vm1191 = vcmask 714304
        %1192 = vst.msk [vmem:[#allocation2 + $0x2] sm:$0x3] %vm1191, %v1189
        %v1193 = vld [vmem:[%s166 + $0xb] sm:$0x1]
        %v1194 = vld [vmem:[%s166 + $0x1b] sm:$0x1]
        %v1195 = vld [vmem:[%s166 + $0x2b] sm:$0x1]
        %v1196 = vld [vmem:[%s166 + $0x3b] sm:$0x1]
        %v1197 = vpack.c.bf16 %v1193, %v1193
        %v1198 = vpack.c.bf16 %v1194, %v1194
        %v1199 = vpack.c.bf16 %v1195, %v1195
        %v1200 = vpack.c.bf16 %v1196, %v1196
        %v1206 = vunpack.c.l.s4 1983009808
        %v1207 = vunpack.c.0.s8 %v1206
        %v1208 = vlaneseq
        %v1209 = vshrl.u32 %v1208, 7
        %v1210 = vsub.s32 %v1207, %v1209
        %v1211 = vrot.slane %v1197, %v1210
        %v1213 = vunpack.c.l.s4 1983009808
        %v1214 = vunpack.c.0.s8 %v1213
        %v1215 = vlaneseq
        %v1216 = vshrl.u32 %v1215, 7
        %v1217 = vsub.s32 %v1214, %v1216
        %v1218 = vrot.slane %v1198, %v1217
        %v1220 = vunpack.c.l.s4 1983009808
        %v1221 = vunpack.c.0.s8 %v1220
        %v1222 = vlaneseq
        %v1223 = vshrl.u32 %v1222, 7
        %v1224 = vsub.s32 %v1221, %v1223
        %v1225 = vrot.slane %v1199, %v1224
        %v1227 = vunpack.c.l.s4 1983009808
        %v1228 = vunpack.c.0.s8 %v1227
        %v1229 = vlaneseq
        %v1230 = vshrl.u32 %v1229, 7
        %v1231 = vsub.s32 %v1228, %v1230
        %v1232 = vrot.slane %v1200, %v1231
        %v1234 = vunpack.c.l.s4 1983009808
        %v1235 = vunpack.c.0.s8 %v1234
        %v1236 = vlaneseq
        %v1237 = vshrl.u32 %v1236, 7
        %v1238 = vsub.s32 %v1235, %v1237
        %v1239 = vrot.slane %v1211, %v1238
        %v1241 = vunpack.c.l.s4 1983009808
        %v1242 = vunpack.c.0.s8 %v1241
        %v1243 = vlaneseq
        %v1244 = vshrl.u32 %v1243, 7
        %v1245 = vsub.s32 %v1242, %v1244
        %v1246 = vrot.slane %v1218, %v1245
        %v1248 = vunpack.c.l.s4 1983009808
        %v1249 = vunpack.c.0.s8 %v1248
        %v1250 = vlaneseq
        %v1251 = vshrl.u32 %v1250, 7
        %v1252 = vsub.s32 %v1249, %v1251
        %v1253 = vrot.slane %v1225, %v1252
        %v1255 = vunpack.c.l.s4 1983009808
        %v1256 = vunpack.c.0.s8 %v1255
        %v1257 = vlaneseq
        %v1258 = vshrl.u32 %v1257, 7
        %v1259 = vsub.s32 %v1256, %v1258
        %v1260 = vrot.slane %v1232, %v1259
        %v1261 = vunpack.c.l.b16 %v1239
        %v1262 = vunpack.c.l.b16 %v1246
        %v1263 = vunpack.c.l.b16 %v1253
        %v1264 = vunpack.c.l.b16 %v1260
        %v1265 = vrot.slane %v1262, 7
        %v1266 = vsel %vm264, %v1265, %v1261
        %v1267 = vrot.slane %v1263, 6
        %v1268 = vsel %vm267, %v1267, %v1266
        %v1269 = vrot.slane %v1264, 5
        %v1270 = vsel %vm270, %v1269, %v1268
        %v1271 = vpack.c.b16 %v1270, %v1270
        %v1273 = vunpack.c.l.s4 1983009808
        %v1274 = vunpack.c.0.s8 %v1273
        %v1275 = vlaneseq
        %v1276 = vshrl.u32 %v1275, 7
        %v1277 = vsub.s32 %v1274, %v1276
        %v1278 = vrot.slane %v1271, %v1277
        %1279 = vrot.lane.b32.xlu0 %v1278, 90
        %v1280 = vpop.permute.xlu0 %1279
        %vm1282 = vcmask 861904
        %1283 = vst.msk [vmem:[#allocation2 + $0x2] sm:$0x3] %vm1282, %v1280
        %v1284 = vld [vmem:[%s166 + $0xc] sm:$0x1]
        %v1285 = vld [vmem:[%s166 + $0x1c] sm:$0x1]
        %v1286 = vld [vmem:[%s166 + $0x2c] sm:$0x1]
        %v1287 = vld [vmem:[%s166 + $0x3c] sm:$0x1]
        %v1288 = vpack.c.bf16 %v1284, %v1284
        %v1289 = vpack.c.bf16 %v1285, %v1285
        %v1290 = vpack.c.bf16 %v1286, %v1286
        %v1291 = vpack.c.bf16 %v1287, %v1287
        %v1297 = vunpack.c.l.s4 1983009808
        %v1298 = vunpack.c.0.s8 %v1297
        %v1299 = vlaneseq
        %v1300 = vshrl.u32 %v1299, 7
        %v1301 = vsub.s32 %v1298, %v1300
        %v1302 = vrot.slane %v1288, %v1301
        %v1304 = vunpack.c.l.s4 1983009808
        %v1305 = vunpack.c.0.s8 %v1304
        %v1306 = vlaneseq
        %v1307 = vshrl.u32 %v1306, 7
        %v1308 = vsub.s32 %v1305, %v1307
        %v1309 = vrot.slane %v1289, %v1308
        %v1311 = vunpack.c.l.s4 1983009808
        %v1312 = vunpack.c.0.s8 %v1311
        %v1313 = vlaneseq
        %v1314 = vshrl.u32 %v1313, 7
        %v1315 = vsub.s32 %v1312, %v1314
        %v1316 = vrot.slane %v1290, %v1315
        %v1318 = vunpack.c.l.s4 1983009808
        %v1319 = vunpack.c.0.s8 %v1318
        %v1320 = vlaneseq
        %v1321 = vshrl.u32 %v1320, 7
        %v1322 = vsub.s32 %v1319, %v1321
        %v1323 = vrot.slane %v1291, %v1322
        %v1325 = vunpack.c.l.s4 1983009808
        %v1326 = vunpack.c.0.s8 %v1325
        %v1327 = vlaneseq
        %v1328 = vshrl.u32 %v1327, 7
        %v1329 = vsub.s32 %v1326, %v1328
        %v1330 = vrot.slane %v1302, %v1329
        %v1332 = vunpack.c.l.s4 1983009808
        %v1333 = vunpack.c.0.s8 %v1332
        %v1334 = vlaneseq
        %v1335 = vshrl.u32 %v1334, 7
        %v1336 = vsub.s32 %v1333, %v1335
        %v1337 = vrot.slane %v1309, %v1336
        %v1339 = vunpack.c.l.s4 1983009808
        %v1340 = vunpack.c.0.s8 %v1339
        %v1341 = vlaneseq
        %v1342 = vshrl.u32 %v1341, 7
        %v1343 = vsub.s32 %v1340, %v1342
        %v1344 = vrot.slane %v1316, %v1343
        %v1346 = vunpack.c.l.s4 1983009808
        %v1347 = vunpack.c.0.s8 %v1346
        %v1348 = vlaneseq
        %v1349 = vshrl.u32 %v1348, 7
        %v1350 = vsub.s32 %v1347, %v1349
        %v1351 = vrot.slane %v1323, %v1350
        %v1352 = vunpack.c.l.b16 %v1330
        %v1353 = vunpack.c.l.b16 %v1337
        %v1354 = vunpack.c.l.b16 %v1344
        %v1355 = vunpack.c.l.b16 %v1351
        %v1356 = vrot.slane %v1353, 7
        %v1357 = vsel %vm264, %v1356, %v1352
        %v1358 = vrot.slane %v1354, 6
        %v1359 = vsel %vm267, %v1358, %v1357
        %v1360 = vrot.slane %v1355, 5
        %v1361 = vsel %vm270, %v1360, %v1359
        %v1362 = vpack.c.b16 %v1361, %v1361
        %v1364 = vunpack.c.l.s4 1983009808
        %v1365 = vunpack.c.0.s8 %v1364
        %v1366 = vlaneseq
        %v1367 = vshrl.u32 %v1366, 7
        %v1368 = vsub.s32 %v1365, %v1367
        %v1369 = vrot.slane %v1362, %v1368
        %1370 = vrot.lane.b32.xlu0 %v1369, 108
        %v1371 = vpop.permute.xlu0 %1370
        %vm1373 = vcmask 1009504
        %1374 = vst.msk [vmem:[#allocation2 + $0x2] sm:$0x3] %vm1373, %v1371
        %v1375 = vld [vmem:[%s166 + $0xd] sm:$0x1]
        %v1376 = vld [vmem:[%s166 + $0x1d] sm:$0x1]
        %v1377 = vld [vmem:[%s166 + $0x2d] sm:$0x1]
        %v1378 = vld [vmem:[%s166 + $0x3d] sm:$0x1]
        %v1379 = vpack.c.bf16 %v1375, %v1375
        %v1380 = vpack.c.bf16 %v1376, %v1376
        %v1381 = vpack.c.bf16 %v1377, %v1377
        %v1382 = vpack.c.bf16 %v1378, %v1378
        %v1388 = vunpack.c.l.s4 1983009808
        %v1389 = vunpack.c.0.s8 %v1388
        %v1390 = vlaneseq
        %v1391 = vshrl.u32 %v1390, 7
        %v1392 = vsub.s32 %v1389, %v1391
        %v1393 = vrot.slane %v1379, %v1392
        %v1395 = vunpack.c.l.s4 1983009808
        %v1396 = vunpack.c.0.s8 %v1395
        %v1397 = vlaneseq
        %v1398 = vshrl.u32 %v1397, 7
        %v1399 = vsub.s32 %v1396, %v1398
        %v1400 = vrot.slane %v1380, %v1399
        %v1402 = vunpack.c.l.s4 1983009808
        %v1403 = vunpack.c.0.s8 %v1402
        %v1404 = vlaneseq
        %v1405 = vshrl.u32 %v1404, 7
        %v1406 = vsub.s32 %v1403, %v1405
        %v1407 = vrot.slane %v1381, %v1406
        %v1409 = vunpack.c.l.s4 1983009808
        %v1410 = vunpack.c.0.s8 %v1409
        %v1411 = vlaneseq
        %v1412 = vshrl.u32 %v1411, 7
        %v1413 = vsub.s32 %v1410, %v1412
        %v1414 = vrot.slane %v1382, %v1413
        %v1416 = vunpack.c.l.s4 1983009808
        %v1417 = vunpack.c.0.s8 %v1416
        %v1418 = vlaneseq
        %v1419 = vshrl.u32 %v1418, 7
        %v1420 = vsub.s32 %v1417, %v1419
        %v1421 = vrot.slane %v1393, %v1420
        %v1423 = vunpack.c.l.s4 1983009808
        %v1424 = vunpack.c.0.s8 %v1423
        %v1425 = vlaneseq
        %v1426 = vshrl.u32 %v1425, 7
        %v1427 = vsub.s32 %v1424, %v1426
        %v1428 = vrot.slane %v1400, %v1427
        %v1430 = vunpack.c.l.s4 1983009808
        %v1431 = vunpack.c.0.s8 %v1430
        %v1432 = vlaneseq
        %v1433 = vshrl.u32 %v1432, 7
        %v1434 = vsub.s32 %v1431, %v1433
        %v1435 = vrot.slane %v1407, %v1434
        %v1437 = vunpack.c.l.s4 1983009808
        %v1438 = vunpack.c.0.s8 %v1437
        %v1439 = vlaneseq
        %v1440 = vshrl.u32 %v1439, 7
        %v1441 = vsub.s32 %v1438, %v1440
        %v1442 = vrot.slane %v1414, %v1441
        %v1443 = vunpack.c.l.b16 %v1421
        %v1444 = vunpack.c.l.b16 %v1428
        %v1445 = vunpack.c.l.b16 %v1435
        %v1446 = vunpack.c.l.b16 %v1442
        %v1447 = vrot.slane %v1444, 7
        %v1448 = vsel %vm264, %v1447, %v1443
        %v1449 = vrot.slane %v1445, 6
        %v1450 = vsel %vm267, %v1449, %v1448
        %v1451 = vrot.slane %v1446, 5
        %v1452 = vsel %vm270, %v1451, %v1450
        %v1453 = vpack.c.b16 %v1452, %v1452
        %v1455 = vunpack.c.l.s4 1983009808
        %v1456 = vunpack.c.0.s8 %v1455
        %v1457 = vlaneseq
        %v1458 = vshrl.u32 %v1457, 7
        %v1459 = vsub.s32 %v1456, %v1458
        %v1460 = vrot.slane %v1453, %v1459
        %1461 = vrot.lane.b32.xlu0 %v1460, 126
        %v1462 = vpop.permute.xlu0 %1461
        %v1463 = vrot.slane %v1462, 6
        %vm1464 = vcmask 1031168
        %v1465 = vsel %vm1464, %v1463, %v1462
        %vm1467 = vcmask 1042416
        %vm1468 = vcmask 109570
        %vm1469 = vmor %vm1468, %vm1467
        %1470 = vst.msk [vmem:[#allocation2 + $0x2] sm:$0xf] %vm1469, %v1465
        %v1471 = vld [vmem:[%s166 + $0xe] sm:$0x1]
        %v1472 = vld [vmem:[%s166 + $0x1e] sm:$0x1]
        %v1473 = vld [vmem:[%s166 + $0x2e] sm:$0x1]
        %v1474 = vld [vmem:[%s166 + $0x3e] sm:$0x1]
        %v1475 = vpack.c.bf16 %v1471, %v1471
        %v1476 = vpack.c.bf16 %v1472, %v1472
        %v1477 = vpack.c.bf16 %v1473, %v1473
        %v1478 = vpack.c.bf16 %v1474, %v1474
        %v1484 = vunpack.c.l.s4 1983009808
        %v1485 = vunpack.c.0.s8 %v1484
        %v1486 = vlaneseq
        %v1487 = vshrl.u32 %v1486, 7
        %v1488 = vsub.s32 %v1485, %v1487
        %v1489 = vrot.slane %v1475, %v1488
        %v1491 = vunpack.c.l.s4 1983009808
        %v1492 = vunpack.c.0.s8 %v1491
        %v1493 = vlaneseq
        %v1494 = vshrl.u32 %v1493, 7
        %v1495 = vsub.s32 %v1492, %v1494
        %v1496 = vrot.slane %v1476, %v1495
        %v1498 = vunpack.c.l.s4 1983009808
        %v1499 = vunpack.c.0.s8 %v1498
        %v1500 = vlaneseq
        %v1501 = vshrl.u32 %v1500, 7
        %v1502 = vsub.s32 %v1499, %v1501
        %v1503 = vrot.slane %v1477, %v1502
        %v1505 = vunpack.c.l.s4 1983009808
        %v1506 = vunpack.c.0.s8 %v1505
        %v1507 = vlaneseq
        %v1508 = vshrl.u32 %v1507, 7
        %v1509 = vsub.s32 %v1506, %v1508
        %v1510 = vrot.slane %v1478, %v1509
        %v1512 = vunpack.c.l.s4 1983009808
        %v1513 = vunpack.c.0.s8 %v1512
        %v1514 = vlaneseq
        %v1515 = vshrl.u32 %v1514, 7
        %v1516 = vsub.s32 %v1513, %v1515
        %v1517 = vrot.slane %v1489, %v1516
        %v1519 = vunpack.c.l.s4 1983009808
        %v1520 = vunpack.c.0.s8 %v1519
        %v1521 = vlaneseq
        %v1522 = vshrl.u32 %v1521, 7
        %v1523 = vsub.s32 %v1520, %v1522
        %v1524 = vrot.slane %v1496, %v1523
        %v1526 = vunpack.c.l.s4 1983009808
        %v1527 = vunpack.c.0.s8 %v1526
        %v1528 = vlaneseq
        %v1529 = vshrl.u32 %v1528, 7
        %v1530 = vsub.s32 %v1527, %v1529
        %v1531 = vrot.slane %v1503, %v1530
        %v1533 = vunpack.c.l.s4 1983009808
        %v1534 = vunpack.c.0.s8 %v1533
        %v1535 = vlaneseq
        %v1536 = vshrl.u32 %v1535, 7
        %v1537 = vsub.s32 %v1534, %v1536
        %v1538 = vrot.slane %v1510, %v1537
        %v1539 = vunpack.c.l.b16 %v1517
        %v1540 = vunpack.c.l.b16 %v1524
        %v1541 = vunpack.c.l.b16 %v1531
        %v1542 = vunpack.c.l.b16 %v1538
        %v1543 = vrot.slane %v1540, 7
        %v1544 = vsel %vm264, %v1543, %v1539
        %v1545 = vrot.slane %v1541, 6
        %v1546 = vsel %vm267, %v1545, %v1544
        %v1547 = vrot.slane %v1542, 5
        %v1548 = vsel %vm270, %v1547, %v1546
        %v1549 = vpack.c.b16 %v1548, %v1548
        %v1551 = vunpack.c.l.s4 1983009808
        %v1552 = vunpack.c.0.s8 %v1551
        %v1553 = vlaneseq
        %v1554 = vshrl.u32 %v1553, 7
        %v1555 = vsub.s32 %v1552, %v1554
        %v1556 = vrot.slane %v1549, %v1555
        %1557 = vrot.lane.b32.xlu0 %v1556, 16
        %v1558 = vpop.permute.xlu0 %1557
        %vm1560 = vcmask 255104
        %1561 = vst.msk [vmem:[#allocation2 + $0x4] sm:$0x3] %vm1560, %v1558
        %v1562 = vld [vmem:[%s166 + $0xf] sm:$0x1]
        %v1563 = vld [vmem:[%s166 + $0x1f] sm:$0x1]
        %v1564 = vld [vmem:[%s166 + $0x2f] sm:$0x1]
        %v1565 = vld [vmem:[%s166 + $0x3f] sm:$0x1]
        %v1566 = vpack.c.bf16 %v1562, %v1562
        %v1567 = vpack.c.bf16 %v1563, %v1563
        %v1568 = vpack.c.bf16 %v1564, %v1564
        %v1569 = vpack.c.bf16 %v1565, %v1565
        %v1575 = vunpack.c.l.s4 1983009808
        %v1576 = vunpack.c.0.s8 %v1575
        %v1577 = vlaneseq
        %v1578 = vshrl.u32 %v1577, 7
        %v1579 = vsub.s32 %v1576, %v1578
        %v1580 = vrot.slane %v1566, %v1579
        %v1582 = vunpack.c.l.s4 1983009808
        %v1583 = vunpack.c.0.s8 %v1582
        %v1584 = vlaneseq
        %v1585 = vshrl.u32 %v1584, 7
        %v1586 = vsub.s32 %v1583, %v1585
        %v1587 = vrot.slane %v1567, %v1586
        %v1589 = vunpack.c.l.s4 1983009808
        %v1590 = vunpack.c.0.s8 %v1589
        %v1591 = vlaneseq
        %v1592 = vshrl.u32 %v1591, 7
        %v1593 = vsub.s32 %v1590, %v1592
        %v1594 = vrot.slane %v1568, %v1593
        %v1596 = vunpack.c.l.s4 1983009808
        %v1597 = vunpack.c.0.s8 %v1596
        %v1598 = vlaneseq
        %v1599 = vshrl.u32 %v1598, 7
        %v1600 = vsub.s32 %v1597, %v1599
        %v1601 = vrot.slane %v1569, %v1600
        %v1603 = vunpack.c.l.s4 1983009808
        %v1604 = vunpack.c.0.s8 %v1603
        %v1605 = vlaneseq
        %v1606 = vshrl.u32 %v1605, 7
        %v1607 = vsub.s32 %v1604, %v1606
        %v1608 = vrot.slane %v1580, %v1607
        %v1610 = vunpack.c.l.s4 1983009808
        %v1611 = vunpack.c.0.s8 %v1610
        %v1612 = vlaneseq
        %v1613 = vshrl.u32 %v1612, 7
        %v1614 = vsub.s32 %v1611, %v1613
        %v1615 = vrot.slane %v1587, %v1614
        %v1617 = vunpack.c.l.s4 1983009808
        %v1618 = vunpack.c.0.s8 %v1617
        %v1619 = vlaneseq
        %v1620 = vshrl.u32 %v1619, 7
        %v1621 = vsub.s32 %v1618, %v1620
        %v1622 = vrot.slane %v1594, %v1621
        %v1624 = vunpack.c.l.s4 1983009808
        %v1625 = vunpack.c.0.s8 %v1624
        %v1626 = vlaneseq
        %v1627 = vshrl.u32 %v1626, 7
        %v1628 = vsub.s32 %v1625, %v1627
        %v1629 = vrot.slane %v1601, %v1628
        %v1630 = vunpack.c.l.b16 %v1608
        %v1631 = vunpack.c.l.b16 %v1615
        %v1632 = vunpack.c.l.b16 %v1622
        %v1633 = vunpack.c.l.b16 %v1629
        %v1634 = vrot.slane %v1631, 7
        %v1635 = vsel %vm264, %v1634, %v1630
        %v1636 = vrot.slane %v1632, 6
        %v1637 = vsel %vm267, %v1636, %v1635
        %v1638 = vrot.slane %v1633, 5
        %v1639 = vsel %vm270, %v1638, %v1637
        %v1640 = vpack.c.b16 %v1639, %v1639
        %v1642 = vunpack.c.l.s4 1983009808
        %v1643 = vunpack.c.0.s8 %v1642
        %v1644 = vlaneseq
        %v1645 = vshrl.u32 %v1644, 7
        %v1646 = vsub.s32 %v1643, %v1645
        %v1647 = vrot.slane %v1640, %v1646
        %1648 = vrot.lane.b32.xlu0 %v1647, 34
        %v1649 = vpop.permute.xlu0 %1648
        %vm1651 = vcmask 402704
        %1652 = vst.msk [vmem:[#allocation2 + $0x4] sm:$0x3] %vm1651, %v1649
        %v1653 = vld [vmem:[%s1] sm:$0xf]
        %v1654 = vld [vmem:[#allocation2] sm:$0x3f]
        %v1655 = vld [vmem:[#allocation2] sm:$0xff]
        %v1657 = vunpack.c.l.b16 %v1653
        %v1658 = vpack.c.b16 %v1657, %v1657
        %1659 = vrot.lane.b32.xlu0 %v1658, 124
        %v1660 = vpop.permute.xlu0 %1659
        %v1662 = vcombine.high %v1655, %v1655
        %v1664 = vunpack.c.l.s4 1983009808
        %v1665 = vunpack.c.0.s8 %v1664
        %v1666 = vlaneseq
        %v1667 = vshrl.u32 %v1666, 7
        %v1668 = vsub.s32 %v1665, %v1667
        %v1669 = vrot.slane %v1655, %v1668
        %v1671 = vunpack.c.l.s4 1983009808
        %v1672 = vunpack.c.0.s8 %v1671
        %v1673 = vlaneseq
        %v1674 = vshrl.u32 %v1673, 7
        %v1675 = vsub.s32 %v1672, %v1674
        %v1676 = vrot.slane %v1662, %v1675
        %v1677 = vcombine.high %v1669, %v1669
        %v1678 = vcombine.high %v1676, %v1676
        %1679 = vrot.lane.b32.xlu0 %v1669, 127
        %v1680 = vpop.permute.xlu0 %1679
        %1681 = vrot.lane.b32.xlu0 %v1677, 127
        %v1682 = vpop.permute.xlu0 %1681
        %1683 = vrot.lane.b32.xlu0 %v1676, 127
        %v1684 = vpop.permute.xlu0 %1683
        %1685 = vrot.lane.b32.xlu0 %v1678, 127
        %v1686 = vpop.permute.xlu0 %1685
        %vm1687 = vcmask 1039360
        %v1688 = vsel %vm1687, %v1680, %v1682
        %v1689 = vsel %vm1687, %v1682, %v1684
        %v1690 = vsel %vm1687, %v1684, %v1686
        %vm1691 = vcmask 31744
        %v1693 = vsel %vm1691, %v1660, 0
        %vm1695 = vcmask 1041408
        %v1697 = vsel %vm1695, %v1688, 0
        %v1700 = vsel %vm1695, %v1689, 0
        %v1703 = vsel %vm1695, %v1690, 0
        %1705 = vmatprep.subr.bf16.mxu0 0
        %1706 = vmatpush1.bf16.msra.mxu0 0
        %1707 = vmatprep.subr.bf16.mxu0 0
        %1708 = vmatpush1.bf16.msra.mxu0 0
        %1709 = vmatprep.subr.bf16.mxu0 0
        %1710 = vmatpush1.bf16.msra.mxu0 0
        %1711 = vmatprep.subr.bf16.mxu0 0
        %1712 = vmatpush1.bf16.msra.mxu0 0
        %1713 = vmatprep.subr.bf16.mxu0 0
        %1714 = vmatpush1.bf16.msra.mxu0 0
        %1715 = vmatprep.subr.bf16.mxu0 0
        %1716 = vmatpush1.bf16.msra.mxu0 0
        %1717 = vmatprep.subr.bf16.mxu0 0
        %1718 = vmatpush1.bf16.msra.mxu0 0
        %1719 = vmatprep.subr.bf16.mxu0 %v1700
        %1720 = vmatpush1.bf16.msra.mxu0 %v1697
        %1721 = vmatprep.subr.bf16.mxu0 0
        %1722 = vmatpush2.bf16.msra.mxu0 0
        %1723 = vmatprep.subr.bf16.mxu0 0
        %1724 = vmatpush2.bf16.msra.mxu0 0
        %1725 = vmatprep.subr.bf16.mxu0 0
        %1726 = vmatpush2.bf16.msra.mxu0 0
        %1727 = vmatprep.subr.bf16.mxu0 0
        %1728 = vmatpush2.bf16.msra.mxu0 0
        %1729 = vmatprep.subr.bf16.mxu0 0
        %1730 = vmatpush2.bf16.msra.mxu0 0
        %1731 = vmatprep.subr.bf16.mxu0 0
        %1732 = vmatpush2.bf16.msra.mxu0 0
        %1733 = vmatprep.subr.bf16.mxu0 0
        %1734 = vmatpush2.bf16.msra.mxu0 0
        %1735 = vmatprep.subr.bf16.mxu0 0
        %1736 = vmatpush2.bf16.msra.mxu0 0
        %1737 = vmatprep.mubr.bf16.mxu0 0
        %1738 = vmatmul.mubr.bf16.gmra.mxu0 %v1693
        %v1739 = vpop.f32.mrf.mxu0
        %v1740 = vadd.f32 0.0, %v1739
        %v1741 = vpop.f32.mrf.mxu0
        %v1742 = vadd.f32 0.0, %v1741
        %v1743 = vpop.f32.mrf.mxu0
        %v1744 = vpop.f32.mrf.mxu0
        %1745 = vdwg.mxu0
        %1746 = vmatprep.subr.bf16.mxu0 0
        %1747 = vmatpush1.bf16.msra.mxu0 0
        %1748 = vmatprep.subr.bf16.mxu0 0
        %1749 = vmatpush1.bf16.msra.mxu0 0
        %1750 = vmatprep.subr.bf16.mxu0 0
        %1751 = vmatpush1.bf16.msra.mxu0 0
        %1752 = vmatprep.subr.bf16.mxu0 0
        %1753 = vmatpush1.bf16.msra.mxu0 0
        %1754 = vmatprep.subr.bf16.mxu0 0
        %1755 = vmatpush1.bf16.msra.mxu0 0
        %1756 = vmatprep.subr.bf16.mxu0 0
        %1757 = vmatpush1.bf16.msra.mxu0 0
        %1758 = vmatprep.subr.bf16.mxu0 0
        %1759 = vmatpush1.bf16.msra.mxu0 0
        %1760 = vmatprep.subr.bf16.mxu0 0
        %1761 = vmatpush1.bf16.msra.mxu0 %v1703
        %1762 = vmatprep.subr.bf16.mxu0 0
        %1763 = vmatpush2.bf16.msra.mxu0 0
        %1764 = vmatprep.subr.bf16.mxu0 0
        %1765 = vmatpush2.bf16.msra.mxu0 0
        %1766 = vmatprep.subr.bf16.mxu0 0
        %1767 = vmatpush2.bf16.msra.mxu0 0
        %1768 = vmatprep.subr.bf16.mxu0 0
        %1769 = vmatpush2.bf16.msra.mxu0 0
        %1770 = vmatprep.subr.bf16.mxu0 0
        %1771 = vmatpush2.bf16.msra.mxu0 0
        %1772 = vmatprep.subr.bf16.mxu0 0
        %1773 = vmatpush2.bf16.msra.mxu0 0
        %1774 = vmatprep.subr.bf16.mxu0 0
        %1775 = vmatpush2.bf16.msra.mxu0 0
        %1776 = vmatprep.subr.bf16.mxu0 0
        %1777 = vmatpush2.bf16.msra.mxu0 0
        %1778 = vmatprep.mubr.bf16.mxu0 0
        %1779 = vmatmul.mubr.bf16.gmra.mxu0 %v1693
        %v1780 = vpop.f32.mrf.mxu0
        %v1781 = vadd.f32 0.0, %v1780
        %v1782 = vpop.f32.mrf.mxu0
        %v1783 = vpop.f32.mrf.mxu0
        %v1784 = vpop.f32.mrf.mxu0
        %1785 = vdwg.mxu0
        %v1787 = vcombine.high %v1654, %v1654
        %v1789 = vunpack.c.l.s4 1983009808
        %v1790 = vunpack.c.0.s8 %v1789
        %v1791 = vlaneseq
        %v1792 = vshrl.u32 %v1791, 7
        %v1793 = vsub.s32 %v1790, %v1792
        %v1794 = vrot.slane %v1654, %v1793
        %v1796 = vunpack.c.l.s4 1983009808
        %v1797 = vunpack.c.0.s8 %v1796
        %v1798 = vlaneseq
        %v1799 = vshrl.u32 %v1798, 7
        %v1800 = vsub.s32 %v1797, %v1799
        %v1801 = vrot.slane %v1787, %v1800
        %v1802 = vcombine.high %v1794, %v1794
        %v1804 = vsel %vm1691, %v1653, 0
        %v1807 = vsel %vm1695, %v1794, 0
        %v1810 = vsel %vm1695, %v1802, 0
        %v1813 = vsel %vm1695, %v1801, 0
        %1815 = vmatprep.subr.bf16.mxu0 0
        %1816 = vmatpush1.bf16.msra.mxu0 0
        %1817 = vmatprep.subr.bf16.mxu0 0
        %1818 = vmatpush1.bf16.msra.mxu0 0
        %1819 = vmatprep.subr.bf16.mxu0 0
        %1820 = vmatpush1.bf16.msra.mxu0 0
        %1821 = vmatprep.subr.bf16.mxu0 0
        %1822 = vmatpush1.bf16.msra.mxu0 0
        %1823 = vmatprep.subr.bf16.mxu0 0
        %1824 = vmatpush1.bf16.msra.mxu0 0
        %1825 = vmatprep.subr.bf16.mxu0 0
        %1826 = vmatpush1.bf16.msra.mxu0 0
        %1827 = vmatprep.subr.bf16.mxu0 0
        %1828 = vmatpush1.bf16.msra.mxu0 0
        %1829 = vmatprep.subr.bf16.mxu0 %v1810
        %1830 = vmatpush1.bf16.msra.mxu0 %v1807
        %1831 = vmatprep.subr.bf16.mxu0 0
        %1832 = vmatpush2.bf16.msra.mxu0 0
        %1833 = vmatprep.subr.bf16.mxu0 0
        %1834 = vmatpush2.bf16.msra.mxu0 0
        %1835 = vmatprep.subr.bf16.mxu0 0
        %1836 = vmatpush2.bf16.msra.mxu0 0
        %1837 = vmatprep.subr.bf16.mxu0 0
        %1838 = vmatpush2.bf16.msra.mxu0 0
        %1839 = vmatprep.subr.bf16.mxu0 0
        %1840 = vmatpush2.bf16.msra.mxu0 0
        %1841 = vmatprep.subr.bf16.mxu0 0
        %1842 = vmatpush2.bf16.msra.mxu0 0
        %1843 = vmatprep.subr.bf16.mxu0 0
        %1844 = vmatpush2.bf16.msra.mxu0 0
        %1845 = vmatprep.subr.bf16.mxu0 0
        %1846 = vmatpush2.bf16.msra.mxu0 0
        %1847 = vmatprep.mubr.bf16.mxu0 0
        %1848 = vmatmul.mubr.bf16.gmra.mxu0 %v1804
        %v1849 = vpop.f32.mrf.mxu0
        %v1850 = vadd.f32 %v1740, %v1849
        %v1851 = vpop.f32.mrf.mxu0
        %v1852 = vadd.f32 %v1742, %v1851
        %v1853 = vpop.f32.mrf.mxu0
        %v1854 = vpop.f32.mrf.mxu0
        %1855 = vdwg.mxu0
        %1856 = vmatprep.subr.bf16.mxu0 0
        %1857 = vmatpush1.bf16.msra.mxu0 0
        %1858 = vmatprep.subr.bf16.mxu0 0
        %1859 = vmatpush1.bf16.msra.mxu0 0
        %1860 = vmatprep.subr.bf16.mxu0 0
        %1861 = vmatpush1.bf16.msra.mxu0 0
        %1862 = vmatprep.subr.bf16.mxu0 0
        %1863 = vmatpush1.bf16.msra.mxu0 0
        %1864 = vmatprep.subr.bf16.mxu0 0
        %1865 = vmatpush1.bf16.msra.mxu0 0
        %1866 = vmatprep.subr.bf16.mxu0 0
        %1867 = vmatpush1.bf16.msra.mxu0 0
        %1868 = vmatprep.subr.bf16.mxu0 0
        %1869 = vmatpush1.bf16.msra.mxu0 0
        %1870 = vmatprep.subr.bf16.mxu0 0
        %1871 = vmatpush1.bf16.msra.mxu0 %v1813
        %1872 = vmatprep.subr.bf16.mxu0 0
        %1873 = vmatpush2.bf16.msra.mxu0 0
        %1874 = vmatprep.subr.bf16.mxu0 0
        %1875 = vmatpush2.bf16.msra.mxu0 0
        %1876 = vmatprep.subr.bf16.mxu0 0
        %1877 = vmatpush2.bf16.msra.mxu0 0
        %1878 = vmatprep.subr.bf16.mxu0 0
        %1879 = vmatpush2.bf16.msra.mxu0 0
        %1880 = vmatprep.subr.bf16.mxu0 0
        %1881 = vmatpush2.bf16.msra.mxu0 0
        %1882 = vmatprep.subr.bf16.mxu0 0
        %1883 = vmatpush2.bf16.msra.mxu0 0
        %1884 = vmatprep.subr.bf16.mxu0 0
        %1885 = vmatpush2.bf16.msra.mxu0 0
        %1886 = vmatprep.subr.bf16.mxu0 0
        %1887 = vmatpush2.bf16.msra.mxu0 0
        %1888 = vmatprep.mubr.bf16.mxu0 0
        %1889 = vmatmul.mubr.bf16.gmra.mxu0 %v1804
        %v1890 = vpop.f32.mrf.mxu0
        %v1891 = vadd.f32 %v1781, %v1890
        %v1892 = vpop.f32.mrf.mxu0
        %v1893 = vpop.f32.mrf.mxu0
        %v1894 = vpop.f32.mrf.mxu0
        %1895 = vdwg.mxu0
        %v1896 = vld [vmem:[%s1] sm:$0xf]
        %v1897 = vld [vmem:[#allocation2] sm:$0xff]
        %v1899 = vunpack.c.l.b16 %v1896
        %v1900 = vpack.c.b16 %v1899, %v1899
        %1901 = vrot.lane.b32.xlu0 %v1900, 120
        %v1902 = vpop.permute.xlu0 %1901
        %v1904 = vcombine.high %v1897, %v1897
        %v1906 = vunpack.c.l.s4 1983009808
        %v1907 = vunpack.c.0.s8 %v1906
        %v1908 = vlaneseq
        %v1909 = vshrl.u32 %v1908, 7
        %v1910 = vsub.s32 %v1907, %v1909
        %v1911 = vrot.slane %v1897, %v1910
        %v1913 = vunpack.c.l.s4 1983009808
        %v1914 = vunpack.c.0.s8 %v1913
        %v1915 = vlaneseq
        %v1916 = vshrl.u32 %v1915, 7
        %v1917 = vsub.s32 %v1914, %v1916
        %v1918 = vrot.slane %v1904, %v1917
        %v1919 = vcombine.high %v1911, %v1911
        %v1920 = vcombine.high %v1918, %v1918
        %1921 = vrot.lane.b32.xlu0 %v1911, 126
        %v1922 = vpop.permute.xlu0 %1921
        %1923 = vrot.lane.b32.xlu0 %v1919, 126
        %v1924 = vpop.permute.xlu0 %1923
        %1925 = vrot.lane.b32.xlu0 %v1918, 126
        %v1926 = vpop.permute.xlu0 %1925
        %1927 = vrot.lane.b32.xlu0 %v1920, 126
        %v1928 = vpop.permute.xlu0 %1927
        %v1929 = vsel %vm1464, %v1922, %v1924
        %v1930 = vsel %vm1464, %v1924, %v1926
        %v1931 = vsel %vm1464, %v1926, %v1928
        %v1933 = vsel %vm1691, %v1902, 0
        %v1936 = vsel %vm1695, %v1929, 0
        %v1939 = vsel %vm1695, %v1930, 0
        %v1942 = vsel %vm1695, %v1931, 0
        %1944 = vmatprep.subr.bf16.mxu0 0
        %1945 = vmatpush1.bf16.msra.mxu0 0
        %1946 = vmatprep.subr.bf16.mxu0 0
        %1947 = vmatpush1.bf16.msra.mxu0 0
        %1948 = vmatprep.subr.bf16.mxu0 0
        %1949 = vmatpush1.bf16.msra.mxu0 0
        %1950 = vmatprep.subr.bf16.mxu0 0
        %1951 = vmatpush1.bf16.msra.mxu0 0
        %1952 = vmatprep.subr.bf16.mxu0 0
        %1953 = vmatpush1.bf16.msra.mxu0 0
        %1954 = vmatprep.subr.bf16.mxu0 0
        %1955 = vmatpush1.bf16.msra.mxu0 0
        %1956 = vmatprep.subr.bf16.mxu0 0
        %1957 = vmatpush1.bf16.msra.mxu0 0
        %1958 = vmatprep.subr.bf16.mxu0 %v1939
        %1959 = vmatpush1.bf16.msra.mxu0 %v1936
        %1960 = vmatprep.subr.bf16.mxu0 0
        %1961 = vmatpush2.bf16.msra.mxu0 0
        %1962 = vmatprep.subr.bf16.mxu0 0
        %1963 = vmatpush2.bf16.msra.mxu0 0
        %1964 = vmatprep.subr.bf16.mxu0 0
        %1965 = vmatpush2.bf16.msra.mxu0 0
        %1966 = vmatprep.subr.bf16.mxu0 0
        %1967 = vmatpush2.bf16.msra.mxu0 0
        %1968 = vmatprep.subr.bf16.mxu0 0
        %1969 = vmatpush2.bf16.msra.mxu0 0
        %1970 = vmatprep.subr.bf16.mxu0 0
        %1971 = vmatpush2.bf16.msra.mxu0 0
        %1972 = vmatprep.subr.bf16.mxu0 0
        %1973 = vmatpush2.bf16.msra.mxu0 0
        %1974 = vmatprep.subr.bf16.mxu0 0
        %1975 = vmatpush2.bf16.msra.mxu0 0
        %1976 = vmatprep.mubr.bf16.mxu0 0
        %1977 = vmatmul.mubr.bf16.gmra.mxu0 %v1933
        %v1978 = vpop.f32.mrf.mxu0
        %v1979 = vadd.f32 0.0, %v1978
        %v1980 = vpop.f32.mrf.mxu0
        %v1981 = vadd.f32 0.0, %v1980
        %v1982 = vpop.f32.mrf.mxu0
        %v1983 = vpop.f32.mrf.mxu0
        %1984 = vdwg.mxu0
        %1985 = vmatprep.subr.bf16.mxu0 0
        %1986 = vmatpush1.bf16.msra.mxu0 0
        %1987 = vmatprep.subr.bf16.mxu0 0
        %1988 = vmatpush1.bf16.msra.mxu0 0
        %1989 = vmatprep.subr.bf16.mxu0 0
        %1990 = vmatpush1.bf16.msra.mxu0 0
        %1991 = vmatprep.subr.bf16.mxu0 0
        %1992 = vmatpush1.bf16.msra.mxu0 0
        %1993 = vmatprep.subr.bf16.mxu0 0
        %1994 = vmatpush1.bf16.msra.mxu0 0
        %1995 = vmatprep.subr.bf16.mxu0 0
        %1996 = vmatpush1.bf16.msra.mxu0 0
        %1997 = vmatprep.subr.bf16.mxu0 0
        %1998 = vmatpush1.bf16.msra.mxu0 0
        %1999 = vmatprep.subr.bf16.mxu0 0
        %2000 = vmatpush1.bf16.msra.mxu0 %v1942
        %2001 = vmatprep.subr.bf16.mxu0 0
        %2002 = vmatpush2.bf16.msra.mxu0 0
        %2003 = vmatprep.subr.bf16.mxu0 0
        %2004 = vmatpush2.bf16.msra.mxu0 0
        %2005 = vmatprep.subr.bf16.mxu0 0
        %2006 = vmatpush2.bf16.msra.mxu0 0
        %2007 = vmatprep.subr.bf16.mxu0 0
        %2008 = vmatpush2.bf16.msra.mxu0 0
        %2009 = vmatprep.subr.bf16.mxu0 0
        %2010 = vmatpush2.bf16.msra.mxu0 0
        %2011 = vmatprep.subr.bf16.mxu0 0
        %2012 = vmatpush2.bf16.msra.mxu0 0
        %2013 = vmatprep.subr.bf16.mxu0 0
        %2014 = vmatpush2.bf16.msra.mxu0 0
        %2015 = vmatprep.subr.bf16.mxu0 0
        %2016 = vmatpush2.bf16.msra.mxu0 0
        %2017 = vmatprep.mubr.bf16.mxu0 0
        %2018 = vmatmul.mubr.bf16.gmra.mxu0 %v1933
        %v2019 = vpop.f32.mrf.mxu0
        %v2020 = vadd.f32 0.0, %v2019
        %v2021 = vpop.f32.mrf.mxu0
        %v2022 = vpop.f32.mrf.mxu0
        %v2023 = vpop.f32.mrf.mxu0
        %2024 = vdwg.mxu0
        %v2025 = vadd.f32 %v1850, %v1979
        %v2026 = vadd.f32 %v1852, %v1981
        %v2027 = vadd.f32 %v1891, %v2020
        %v2028 = vld [vmem:[%s1] sm:$0xf]
        %v2029 = vld [vmem:[#allocation2] sm:$0xff]
        %v2031 = vunpack.c.l.b16 %v2028
        %v2032 = vpack.c.b16 %v2031, %v2031
        %2033 = vrot.lane.b32.xlu0 %v2032, 116
        %v2034 = vpop.permute.xlu0 %2033
        %v2036 = vcombine.high %v2029, %v2029
        %v2038 = vunpack.c.l.s4 1983009808
        %v2039 = vunpack.c.0.s8 %v2038
        %v2040 = vlaneseq
        %v2041 = vshrl.u32 %v2040, 7
        %v2042 = vsub.s32 %v2039, %v2041
        %v2043 = vrot.slane %v2029, %v2042
        %v2045 = vunpack.c.l.s4 1983009808
        %v2046 = vunpack.c.0.s8 %v2045
        %v2047 = vlaneseq
        %v2048 = vshrl.u32 %v2047, 7
        %v2049 = vsub.s32 %v2046, %v2048
        %v2050 = vrot.slane %v2036, %v2049
        %v2051 = vcombine.high %v2043, %v2043
        %v2052 = vcombine.high %v2050, %v2050
        %2053 = vrot.lane.b32.xlu0 %v2043, 110
        %v2054 = vpop.permute.xlu0 %2053
        %2055 = vrot.lane.b32.xlu0 %v2051, 110
        %v2056 = vpop.permute.xlu0 %2055
        %2057 = vrot.lane.b32.xlu0 %v2050, 110
        %v2058 = vpop.permute.xlu0 %2057
        %2059 = vrot.lane.b32.xlu0 %v2052, 110
        %v2060 = vpop.permute.xlu0 %2059
        %vm2061 = vcmask 900096
        %v2062 = vsel %vm2061, %v2054, %v2056
        %v2063 = vsel %vm2061, %v2056, %v2058
        %v2064 = vsel %vm2061, %v2058, %v2060
        %v2066 = vsel %vm1691, %v2034, 0
        %v2069 = vsel %vm1695, %v2062, 0
        %v2072 = vsel %vm1695, %v2063, 0
        %v2075 = vsel %vm1695, %v2064, 0
        %2077 = vmatprep.subr.bf16.mxu0 0
        %2078 = vmatpush1.bf16.msra.mxu0 0
        %2079 = vmatprep.subr.bf16.mxu0 0
        %2080 = vmatpush1.bf16.msra.mxu0 0
        %2081 = vmatprep.subr.bf16.mxu0 0
        %2082 = vmatpush1.bf16.msra.mxu0 0
        %2083 = vmatprep.subr.bf16.mxu0 0
        %2084 = vmatpush1.bf16.msra.mxu0 0
        %2085 = vmatprep.subr.bf16.mxu0 0
        %2086 = vmatpush1.bf16.msra.mxu0 0
        %2087 = vmatprep.subr.bf16.mxu0 0
        %2088 = vmatpush1.bf16.msra.mxu0 0
        %2089 = vmatprep.subr.bf16.mxu0 0
        %2090 = vmatpush1.bf16.msra.mxu0 0
        %2091 = vmatprep.subr.bf16.mxu0 %v2072
        %2092 = vmatpush1.bf16.msra.mxu0 %v2069
        %2093 = vmatprep.subr.bf16.mxu0 0
        %2094 = vmatpush2.bf16.msra.mxu0 0
        %2095 = vmatprep.subr.bf16.mxu0 0
        %2096 = vmatpush2.bf16.msra.mxu0 0
        %2097 = vmatprep.subr.bf16.mxu0 0
        %2098 = vmatpush2.bf16.msra.mxu0 0
        %2099 = vmatprep.subr.bf16.mxu0 0
        %2100 = vmatpush2.bf16.msra.mxu0 0
        %2101 = vmatprep.subr.bf16.mxu0 0
        %2102 = vmatpush2.bf16.msra.mxu0 0
        %2103 = vmatprep.subr.bf16.mxu0 0
        %2104 = vmatpush2.bf16.msra.mxu0 0
        %2105 = vmatprep.subr.bf16.mxu0 0
        %2106 = vmatpush2.bf16.msra.mxu0 0
        %2107 = vmatprep.subr.bf16.mxu0 0
        %2108 = vmatpush2.bf16.msra.mxu0 0
        %2109 = vmatprep.mubr.bf16.mxu0 0
        %2110 = vmatmul.mubr.bf16.gmra.mxu0 %v2066
        %v2111 = vpop.f32.mrf.mxu0
        %v2112 = vadd.f32 0.0, %v2111
        %v2113 = vpop.f32.mrf.mxu0
        %v2114 = vadd.f32 0.0, %v2113
        %v2115 = vpop.f32.mrf.mxu0
        %v2116 = vpop.f32.mrf.mxu0
        %2117 = vdwg.mxu0
        %2118 = vmatprep.subr.bf16.mxu0 0
        %2119 = vmatpush1.bf16.msra.mxu0 0
        %2120 = vmatprep.subr.bf16.mxu0 0
        %2121 = vmatpush1.bf16.msra.mxu0 0
        %2122 = vmatprep.subr.bf16.mxu0 0
        %2123 = vmatpush1.bf16.msra.mxu0 0
        %2124 = vmatprep.subr.bf16.mxu0 0
        %2125 = vmatpush1.bf16.msra.mxu0 0
        %2126 = vmatprep.subr.bf16.mxu0 0
        %2127 = vmatpush1.bf16.msra.mxu0 0
        %2128 = vmatprep.subr.bf16.mxu0 0
        %2129 = vmatpush1.bf16.msra.mxu0 0
        %2130 = vmatprep.subr.bf16.mxu0 0
        %2131 = vmatpush1.bf16.msra.mxu0 0
        %2132 = vmatprep.subr.bf16.mxu0 0
        %2133 = vmatpush1.bf16.msra.mxu0 %v2075
        %2134 = vmatprep.subr.bf16.mxu0 0
        %2135 = vmatpush2.bf16.msra.mxu0 0
        %2136 = vmatprep.subr.bf16.mxu0 0
        %2137 = vmatpush2.bf16.msra.mxu0 0
        %2138 = vmatprep.subr.bf16.mxu0 0
        %2139 = vmatpush2.bf16.msra.mxu0 0
        %2140 = vmatprep.subr.bf16.mxu0 0
        %2141 = vmatpush2.bf16.msra.mxu0 0
        %2142 = vmatprep.subr.bf16.mxu0 0
        %2143 = vmatpush2.bf16.msra.mxu0 0
        %2144 = vmatprep.subr.bf16.mxu0 0
        %2145 = vmatpush2.bf16.msra.mxu0 0
        %2146 = vmatprep.subr.bf16.mxu0 0
        %2147 = vmatpush2.bf16.msra.mxu0 0
        %2148 = vmatprep.subr.bf16.mxu0 0
        %2149 = vmatpush2.bf16.msra.mxu0 0
        %2150 = vmatprep.mubr.bf16.mxu0 0
        %2151 = vmatmul.mubr.bf16.gmra.mxu0 %v2066
        %v2152 = vpop.f32.mrf.mxu0
        %v2153 = vadd.f32 0.0, %v2152
        %v2154 = vpop.f32.mrf.mxu0
        %v2155 = vpop.f32.mrf.mxu0
        %v2156 = vpop.f32.mrf.mxu0
        %2157 = vdwg.mxu0
        %v2158 = vadd.f32 %v2025, %v2112
        %v2159 = vadd.f32 %v2026, %v2114
        %v2160 = vadd.f32 %v2027, %v2153
        %v2161 = vld [vmem:[%s1] sm:$0xf]
        %v2162 = vld [vmem:[#allocation2] sm:$0xff]
        %v2164 = vunpack.c.l.b16 %v2161
        %v2165 = vpack.c.b16 %v2164, %v2164
        %2166 = vrot.lane.b32.xlu0 %v2165, 112
        %v2167 = vpop.permute.xlu0 %2166
        %v2169 = vcombine.high %v2162, %v2162
        %v2171 = vunpack.c.l.s4 1983009808
        %v2172 = vunpack.c.0.s8 %v2171
        %v2173 = vlaneseq
        %v2174 = vshrl.u32 %v2173, 7
        %v2175 = vsub.s32 %v2172, %v2174
        %v2176 = vrot.slane %v2162, %v2175
        %v2178 = vunpack.c.l.s4 1983009808
        %v2179 = vunpack.c.0.s8 %v2178
        %v2180 = vlaneseq
        %v2181 = vshrl.u32 %v2180, 7
        %v2182 = vsub.s32 %v2179, %v2181
        %v2183 = vrot.slane %v2169, %v2182
        %v2184 = vcombine.high %v2176, %v2176
        %v2185 = vcombine.high %v2183, %v2183
        %2186 = vrot.lane.b32.xlu0 %v2176, 109
        %v2187 = vpop.permute.xlu0 %2186
        %2188 = vrot.lane.b32.xlu0 %v2184, 109
        %v2189 = vpop.permute.xlu0 %2188
        %2190 = vrot.lane.b32.xlu0 %v2183, 109
        %v2191 = vpop.permute.xlu0 %2190
        %2192 = vrot.lane.b32.xlu0 %v2185, 109
        %v2193 = vpop.permute.xlu0 %2192
        %vm2194 = vcmask 891904
        %v2195 = vsel %vm2194, %v2187, %v2189
        %v2196 = vsel %vm2194, %v2189, %v2191
        %v2197 = vsel %vm2194, %v2191, %v2193
        %v2199 = vsel %vm1691, %v2167, 0
        %v2202 = vsel %vm1695, %v2195, 0
        %v2205 = vsel %vm1695, %v2196, 0
        %v2208 = vsel %vm1695, %v2197, 0
        %2210 = vmatprep.subr.bf16.mxu0 0
        %2211 = vmatpush1.bf16.msra.mxu0 0
        %2212 = vmatprep.subr.bf16.mxu0 0
        %2213 = vmatpush1.bf16.msra.mxu0 0
        %2214 = vmatprep.subr.bf16.mxu0 0
        %2215 = vmatpush1.bf16.msra.mxu0 0
        %2216 = vmatprep.subr.bf16.mxu0 0
        %2217 = vmatpush1.bf16.msra.mxu0 0
        %2218 = vmatprep.subr.bf16.mxu0 0
        %2219 = vmatpush1.bf16.msra.mxu0 0
        %2220 = vmatprep.subr.bf16.mxu0 0
        %2221 = vmatpush1.bf16.msra.mxu0 0
        %2222 = vmatprep.subr.bf16.mxu0 0
        %2223 = vmatpush1.bf16.msra.mxu0 0
        %2224 = vmatprep.subr.bf16.mxu0 %v2205
        %2225 = vmatpush1.bf16.msra.mxu0 %v2202
        %2226 = vmatprep.subr.bf16.mxu0 0
        %2227 = vmatpush2.bf16.msra.mxu0 0
        %2228 = vmatprep.subr.bf16.mxu0 0
        %2229 = vmatpush2.bf16.msra.mxu0 0
        %2230 = vmatprep.subr.bf16.mxu0 0
        %2231 = vmatpush2.bf16.msra.mxu0 0
        %2232 = vmatprep.subr.bf16.mxu0 0
        %2233 = vmatpush2.bf16.msra.mxu0 0
        %2234 = vmatprep.subr.bf16.mxu0 0
        %2235 = vmatpush2.bf16.msra.mxu0 0
        %2236 = vmatprep.subr.bf16.mxu0 0
        %2237 = vmatpush2.bf16.msra.mxu0 0
        %2238 = vmatprep.subr.bf16.mxu0 0
        %2239 = vmatpush2.bf16.msra.mxu0 0
        %2240 = vmatprep.subr.bf16.mxu0 0
        %2241 = vmatpush2.bf16.msra.mxu0 0
        %2242 = vmatprep.mubr.bf16.mxu0 0
        %2243 = vmatmul.mubr.bf16.gmra.mxu0 %v2199
        %v2244 = vpop.f32.mrf.mxu0
        %v2245 = vadd.f32 0.0, %v2244
        %v2246 = vpop.f32.mrf.mxu0
        %v2247 = vadd.f32 0.0, %v2246
        %v2248 = vpop.f32.mrf.mxu0
        %v2249 = vpop.f32.mrf.mxu0
        %2250 = vdwg.mxu0
        %2251 = vmatprep.subr.bf16.mxu0 0
        %2252 = vmatpush1.bf16.msra.mxu0 0
        %2253 = vmatprep.subr.bf16.mxu0 0
        %2254 = vmatpush1.bf16.msra.mxu0 0
        %2255 = vmatprep.subr.bf16.mxu0 0
        %2256 = vmatpush1.bf16.msra.mxu0 0
        %2257 = vmatprep.subr.bf16.mxu0 0
        %2258 = vmatpush1.bf16.msra.mxu0 0
        %2259 = vmatprep.subr.bf16.mxu0 0
        %2260 = vmatpush1.bf16.msra.mxu0 0
        %2261 = vmatprep.subr.bf16.mxu0 0
        %2262 = vmatpush1.bf16.msra.mxu0 0
        %2263 = vmatprep.subr.bf16.mxu0 0
        %2264 = vmatpush1.bf16.msra.mxu0 0
        %2265 = vmatprep.subr.bf16.mxu0 0
        %2266 = vmatpush1.bf16.msra.mxu0 %v2208
        %2267 = vmatprep.subr.bf16.mxu0 0
        %2268 = vmatpush2.bf16.msra.mxu0 0
        %2269 = vmatprep.subr.bf16.mxu0 0
        %2270 = vmatpush2.bf16.msra.mxu0 0
        %2271 = vmatprep.subr.bf16.mxu0 0
        %2272 = vmatpush2.bf16.msra.mxu0 0
        %2273 = vmatprep.subr.bf16.mxu0 0
        %2274 = vmatpush2.bf16.msra.mxu0 0
        %2275 = vmatprep.subr.bf16.mxu0 0
        %2276 = vmatpush2.bf16.msra.mxu0 0
        %2277 = vmatprep.subr.bf16.mxu0 0
        %2278 = vmatpush2.bf16.msra.mxu0 0
        %2279 = vmatprep.subr.bf16.mxu0 0
        %2280 = vmatpush2.bf16.msra.mxu0 0
        %2281 = vmatprep.subr.bf16.mxu0 0
        %2282 = vmatpush2.bf16.msra.mxu0 0
        %2283 = vmatprep.mubr.bf16.mxu0 0
        %2284 = vmatmul.mubr.bf16.gmra.mxu0 %v2199
        %v2285 = vpop.f32.mrf.mxu0
        %v2286 = vadd.f32 0.0, %v2285
        %v2287 = vpop.f32.mrf.mxu0
        %v2288 = vpop.f32.mrf.mxu0
        %v2289 = vpop.f32.mrf.mxu0
        %2290 = vdwg.mxu0
        %v2291 = vadd.f32 %v2158, %v2245
        %v2292 = vadd.f32 %v2159, %v2247
        %v2293 = vadd.f32 %v2160, %v2286
        %v2294 = vld [vmem:[%s1] sm:$0xf]
        %v2295 = vld [vmem:[#allocation2] sm:$0xff]
        %v2297 = vunpack.c.l.b16 %v2294
        %v2298 = vpack.c.b16 %v2297, %v2297
        %2299 = vrot.lane.b32.xlu0 %v2298, 108
        %v2300 = vpop.permute.xlu0 %2299
        %v2302 = vcombine.high %v2295, %v2295
        %v2304 = vunpack.c.l.s4 1983009808
        %v2305 = vunpack.c.0.s8 %v2304
        %v2306 = vlaneseq
        %v2307 = vshrl.u32 %v2306, 7
        %v2308 = vsub.s32 %v2305, %v2307
        %v2309 = vrot.slane %v2295, %v2308
        %v2311 = vunpack.c.l.s4 1983009808
        %v2312 = vunpack.c.0.s8 %v2311
        %v2313 = vlaneseq
        %v2314 = vshrl.u32 %v2313, 7
        %v2315 = vsub.s32 %v2312, %v2314
        %v2316 = vrot.slane %v2302, %v2315
        %v2317 = vcombine.high %v2309, %v2309
        %v2318 = vcombine.high %v2316, %v2316
        %2319 = vrot.lane.b32.xlu0 %v2309, 108
        %v2320 = vpop.permute.xlu0 %2319
        %2321 = vrot.lane.b32.xlu0 %v2317, 108
        %v2322 = vpop.permute.xlu0 %2321
        %2323 = vrot.lane.b32.xlu0 %v2316, 108
        %v2324 = vpop.permute.xlu0 %2323
        %2325 = vrot.lane.b32.xlu0 %v2318, 108
        %v2326 = vpop.permute.xlu0 %2325
        %vm2327 = vcmask 883712
        %v2328 = vsel %vm2327, %v2320, %v2322
        %v2329 = vsel %vm2327, %v2322, %v2324
        %v2330 = vsel %vm2327, %v2324, %v2326
        %v2332 = vsel %vm1691, %v2300, 0
        %v2335 = vsel %vm1695, %v2328, 0
        %v2338 = vsel %vm1695, %v2329, 0
        %v2341 = vsel %vm1695, %v2330, 0
        %2343 = vmatprep.subr.bf16.mxu0 0
        %2344 = vmatpush1.bf16.msra.mxu0 0
        %2345 = vmatprep.subr.bf16.mxu0 0
        %2346 = vmatpush1.bf16.msra.mxu0 0
        %2347 = vmatprep.subr.bf16.mxu0 0
        %2348 = vmatpush1.bf16.msra.mxu0 0
        %2349 = vmatprep.subr.bf16.mxu0 0
        %2350 = vmatpush1.bf16.msra.mxu0 0
        %2351 = vmatprep.subr.bf16.mxu0 0
        %2352 = vmatpush1.bf16.msra.mxu0 0
        %2353 = vmatprep.subr.bf16.mxu0 0
        %2354 = vmatpush1.bf16.msra.mxu0 0
        %2355 = vmatprep.subr.bf16.mxu0 0
        %2356 = vmatpush1.bf16.msra.mxu0 0
        %2357 = vmatprep.subr.bf16.mxu0 %v2338
        %2358 = vmatpush1.bf16.msra.mxu0 %v2335
        %2359 = vmatprep.subr.bf16.mxu0 0
        %2360 = vmatpush2.bf16.msra.mxu0 0
        %2361 = vmatprep.subr.bf16.mxu0 0
        %2362 = vmatpush2.bf16.msra.mxu0 0
        %2363 = vmatprep.subr.bf16.mxu0 0
        %2364 = vmatpush2.bf16.msra.mxu0 0
        %2365 = vmatprep.subr.bf16.mxu0 0
        %2366 = vmatpush2.bf16.msra.mxu0 0
        %2367 = vmatprep.subr.bf16.mxu0 0
        %2368 = vmatpush2.bf16.msra.mxu0 0
        %2369 = vmatprep.subr.bf16.mxu0 0
        %2370 = vmatpush2.bf16.msra.mxu0 0
        %2371 = vmatprep.subr.bf16.mxu0 0
        %2372 = vmatpush2.bf16.msra.mxu0 0
        %2373 = vmatprep.subr.bf16.mxu0 0
        %2374 = vmatpush2.bf16.msra.mxu0 0
        %2375 = vmatprep.mubr.bf16.mxu0 0
        %2376 = vmatmul.mubr.bf16.gmra.mxu0 %v2332
        %v2377 = vpop.f32.mrf.mxu0
        %v2378 = vadd.f32 0.0, %v2377
        %v2379 = vpop.f32.mrf.mxu0
        %v2380 = vadd.f32 0.0, %v2379
        %v2381 = vpop.f32.mrf.mxu0
        %v2382 = vpop.f32.mrf.mxu0
        %2383 = vdwg.mxu0
        %2384 = vmatprep.subr.bf16.mxu0 0
        %2385 = vmatpush1.bf16.msra.mxu0 0
        %2386 = vmatprep.subr.bf16.mxu0 0
        %2387 = vmatpush1.bf16.msra.mxu0 0
        %2388 = vmatprep.subr.bf16.mxu0 0
        %2389 = vmatpush1.bf16.msra.mxu0 0
        %2390 = vmatprep.subr.bf16.mxu0 0
        %2391 = vmatpush1.bf16.msra.mxu0 0
        %2392 = vmatprep.subr.bf16.mxu0 0
        %2393 = vmatpush1.bf16.msra.mxu0 0
        %2394 = vmatprep.subr.bf16.mxu0 0
        %2395 = vmatpush1.bf16.msra.mxu0 0
        %2396 = vmatprep.subr.bf16.mxu0 0
        %2397 = vmatpush1.bf16.msra.mxu0 0
        %2398 = vmatprep.subr.bf16.mxu0 0
        %2399 = vmatpush1.bf16.msra.mxu0 %v2341
        %2400 = vmatprep.subr.bf16.mxu0 0
        %2401 = vmatpush2.bf16.msra.mxu0 0
        %2402 = vmatprep.subr.bf16.mxu0 0
        %2403 = vmatpush2.bf16.msra.mxu0 0
        %2404 = vmatprep.subr.bf16.mxu0 0
        %2405 = vmatpush2.bf16.msra.mxu0 0
        %2406 = vmatprep.subr.bf16.mxu0 0
        %2407 = vmatpush2.bf16.msra.mxu0 0
        %2408 = vmatprep.subr.bf16.mxu0 0
        %2409 = vmatpush2.bf16.msra.mxu0 0
        %2410 = vmatprep.subr.bf16.mxu0 0
        %2411 = vmatpush2.bf16.msra.mxu0 0
        %2412 = vmatprep.subr.bf16.mxu0 0
        %2413 = vmatpush2.bf16.msra.mxu0 0
        %2414 = vmatprep.subr.bf16.mxu0 0
        %2415 = vmatpush2.bf16.msra.mxu0 0
        %2416 = vmatprep.mubr.bf16.mxu0 0
        %2417 = vmatmul.mubr.bf16.gmra.mxu0 %v2332
        %v2418 = vpop.f32.mrf.mxu0
        %v2419 = vadd.f32 0.0, %v2418
        %v2420 = vpop.f32.mrf.mxu0
        %v2421 = vpop.f32.mrf.mxu0
        %v2422 = vpop.f32.mrf.mxu0
        %2423 = vdwg.mxu0
        %v2424 = vadd.f32 %v2291, %v2378
        %v2425 = vadd.f32 %v2292, %v2380
        %v2426 = vadd.f32 %v2293, %v2419
        %v2427 = vld [vmem:[%s1] sm:$0xf]
        %v2428 = vld [vmem:[#allocation2] sm:$0xff]
        %v2430 = vunpack.c.l.b16 %v2427
        %v2431 = vpack.c.b16 %v2430, %v2430
        %2432 = vrot.lane.b32.xlu0 %v2431, 104
        %v2433 = vpop.permute.xlu0 %2432
        %v2435 = vcombine.high %v2428, %v2428
        %v2437 = vunpack.c.l.s4 1983009808
        %v2438 = vunpack.c.0.s8 %v2437
        %v2439 = vlaneseq
        %v2440 = vshrl.u32 %v2439, 7
        %v2441 = vsub.s32 %v2438, %v2440
        %v2442 = vrot.slane %v2428, %v2441
        %v2444 = vunpack.c.l.s4 1983009808
        %v2445 = vunpack.c.0.s8 %v2444
        %v2446 = vlaneseq
        %v2447 = vshrl.u32 %v2446, 7
        %v2448 = vsub.s32 %v2445, %v2447
        %v2449 = vrot.slane %v2435, %v2448
        %v2450 = vcombine.high %v2442, %v2442
        %v2451 = vcombine.high %v2449, %v2449
        %2452 = vrot.lane.b32.xlu0 %v2442, 92
        %v2453 = vpop.permute.xlu0 %2452
        %2454 = vrot.lane.b32.xlu0 %v2450, 92
        %v2455 = vpop.permute.xlu0 %2454
        %2456 = vrot.lane.b32.xlu0 %v2449, 92
        %v2457 = vpop.permute.xlu0 %2456
        %2458 = vrot.lane.b32.xlu0 %v2451, 92
        %v2459 = vpop.permute.xlu0 %2458
        %vm2460 = vcmask 752640
        %v2461 = vsel %vm2460, %v2453, %v2455
        %v2462 = vsel %vm2460, %v2455, %v2457
        %v2463 = vsel %vm2460, %v2457, %v2459
        %v2465 = vsel %vm1691, %v2433, 0
        %v2468 = vsel %vm1695, %v2461, 0
        %v2471 = vsel %vm1695, %v2462, 0
        %v2474 = vsel %vm1695, %v2463, 0
        %2476 = vmatprep.subr.bf16.mxu0 0
        %2477 = vmatpush1.bf16.msra.mxu0 0
        %2478 = vmatprep.subr.bf16.mxu0 0
        %2479 = vmatpush1.bf16.msra.mxu0 0
        %2480 = vmatprep.subr.bf16.mxu0 0
        %2481 = vmatpush1.bf16.msra.mxu0 0
        %2482 = vmatprep.subr.bf16.mxu0 0
        %2483 = vmatpush1.bf16.msra.mxu0 0
        %2484 = vmatprep.subr.bf16.mxu0 0
        %2485 = vmatpush1.bf16.msra.mxu0 0
        %2486 = vmatprep.subr.bf16.mxu0 0
        %2487 = vmatpush1.bf16.msra.mxu0 0
        %2488 = vmatprep.subr.bf16.mxu0 0
        %2489 = vmatpush1.bf16.msra.mxu0 0
        %2490 = vmatprep.subr.bf16.mxu0 %v2471
        %2491 = vmatpush1.bf16.msra.mxu0 %v2468
        %2492 = vmatprep.subr.bf16.mxu0 0
        %2493 = vmatpush2.bf16.msra.mxu0 0
        %2494 = vmatprep.subr.bf16.mxu0 0
        %2495 = vmatpush2.bf16.msra.mxu0 0
        %2496 = vmatprep.subr.bf16.mxu0 0
        %2497 = vmatpush2.bf16.msra.mxu0 0
        %2498 = vmatprep.subr.bf16.mxu0 0
        %2499 = vmatpush2.bf16.msra.mxu0 0
        %2500 = vmatprep.subr.bf16.mxu0 0
        %2501 = vmatpush2.bf16.msra.mxu0 0
        %2502 = vmatprep.subr.bf16.mxu0 0
        %2503 = vmatpush2.bf16.msra.mxu0 0
        %2504 = vmatprep.subr.bf16.mxu0 0
        %2505 = vmatpush2.bf16.msra.mxu0 0
        %2506 = vmatprep.subr.bf16.mxu0 0
        %2507 = vmatpush2.bf16.msra.mxu0 0
        %2508 = vmatprep.mubr.bf16.mxu0 0
        %2509 = vmatmul.mubr.bf16.gmra.mxu0 %v2465
        %v2510 = vpop.f32.mrf.mxu0
        %v2511 = vadd.f32 0.0, %v2510
        %v2512 = vpop.f32.mrf.mxu0
        %v2513 = vadd.f32 0.0, %v2512
        %v2514 = vpop.f32.mrf.mxu0
        %v2515 = vpop.f32.mrf.mxu0
        %2516 = vdwg.mxu0
        %2517 = vmatprep.subr.bf16.mxu0 0
        %2518 = vmatpush1.bf16.msra.mxu0 0
        %2519 = vmatprep.subr.bf16.mxu0 0
        %2520 = vmatpush1.bf16.msra.mxu0 0
        %2521 = vmatprep.subr.bf16.mxu0 0
        %2522 = vmatpush1.bf16.msra.mxu0 0
        %2523 = vmatprep.subr.bf16.mxu0 0
        %2524 = vmatpush1.bf16.msra.mxu0 0
        %2525 = vmatprep.subr.bf16.mxu0 0
        %2526 = vmatpush1.bf16.msra.mxu0 0
        %2527 = vmatprep.subr.bf16.mxu0 0
        %2528 = vmatpush1.bf16.msra.mxu0 0
        %2529 = vmatprep.subr.bf16.mxu0 0
        %2530 = vmatpush1.bf16.msra.mxu0 0
        %2531 = vmatprep.subr.bf16.mxu0 0
        %2532 = vmatpush1.bf16.msra.mxu0 %v2474
        %2533 = vmatprep.subr.bf16.mxu0 0
        %2534 = vmatpush2.bf16.msra.mxu0 0
        %2535 = vmatprep.subr.bf16.mxu0 0
        %2536 = vmatpush2.bf16.msra.mxu0 0
        %2537 = vmatprep.subr.bf16.mxu0 0
        %2538 = vmatpush2.bf16.msra.mxu0 0
        %2539 = vmatprep.subr.bf16.mxu0 0
        %2540 = vmatpush2.bf16.msra.mxu0 0
        %2541 = vmatprep.subr.bf16.mxu0 0
        %2542 = vmatpush2.bf16.msra.mxu0 0
        %2543 = vmatprep.subr.bf16.mxu0 0
        %2544 = vmatpush2.bf16.msra.mxu0 0
        %2545 = vmatprep.subr.bf16.mxu0 0
        %2546 = vmatpush2.bf16.msra.mxu0 0
        %2547 = vmatprep.subr.bf16.mxu0 0
        %2548 = vmatpush2.bf16.msra.mxu0 0
        %2549 = vmatprep.mubr.bf16.mxu0 0
        %2550 = vmatmul.mubr.bf16.gmra.mxu0 %v2465
        %v2551 = vpop.f32.mrf.mxu0
        %v2552 = vadd.f32 0.0, %v2551
        %v2553 = vpop.f32.mrf.mxu0
        %v2554 = vpop.f32.mrf.mxu0
        %v2555 = vpop.f32.mrf.mxu0
        %2556 = vdwg.mxu0
        %v2557 = vadd.f32 %v2424, %v2511
        %v2558 = vadd.f32 %v2425, %v2513
        %v2559 = vadd.f32 %v2426, %v2552
        %v2560 = vld [vmem:[%s1] sm:$0xf]
        %v2561 = vld [vmem:[#allocation2] sm:$0xff]
        %v2563 = vunpack.c.l.b16 %v2560
        %v2564 = vpack.c.b16 %v2563, %v2563
        %2565 = vrot.lane.b32.xlu0 %v2564, 100
        %v2566 = vpop.permute.xlu0 %2565
        %v2568 = vcombine.high %v2561, %v2561
        %v2570 = vunpack.c.l.s4 1983009808
        %v2571 = vunpack.c.0.s8 %v2570
        %v2572 = vlaneseq
        %v2573 = vshrl.u32 %v2572, 7
        %v2574 = vsub.s32 %v2571, %v2573
        %v2575 = vrot.slane %v2561, %v2574
        %v2577 = vunpack.c.l.s4 1983009808
        %v2578 = vunpack.c.0.s8 %v2577
        %v2579 = vlaneseq
        %v2580 = vshrl.u32 %v2579, 7
        %v2581 = vsub.s32 %v2578, %v2580
        %v2582 = vrot.slane %v2568, %v2581
        %v2583 = vcombine.high %v2575, %v2575
        %v2584 = vcombine.high %v2582, %v2582
        %2585 = vrot.lane.b32.xlu0 %v2575, 91
        %v2586 = vpop.permute.xlu0 %2585
        %2587 = vrot.lane.b32.xlu0 %v2583, 91
        %v2588 = vpop.permute.xlu0 %2587
        %2589 = vrot.lane.b32.xlu0 %v2582, 91
        %v2590 = vpop.permute.xlu0 %2589
        %2591 = vrot.lane.b32.xlu0 %v2584, 91
        %v2592 = vpop.permute.xlu0 %2591
        %vm2593 = vcmask 744448
        %v2594 = vsel %vm2593, %v2586, %v2588
        %v2595 = vsel %vm2593, %v2588, %v2590
        %v2596 = vsel %vm2593, %v2590, %v2592
        %v2598 = vsel %vm1691, %v2566, 0
        %v2601 = vsel %vm1695, %v2594, 0
        %v2604 = vsel %vm1695, %v2595, 0
        %v2607 = vsel %vm1695, %v2596, 0
        %2609 = vmatprep.subr.bf16.mxu0 0
        %2610 = vmatpush1.bf16.msra.mxu0 0
        %2611 = vmatprep.subr.bf16.mxu0 0
        %2612 = vmatpush1.bf16.msra.mxu0 0
        %2613 = vmatprep.subr.bf16.mxu0 0
        %2614 = vmatpush1.bf16.msra.mxu0 0
        %2615 = vmatprep.subr.bf16.mxu0 0
        %2616 = vmatpush1.bf16.msra.mxu0 0
        %2617 = vmatprep.subr.bf16.mxu0 0
        %2618 = vmatpush1.bf16.msra.mxu0 0
        %2619 = vmatprep.subr.bf16.mxu0 0
        %2620 = vmatpush1.bf16.msra.mxu0 0
        %2621 = vmatprep.subr.bf16.mxu0 0
        %2622 = vmatpush1.bf16.msra.mxu0 0
        %2623 = vmatprep.subr.bf16.mxu0 %v2604
        %2624 = vmatpush1.bf16.msra.mxu0 %v2601
        %2625 = vmatprep.subr.bf16.mxu0 0
        %2626 = vmatpush2.bf16.msra.mxu0 0
        %2627 = vmatprep.subr.bf16.mxu0 0
        %2628 = vmatpush2.bf16.msra.mxu0 0
        %2629 = vmatprep.subr.bf16.mxu0 0
        %2630 = vmatpush2.bf16.msra.mxu0 0
        %2631 = vmatprep.subr.bf16.mxu0 0
        %2632 = vmatpush2.bf16.msra.mxu0 0
        %2633 = vmatprep.subr.bf16.mxu0 0
        %2634 = vmatpush2.bf16.msra.mxu0 0
        %2635 = vmatprep.subr.bf16.mxu0 0
        %2636 = vmatpush2.bf16.msra.mxu0 0
        %2637 = vmatprep.subr.bf16.mxu0 0
        %2638 = vmatpush2.bf16.msra.mxu0 0
        %2639 = vmatprep.subr.bf16.mxu0 0
        %2640 = vmatpush2.bf16.msra.mxu0 0
        %2641 = vmatprep.mubr.bf16.mxu0 0
        %2642 = vmatmul.mubr.bf16.gmra.mxu0 %v2598
        %v2643 = vpop.f32.mrf.mxu0
        %v2644 = vadd.f32 0.0, %v2643
        %v2645 = vpop.f32.mrf.mxu0
        %v2646 = vadd.f32 0.0, %v2645
        %v2647 = vpop.f32.mrf.mxu0
        %v2648 = vpop.f32.mrf.mxu0
        %2649 = vdwg.mxu0
        %2650 = vmatprep.subr.bf16.mxu0 0
        %2651 = vmatpush1.bf16.msra.mxu0 0
        %2652 = vmatprep.subr.bf16.mxu0 0
        %2653 = vmatpush1.bf16.msra.mxu0 0
        %2654 = vmatprep.subr.bf16.mxu0 0
        %2655 = vmatpush1.bf16.msra.mxu0 0
        %2656 = vmatprep.subr.bf16.mxu0 0
        %2657 = vmatpush1.bf16.msra.mxu0 0
        %2658 = vmatprep.subr.bf16.mxu0 0
        %2659 = vmatpush1.bf16.msra.mxu0 0
        %2660 = vmatprep.subr.bf16.mxu0 0
        %2661 = vmatpush1.bf16.msra.mxu0 0
        %2662 = vmatprep.subr.bf16.mxu0 0
        %2663 = vmatpush1.bf16.msra.mxu0 0
        %2664 = vmatprep.subr.bf16.mxu0 0
        %2665 = vmatpush1.bf16.msra.mxu0 %v2607
        %2666 = vmatprep.subr.bf16.mxu0 0
        %2667 = vmatpush2.bf16.msra.mxu0 0
        %2668 = vmatprep.subr.bf16.mxu0 0
        %2669 = vmatpush2.bf16.msra.mxu0 0
        %2670 = vmatprep.subr.bf16.mxu0 0
        %2671 = vmatpush2.bf16.msra.mxu0 0
        %2672 = vmatprep.subr.bf16.mxu0 0
        %2673 = vmatpush2.bf16.msra.mxu0 0
        %2674 = vmatprep.subr.bf16.mxu0 0
        %2675 = vmatpush2.bf16.msra.mxu0 0
        %2676 = vmatprep.subr.bf16.mxu0 0
        %2677 = vmatpush2.bf16.msra.mxu0 0
        %2678 = vmatprep.subr.bf16.mxu0 0
        %2679 = vmatpush2.bf16.msra.mxu0 0
        %2680 = vmatprep.subr.bf16.mxu0 0
        %2681 = vmatpush2.bf16.msra.mxu0 0
        %2682 = vmatprep.mubr.bf16.mxu0 0
        %2683 = vmatmul.mubr.bf16.gmra.mxu0 %v2598
        %v2684 = vpop.f32.mrf.mxu0
        %v2685 = vadd.f32 0.0, %v2684
        %v2686 = vpop.f32.mrf.mxu0
        %v2687 = vpop.f32.mrf.mxu0
        %v2688 = vpop.f32.mrf.mxu0
        %2689 = vdwg.mxu0
        %v2690 = vadd.f32 %v2557, %v2644
        %v2691 = vadd.f32 %v2558, %v2646
        %v2692 = vadd.f32 %v2559, %v2685
        %v2693 = vld [vmem:[%s1] sm:$0xf]
        %v2694 = vld [vmem:[#allocation2] sm:$0xff]
        %v2696 = vunpack.c.l.b16 %v2693
        %v2697 = vpack.c.b16 %v2696, %v2696
        %2698 = vrot.lane.b32.xlu0 %v2697, 96
        %v2699 = vpop.permute.xlu0 %2698
        %v2701 = vcombine.high %v2694, %v2694
        %v2703 = vunpack.c.l.s4 1983009808
        %v2704 = vunpack.c.0.s8 %v2703
        %v2705 = vlaneseq
        %v2706 = vshrl.u32 %v2705, 7
        %v2707 = vsub.s32 %v2704, %v2706
        %v2708 = vrot.slane %v2694, %v2707
        %v2710 = vunpack.c.l.s4 1983009808
        %v2711 = vunpack.c.0.s8 %v2710
        %v2712 = vlaneseq
        %v2713 = vshrl.u32 %v2712, 7
        %v2714 = vsub.s32 %v2711, %v2713
        %v2715 = vrot.slane %v2701, %v2714
        %v2716 = vcombine.high %v2708, %v2708
        %v2717 = vcombine.high %v2715, %v2715
        %2718 = vrot.lane.b32.xlu0 %v2708, 90
        %v2719 = vpop.permute.xlu0 %2718
        %2720 = vrot.lane.b32.xlu0 %v2716, 90
        %v2721 = vpop.permute.xlu0 %2720
        %2722 = vrot.lane.b32.xlu0 %v2715, 90
        %v2723 = vpop.permute.xlu0 %2722
        %2724 = vrot.lane.b32.xlu0 %v2717, 90
        %v2725 = vpop.permute.xlu0 %2724
        %vm2726 = vcmask 736256
        %v2727 = vsel %vm2726, %v2719, %v2721
        %v2728 = vsel %vm2726, %v2721, %v2723
        %v2729 = vsel %vm2726, %v2723, %v2725
        %v2731 = vsel %vm1691, %v2699, 0
        %v2734 = vsel %vm1695, %v2727, 0
        %v2737 = vsel %vm1695, %v2728, 0
        %v2740 = vsel %vm1695, %v2729, 0
        %2742 = vmatprep.subr.bf16.mxu0 0
        %2743 = vmatpush1.bf16.msra.mxu0 0
        %2744 = vmatprep.subr.bf16.mxu0 0
        %2745 = vmatpush1.bf16.msra.mxu0 0
        %2746 = vmatprep.subr.bf16.mxu0 0
        %2747 = vmatpush1.bf16.msra.mxu0 0
        %2748 = vmatprep.subr.bf16.mxu0 0
        %2749 = vmatpush1.bf16.msra.mxu0 0
        %2750 = vmatprep.subr.bf16.mxu0 0
        %2751 = vmatpush1.bf16.msra.mxu0 0
        %2752 = vmatprep.subr.bf16.mxu0 0
        %2753 = vmatpush1.bf16.msra.mxu0 0
        %2754 = vmatprep.subr.bf16.mxu0 0
        %2755 = vmatpush1.bf16.msra.mxu0 0
        %2756 = vmatprep.subr.bf16.mxu0 %v2737
        %2757 = vmatpush1.bf16.msra.mxu0 %v2734
        %2758 = vmatprep.subr.bf16.mxu0 0
        %2759 = vmatpush2.bf16.msra.mxu0 0
        %2760 = vmatprep.subr.bf16.mxu0 0
        %2761 = vmatpush2.bf16.msra.mxu0 0
        %2762 = vmatprep.subr.bf16.mxu0 0
        %2763 = vmatpush2.bf16.msra.mxu0 0
        %2764 = vmatprep.subr.bf16.mxu0 0
        %2765 = vmatpush2.bf16.msra.mxu0 0
        %2766 = vmatprep.subr.bf16.mxu0 0
        %2767 = vmatpush2.bf16.msra.mxu0 0
        %2768 = vmatprep.subr.bf16.mxu0 0
        %2769 = vmatpush2.bf16.msra.mxu0 0
        %2770 = vmatprep.subr.bf16.mxu0 0
        %2771 = vmatpush2.bf16.msra.mxu0 0
        %2772 = vmatprep.subr.bf16.mxu0 0
        %2773 = vmatpush2.bf16.msra.mxu0 0
        %2774 = vmatprep.mubr.bf16.mxu0 0
        %2775 = vmatmul.mubr.bf16.gmra.mxu0 %v2731
        %v2776 = vpop.f32.mrf.mxu0
        %v2777 = vadd.f32 0.0, %v2776
        %v2778 = vpop.f32.mrf.mxu0
        %v2779 = vadd.f32 0.0, %v2778
        %v2780 = vpop.f32.mrf.mxu0
        %v2781 = vpop.f32.mrf.mxu0
        %2782 = vdwg.mxu0
        %2783 = vmatprep.subr.bf16.mxu0 0
        %2784 = vmatpush1.bf16.msra.mxu0 0
        %2785 = vmatprep.subr.bf16.mxu0 0
        %2786 = vmatpush1.bf16.msra.mxu0 0
        %2787 = vmatprep.subr.bf16.mxu0 0
        %2788 = vmatpush1.bf16.msra.mxu0 0
        %2789 = vmatprep.subr.bf16.mxu0 0
        %2790 = vmatpush1.bf16.msra.mxu0 0
        %2791 = vmatprep.subr.bf16.mxu0 0
        %2792 = vmatpush1.bf16.msra.mxu0 0
        %2793 = vmatprep.subr.bf16.mxu0 0
        %2794 = vmatpush1.bf16.msra.mxu0 0
        %2795 = vmatprep.subr.bf16.mxu0 0
        %2796 = vmatpush1.bf16.msra.mxu0 0
        %2797 = vmatprep.subr.bf16.mxu0 0
        %2798 = vmatpush1.bf16.msra.mxu0 %v2740
        %2799 = vmatprep.subr.bf16.mxu0 0
        %2800 = vmatpush2.bf16.msra.mxu0 0
        %2801 = vmatprep.subr.bf16.mxu0 0
        %2802 = vmatpush2.bf16.msra.mxu0 0
        %2803 = vmatprep.subr.bf16.mxu0 0
        %2804 = vmatpush2.bf16.msra.mxu0 0
        %2805 = vmatprep.subr.bf16.mxu0 0
        %2806 = vmatpush2.bf16.msra.mxu0 0
        %2807 = vmatprep.subr.bf16.mxu0 0
        %2808 = vmatpush2.bf16.msra.mxu0 0
        %2809 = vmatprep.subr.bf16.mxu0 0
        %2810 = vmatpush2.bf16.msra.mxu0 0
        %2811 = vmatprep.subr.bf16.mxu0 0
        %2812 = vmatpush2.bf16.msra.mxu0 0
        %2813 = vmatprep.subr.bf16.mxu0 0
        %2814 = vmatpush2.bf16.msra.mxu0 0
        %2815 = vmatprep.mubr.bf16.mxu0 0
        %2816 = vmatmul.mubr.bf16.gmra.mxu0 %v2731
        %v2817 = vpop.f32.mrf.mxu0
        %v2818 = vadd.f32 0.0, %v2817
        %v2819 = vpop.f32.mrf.mxu0
        %v2820 = vpop.f32.mrf.mxu0
        %v2821 = vpop.f32.mrf.mxu0
        %2822 = vdwg.mxu0
        %v2823 = vadd.f32 %v2690, %v2777
        %v2824 = vadd.f32 %v2691, %v2779
        %v2825 = vadd.f32 %v2692, %v2818
        %v2826 = vld [vmem:[%s2] sm:$0xff]
        %2828 = vset.pattern.permute.xlu0 0
        %2829 = vperm.xlu0 %2828, %v2826
        %v2830 = vpop.permute.xlu0 %2829
        %v2832 = vadd.f32 %v2823, %v2830
        %v2833 = vadd.f32 %v2824, %v2830
        %v2834 = vadd.f32 %v2825, %v2830
        %v2835 = vmax.f32 %v2832, 0.0
        %v2836 = vmax.f32 %v2833, 0.0
        %v2837 = vmax.f32 %v2834, 0.0
        %2839 = vrot.lane.b32.xlu0 %v2835, 127
        %v2840 = vpop.permute.xlu0 %2839
        %vm2842 = vcmask 130048
        %2843 = vst.msk [vmem:[%s188] sm:$0xff] %vm2842, %v2840
        %2844 = vrot.lane.b32.xlu0 %v2835, 125
        %v2845 = vpop.permute.xlu0 %2844
        %vm2847 = vcmask 261248
        %2848 = vst.msk [vmem:[%s188] sm:$0xff] %vm2847, %v2845
        %2849 = vrot.lane.b32.xlu0 %v2835, 123
        %v2850 = vpop.permute.xlu0 %2849
        %vm2852 = vcmask 392448
        %2853 = vst.msk [vmem:[%s188] sm:$0xff] %vm2852, %v2850
        %2854 = vrot.lane.b32.xlu0 %v2835, 121
        %v2855 = vpop.permute.xlu0 %2854
        %vm2857 = vcmask 523648
        %2858 = vst.msk [vmem:[%s188] sm:$0xff] %vm2857, %v2855
        %2859 = vrot.lane.b32.xlu0 %v2835, 119
        %v2860 = vpop.permute.xlu0 %2859
        %vm2862 = vcmask 654848
        %2863 = vst.msk [vmem:[%s188] sm:$0xff] %vm2862, %v2860
        %2864 = vrot.lane.b32.xlu0 %v2835, 117
        %v2865 = vpop.permute.xlu0 %2864
        %vm2867 = vcmask 786048
        %2868 = vst.msk [vmem:[%s188] sm:$0xff] %vm2867, %v2865
        %2869 = vrot.lane.b32.xlu0 %v2835, 115
        %v2870 = vpop.permute.xlu0 %2869
        %vm2872 = vcmask 917248
        %2873 = vst.msk [vmem:[%s188] sm:$0xff] %vm2872, %v2870
        %2875 = vrot.lane.b32.xlu0 %v2835, 113
        %v2876 = vpop.permute.xlu0 %2875
        %2877 = vrot.lane.b32.xlu0 %v2836, 113
        %v2878 = vpop.permute.xlu0 %2877
        %vm2879 = vcmask 924672
        %v2880 = vsel %vm2879, %v2876, %v2878
        %vm2882 = vcmask 1048448
        %2883 = vst.msk [vmem:[%s188] sm:$0xff] %vm2882, %v2880
        %2884 = vrot.lane.b32.xlu0 %v2836, 111
        %v2885 = vpop.permute.xlu0 %2884
        %2887 = vst.msk [vmem:[%s188 + $0x8] sm:$0xff] %vm2842, %v2885
        %2888 = vrot.lane.b32.xlu0 %v2836, 109
        %v2889 = vpop.permute.xlu0 %2888
        %2891 = vst.msk [vmem:[%s188 + $0x8] sm:$0xff] %vm2847, %v2889
        %2892 = vrot.lane.b32.xlu0 %v2836, 107
        %v2893 = vpop.permute.xlu0 %2892
        %2895 = vst.msk [vmem:[%s188 + $0x8] sm:$0xff] %vm2852, %v2893
        %2896 = vrot.lane.b32.xlu0 %v2836, 105
        %v2897 = vpop.permute.xlu0 %2896
        %2899 = vst.msk [vmem:[%s188 + $0x8] sm:$0xff] %vm2857, %v2897
        %2900 = vrot.lane.b32.xlu0 %v2836, 103
        %v2901 = vpop.permute.xlu0 %2900
        %2903 = vst.msk [vmem:[%s188 + $0x8] sm:$0xff] %vm2862, %v2901
        %2904 = vrot.lane.b32.xlu0 %v2836, 101
        %v2905 = vpop.permute.xlu0 %2904
        %2907 = vst.msk [vmem:[%s188 + $0x8] sm:$0xff] %vm2867, %v2905
        %2909 = vrot.lane.b32.xlu0 %v2836, 99
        %v2910 = vpop.permute.xlu0 %2909
        %2911 = vrot.lane.b32.xlu0 %v2837, 99
        %v2912 = vpop.permute.xlu0 %2911
        %vm2913 = vcmask 809984
        %v2914 = vsel %vm2913, %v2910, %v2912
        %2916 = vst.msk [vmem:[%s188 + $0x8] sm:$0xff] %vm2872, %v2914
        %2917 = vrot.lane.b32.xlu0 %v2837, 97
        %v2918 = vpop.permute.xlu0 %2917
        %2920 = vst.msk [vmem:[%s188 + $0x8] sm:$0xff] %vm2882, %v2918
        %s2921 = sand.u32 %s96, 1
        %s2922 = scalar_lea.sflag [#allocation5], %s2921
        %s2923 = sand.u32 %s96, 1
        %s2924 = smul.addr %s2923, 16
        %s2925 = scalar_lea.vmem [#allocation6], %s2924
        // Predicated region
        $region37: #{tpu_custom_call.1} parent=31 // pred_check
          %p2926 = pneg %p106
        $region38: #{tpu_custom_call.1} parent=31 // pred_check_branch
          %2928 = sbr.rel (%p2926) target = $region40
        $region39: #{tpu_custom_call.1} parent=31 // pred_region
          %s2930 = ssub.s32 256, 256
          %2931 = vsyncadd %s2922, %s2930
          %s2932 = smul.addr %s20, 2
          %s2933 = smul.addr %s2932, 128
          %s2934 = scalar_lea.hbm %s3, %s2933
          %s2936 = sshll.u32 %s2925, 4
          %s2937 = int_to_ptr.vmem [resolvable:$true] %s2936
          %2939 = dma.vmem_to_hbm [thread:$0]  %s2937, 256, %s2934, %s2922
        $region40: #{tpu_custom_call.1} parent=31 // pred_fallthru
          _
      $region32: #{tpu_custom_call.1} parent=5 // pred_fallthru
        _
      %p2940 = scmp.le.s32.totalorder 2, %s15
      // Predicated region
      $region41: #{tpu_custom_call.1} parent=5 // pred_check
        %p2941 = pneg %p2940
      $region42: #{tpu_custom_call.1} parent=5 // pred_check_branch
        %2943 = sbr.rel (%p2941) target = $region44
      $region43: #{tpu_custom_call.1} parent=5 // pred_region
        %s2944 = ssub.s32 %s15, 2
        // Predicated region
        $region45: #{tpu_custom_call.1} parent=43 // pred_check
          %p2945 = pneg %p112
        $region46: #{tpu_custom_call.1} parent=43 // pred_check_branch
          %2947 = sbr.rel (%p2945) target = $region48
        $region47: #{tpu_custom_call.1} parent=43 // pred_region
          %s2948 = sand.u32 %s97, 1
          %s2949 = scalar_lea.sflag [#allocation5], %s2948
          %s2950 = sand.u32 %s97, 1
          %s2951 = smul.addr %s2950, 16
          %s2952 = scalar_lea.vmem [#allocation6], %s2951
          %2953 = dma.done %s2949, 256
        $region48: #{tpu_custom_call.1} parent=43 // pred_fallthru
          _
      $region44: #{tpu_custom_call.1} parent=5 // pred_fallthru
        _
    $region6: #{tpu_custom_call.1} parent=1 // loop_footer
      %s19 = sadd.s32 1, %s15
    $region7: #{tpu_custom_call.1} parent=1 // loop_footer_branch
      %14 = sbr.rel target = $region3
    $region8: #{tpu_custom_call.1} parent=1 // loop_exit
      _
    %2954 = vsyncpa [#allocation4], 1
    %s2955 = scalar_lea.sflag [#allocation4], 1
    %2956 = vsyncpa %s2955, 1
    %2957 = vsyncpa [#allocation5], 1
    %s2958 = scalar_lea.sflag [#allocation5], 1
    %2959 = vsyncpa %s2958, 1

</llo_original>
